<compile_context>
chip_gen: v5e
topology: v5e:2x2
jax: 0.10.0
libtpu: 0.0.40
codegen_flags: <defaults>
</compile_context>

<pallas_src>
import jax
import jax.numpy as jnp
from jax.experimental import pallas as pl
from jax.experimental.pallas import tpu as pltpu


def _round_up(x, m):
    return (x + m - 1) // m * m


# ---------------------------------------------------------------------------
# Kernel 1: fused stride-1 3x3x3 conv + folded-BN + ReLU (+ residual add)
# with the 27-tap gather done in-kernel (no HBM im2col).
# ---------------------------------------------------------------------------
def _make_plane_conv_kernel(Hout, W, Wp, add_residual):
    """Kernel closure.

    Inputs per grid step (n, d):
      x0/x1/x2: (1, 1, Rin, Cin)  padded plane at depth d+kd, flattened as
                Rin = (Hout+2)*Wp + 2 rows (1 extra zero row front/back).
      w_ref:    (27, Cin, Cout)   folded-BN weights, tap-major (kd, kh, kw).
      b_ref:    (1, Cout)         folded-BN shift.
      r_ref:    (1, 1, Rout, Cout) optional residual (same layout as output).
      o_ref:    (1, 1, Rout, Cout) output, Rout = Hout*Wp (W-halo columns are
                                   zeroed so the result can feed the next conv).
    """
    Rout = Hout * Wp

    def kernel(*refs):
        if add_residual:
            x0, x1, x2, w_ref, b_ref, r_ref, o_ref = refs
        else:
            x0, x1, x2, w_ref, b_ref, o_ref = refs
            r_ref = None

        cout = b_ref.shape[-1]
        acc = jnp.zeros((Rout, cout), jnp.float32)
        tap = 0
        for x_ref in (x0, x1, x2):                    # kd = 0, 1, 2
            for kh in range(3):
                for kw in range(3):
                    start = kh * Wp + kw              # contiguous row window
                    sub = x_ref[0, 0, start:start + Rout, :]
                    acc = acc + jnp.dot(sub, w_ref[tap],
                                        preferred_element_type=jnp.float32)
                    tap += 1

        y = jnp.maximum(acc + b_ref[...], 0.0)
        if add_residual:
            y = y + r_ref[0, 0, :, :].astype(jnp.float32)

        # Zero the W-halo junk columns so the output doubles as the (interior
        # of the) next conv's padded input.
        wp_idx = jax.lax.broadcasted_iota(jnp.int32, (Rout, 1), 0) % Wp
        valid = jnp.logical_and(wp_idx >= 1, wp_idx <= W)
        y = jnp.where(valid, y, 0.0)
        o_ref[0, 0, :, :] = y.astype(o_ref.dtype)

    return kernel


def plane_conv3x3(x_flat, w_tap, shift, Hout, Wp, residual=None,
                  out_dtype=jnp.bfloat16):
    """Fused 3x3x3 stride-1 conv + BN(eval) + ReLU (+ residual).

    x_flat: [N, D+2, (Hout+2)*Wp + 2, Cin]  zero-padded, flattened planes
    w_tap:  [27, Cin, Cout]  folded weights (bf16)
    shift:  [Cout]           folded BN shift (f32)
    residual: optional [N, D, Hout*Wp, Cout]
    returns [N, D, Hout*Wp, Cout]
    """
    N, Dp, Rin, Cin = x_flat.shape
    D = Dp - 2
    Cout = w_tap.shape[-1]
    W = Wp - 2
    Rout = Hout * Wp
    assert Rin == (Hout + 2) * Wp + 2

    b = shift.astype(jnp.float32).reshape(1, Cout)

    def _tap_spec(kd):
        return pl.BlockSpec((1, 1, Rin, Cin),
                            lambda n, d: (n, d + kd, 0, 0))

    in_specs = [_tap_spec(0), _tap_spec(1), _tap_spec(2),
                pl.BlockSpec((27, Cin, Cout), lambda n, d: (0, 0, 0)),
                pl.BlockSpec((1, Cout), lambda n, d: (0, 0))]
    args = [x_flat, x_flat, x_flat, w_tap, b]
    if residual is not None:
        in_specs.append(pl.BlockSpec((1, 1, Rout, Cout),
                                     lambda n, d: (n, d, 0, 0)))
        args.append(residual)

    kernel = _make_plane_conv_kernel(Hout, W, Wp, residual is not None)

    out_bytes = jnp.dtype(out_dtype).itemsize
    # Per-tile traffic (3 overlapping depth planes per step; weight read once).
    bytes_accessed = (N * D * (3 * Rin * Cin * 2 + Rout * Cout * out_bytes)
                      + w_tap.size * 2 + Cout * 4)
    if residual is not None:
        bytes_accessed += N * D * Rout * Cout * residual.dtype.itemsize
    flops = 2 * N * D * Rout * 27 * Cin * Cout

    vmem_need = (2 * 3 * Rin * Cin * 2 + 2 * Rout * Cout * out_bytes
                 + w_tap.size * 2 + 4 * Cout)
    if residual is not None:
        vmem_need += 2 * Rout * Cout * 2
    vmem_limit = int(min(max(4 * vmem_need + (2 << 20), 16 << 20), 32 << 20))

    return pl.pallas_call(
        kernel,
        out_shape=jax.ShapeDtypeStruct((N, D, Rout, Cout), out_dtype),
        grid_spec=pltpu.PrefetchScalarGridSpec(
            num_scalar_prefetch=0,
            grid=(N, D),
            in_specs=in_specs,
            out_specs=pl.BlockSpec((1, 1, Rout, Cout),
                                   lambda n, d: (n, d, 0, 0)),
        ),
        compiler_params=pltpu.CompilerParams(
            dimension_semantics=("parallel", "parallel"),
            vmem_limit_bytes=vmem_limit,
        ),
        cost_estimate=pl.CostEstimate(flops=int(flops), transcendentals=0,
                                      bytes_accessed=int(bytes_accessed)),
    )(*args)


# ---------------------------------------------------------------------------
# Kernel 2: single-K-tile GEMM + folded-BN + ReLU (stride-2 down conv)
# ---------------------------------------------------------------------------
def _gemm_bn_relu_kernel(p_ref, w_ref, b_ref, o_ref):
    acc = jnp.dot(p_ref[...], w_ref[...], preferred_element_type=jnp.float32)
    o_ref[...] = jnp.maximum(acc + b_ref[...], 0.0).astype(o_ref.dtype)


def fused_conv_gemm(patches, w_mat, shift, out_dtype=jnp.bfloat16):
    """relu(patches @ w_mat + shift).  patches [M,K] bf16, w_mat [K,Cout]."""
    M, K = patches.shape
    Cout = w_mat.shape[1]

    tm = min(512, _round_up(M, 16))
    if _round_up(M, 16) // tm < 2 and M >= 32:
        # give v7x's two TensorCores at least one block each
        tm = _round_up(-(-M // 2), 16)
    Mp = _round_up(M, tm)
    p = patches if Mp == M else jnp.pad(patches, ((0, Mp - M), (0, 0)))
    b = shift.astype(jnp.float32).reshape(1, Cout)

    out_bytes = jnp.dtype(out_dtype).itemsize
    bytes_accessed = (Mp * K * p.dtype.itemsize + K * Cout * w_mat.dtype.itemsize
                      + Cout * 4 + Mp * Cout * out_bytes)
    vmem_need = (2 * tm * K * p.dtype.itemsize + 2 * tm * Cout * out_bytes
                 + K * Cout * w_mat.dtype.itemsize + 4 * Cout)
    vmem_limit = int(min(max(4 * vmem_need + (2 << 20), 16 << 20), 32 << 20))

    out = pl.pallas_call(
        _gemm_bn_relu_kernel,
        out_shape=jax.ShapeDtypeStruct((Mp, Cout), out_dtype),
        grid_spec=pltpu.PrefetchScalarGridSpec(
            num_scalar_prefetch=0,
            grid=(Mp // tm,),
            in_specs=[pl.BlockSpec((tm, K), lambda i: (i, 0)),
                      pl.BlockSpec((K, Cout), lambda i: (0, 0)),   # resident
                      pl.BlockSpec((1, Cout), lambda i: (0, 0))],
            out_specs=pl.BlockSpec((tm, Cout), lambda i: (i, 0)),
        ),
        compiler_params=pltpu.CompilerParams(
            dimension_semantics=("parallel",),
            vmem_limit_bytes=vmem_limit,
        ),
        cost_estimate=pl.CostEstimate(flops=int(2 * Mp * K * Cout),
                                      transcendentals=0,
                                      bytes_accessed=int(bytes_accessed)),
    )(p, w_mat, b)
    return out[:M] if Mp != M else out


# ---------------------------------------------------------------------------
# Plain-JAX glue: im2col (down conv only), BN folding, layout helpers, params
# ---------------------------------------------------------------------------
def im2col3d(x, k, stride, pad):
    """x: [N, D, H, W, C] -> patches [N*Do*Ho*Wo, k^3*C], (N, Do, Ho, Wo)."""
    N, D, H, W, C = x.shape
    xp = jnp.pad(x, ((0, 0), (pad, pad), (pad, pad), (pad, pad), (0, 0)))
    Do = (D + 2 * pad - k) // stride + 1
    Ho = (H + 2 * pad - k) // stride + 1
    Wo = (W + 2 * pad - k) // stride + 1
    cols = []
    for kd in range(k):
        for kh in range(k):
            for kw in range(k):
                cols.append(xp[:, kd:kd + stride * Do:stride,
                                  kh:kh + stride * Ho:stride,
                                  kw:kw + stride * Wo:stride, :])
    patches = jnp.concatenate(cols, axis=-1)
    return patches.reshape(N * Do * Ho * Wo, k * k * k * C), (N, Do, Ho, Wo)


def fold_bn_into_weights(w, bias, gamma, beta, mean, var, eps=1e-5):
    """Fold conv bias + inference BN into (scaled weight matrix, shift).

    w: [Cout, Cin, kd, kh, kw] -> [27*Cin, Cout] (tap-major, cin-minor)."""
    inv_std = 1.0 / jnp.sqrt(var + eps)
    scale = gamma * inv_std
    shift = beta + (bias - mean) * scale
    cout = w.shape[0]
    w_mat = jnp.transpose(w, (2, 3, 4, 1, 0)).reshape(-1, cout)
    return w_mat * scale[None, :], shift


def _fold(p):
    return fold_bn_into_weights(p["w"], p["b"], p["gamma"], p["beta"],
                                p["mean"], p["var"])


def _flat_padded(x5, w_halo):
    """[N, D, H, W(+2 if w_halo), C] -> [N, D+2, (H+2)*(W+2)+2, C], zeros."""
    wpad = (0, 0) if w_halo else (1, 1)
    p5 = jnp.pad(x5, ((0, 0), (1, 1), (1, 1), wpad, (0, 0)))
    N, Dp, Hp, Wp, C = p5.shape
    fl = p5.reshape(N, Dp, Hp * Wp, C)
    return jnp.pad(fl, ((0, 0), (0, 0), (1, 1), (0, 0)))


def init_branch_params(key, cin, cout, k=3):
    k1, k2, k3, k4, k5, k6 = jax.random.split(key, 6)
    w = 0.1 * jax.random.normal(k1, (cout, cin, k, k, k), jnp.float32)
    b = 0.05 * jax.random.normal(k2, (cout,), jnp.float32)
    gamma = 1.0 + 0.1 * jax.random.normal(k3, (cout,), jnp.float32)
    beta = 0.1 * jax.random.normal(k4, (cout,), jnp.float32)
    mean = 0.1 * jax.random.normal(k5, (cout,), jnp.float32)
    var = jnp.abs(1.0 + 0.1 * jax.random.normal(k6, (cout,), jnp.float32))
    return dict(w=w, b=b, gamma=gamma, beta=beta, mean=mean, var=var)


def make_downblock_params(key, in_dim, out_dim):
    kn, kr1, kr2 = jax.random.split(key, 3)
    return dict(
        net=init_branch_params(kn, in_dim, out_dim),       # stride-2 conv
        res_net=init_branch_params(kr1, out_dim, out_dim),
        res_res=init_branch_params(kr2, out_dim, out_dim),
    )


@jax.jit
def downblock_forward(x_ncdhw, params):
    """DownBlock forward.  Input NCDHW (PyTorch), output NCDHW (f32)."""
    x = jnp.transpose(x_ncdhw, (0, 2, 3, 4, 1)).astype(jnp.bfloat16)  # NDHWC

    # --- DownBlock.net: SparseConv3d(k=3, stride=2, pad=1) + BN + ReLU ------
    patches, (N, Do, Ho, Wo) = im2col3d(x, k=3, stride=2, pad=1)
    w_net, s_net = _fold(params["net"])
    y = fused_conv_gemm(patches, w_net.astype(jnp.bfloat16), s_net,
                        out_dtype=jnp.bfloat16)
    C = w_net.shape[1]
    y5 = y.reshape(N, Do, Ho, Wo, C)
    Wp = Wo + 2

    # --- ResBlock conv 1: x_net = ReLU(BN(Conv(y))) --------------------------
    w1, s1 = _fold(params["res_net"])
    x_net = plane_conv3x3(_flat_padded(y5, w_halo=False),
                          w1.astype(jnp.bfloat16).reshape(27, C, C),
                          s1, Ho, Wp, out_dtype=jnp.bfloat16)

    # --- ResBlock conv 2 + residual: out = x_net + ReLU(BN(Conv(x_net))) ----
    w2, s2 = _fold(params["res_res"])
    x_net5 = x_net.reshape(N, Do, Ho, Wp, C)
    out = plane_conv3x3(_flat_padded(x_net5, w_halo=True),
                        w2.astype(jnp.bfloat16).reshape(27, C, C),
                        s2, Ho, Wp, residual=x_net, out_dtype=jnp.bfloat16)

    out = out.reshape(N, Do, Ho, Wp, C)[:, :, :, 1:Wo + 1, :]   # drop W halo
    return jnp.transpose(out, (0, 4, 1, 2, 3)).astype(jnp.float32)   # NCDHW


# ---------------------------------------------------------------------------
# Pure-JAX (f32, dense) reference for validation
# ---------------------------------------------------------------------------
def _ref_conv_bn_relu(x, p, stride):
    w = jnp.transpose(p["w"], (2, 3, 4, 1, 0))          # DHWIO
    y = jax.lax.conv_general_dilated(
        x, w, window_strides=(stride,) * 3, padding=((1, 1),) * 3,
        dimension_numbers=("NDHWC", "DHWIO", "NDHWC"))
    y = y + p["b"]
    inv = 1.0 / jnp.sqrt(p["var"] + 1e-5)
    y = (y - p["mean"]) * inv * p["gamma"] + p["beta"]
    return jnp.maximum(y, 0.0)


@jax.jit
def downblock_reference(x_ncdhw, params):
    x = jnp.transpose(x_ncdhw, (0, 2, 3, 4, 1))
    y = _ref_conv_bn_relu(x, params["net"], 2)
    x_net = _ref_conv_bn_relu(y, params["res_net"], 1)
    r = _ref_conv_bn_relu(x_net, params["res_res"], 1)
    out = x_net + r
    return jnp.transpose(out, (0, 4, 1, 2, 3))


if __name__ == "__main__":
    key = jax.random.PRNGKey(0)
    k_x, k_p = jax.random.split(key)

    batch, in_dim, out_dim, S = 2, 4, 8, 8
    x = jax.random.normal(k_x, (batch, in_dim, S, S, S), jnp.float32)
    params = make_downblock_params(k_p, in_dim, out_dim)

    out = downblock_forward(x, params)
    jax.block_until_ready(out)

    assert out.shape == (batch, out_dim, S // 2, S // 2, S // 2), out.shape
    assert bool(jnp.all(jnp.isfinite(out)))

    ref = downblock_reference(x, params)
    rel = float(jnp.max(jnp.abs(out - ref)) / (jnp.max(jnp.abs(ref)) + 1e-6))
    assert rel < 0.1, f"mismatch vs dense f32 reference: rel={rel}"

    print("KERNEL_OK")
</pallas_src>

<mosaic_0001>
module attributes {stable_mosaic.version = 11 : i64} {
  func.func @_gemm_bn_relu_kernel(%arg0: i32, %arg1: memref<64x108xbf16, #tpu.memory_space<vmem>>, %arg2: memref<108x8xbf16, #tpu.memory_space<vmem>>, %arg3: memref<1x8xf32, #tpu.memory_space<vmem>>, %arg4: memref<64x8xbf16, #tpu.memory_space<vmem>>) attributes {dimension_semantics = [#tpu.dimension_semantics<parallel>], iteration_bounds = array<i64: 2>, scalar_prefetch = 0 : i64, scratch_operands = 0 : i64, tpu.core_type = #tpu.core_type<tc>, window_params = [{transform_indices = @transform_0, window_bounds = array<i64: 64, 108>}, {pipeline_mode = #tpu.pipeline_mode<synchronous>, transform_indices = @transform_1, window_bounds = array<i64: 108, 8>}, {pipeline_mode = #tpu.pipeline_mode<synchronous>, transform_indices = @transform_2, window_bounds = array<i64: 1, 8>}, {transform_indices = @transform_3, window_bounds = array<i64: 64, 8>}]} {
    %c0 = arith.constant 0 : index
    %c0_0 = arith.constant 0 : index
    %0 = vector.load %arg1[%c0, %c0_0] : memref<64x108xbf16, #tpu.memory_space<vmem>>, vector<64x108xbf16>
    %c0_1 = arith.constant 0 : index
    %c0_2 = arith.constant 0 : index
    %1 = vector.load %arg2[%c0_1, %c0_2] : memref<108x8xbf16, #tpu.memory_space<vmem>>, vector<108x8xbf16>
    %cst = arith.constant dense<0.000000e+00> : vector<64x8xf32>
    %2 = tpu.matmul %0, %1, %cst {dimension_numbers = #tpu.dot_dimension_numbers<[1], [0], [0], [1], [0, 0, 1, 1], [], []>} : vector<64x108xbf16>, vector<108x8xbf16>, vector<64x8xf32> -> vector<64x8xf32>
    %c0_3 = arith.constant 0 : index
    %c0_4 = arith.constant 0 : index
    %3 = vector.load %arg3[%c0_3, %c0_4] : memref<1x8xf32, #tpu.memory_space<vmem>>, vector<1x8xf32>
    %4 = vector.broadcast %3 : vector<1x8xf32> to vector<64x8xf32>
    %5 = arith.addf %2, %4 : vector<64x8xf32>
    %cst_5 = arith.constant 0.000000e+00 : f32
    %6 = vector.broadcast %cst_5 : f32 to vector<64x8xf32>
    %7 = arith.maximumf %5, %6 : vector<64x8xf32>
    %8 = arith.truncf %7 : vector<64x8xf32> to vector<64x8xbf16>
    %c0_6 = arith.constant 0 : index
    %c0_7 = arith.constant 0 : index
    %9 = vector.load %arg4[%c0_6, %c0_7] : memref<64x8xbf16, #tpu.memory_space<vmem>>, vector<64x8xbf16>
    tpu.vector_store %arg4[%c0_6, %c0_7], %8 {strides = array<i32>} : memref<64x8xbf16, #tpu.memory_space<vmem>>, vector<64x8xbf16>,
    return
  }
  func.func @transform_0(%arg0: i32) -> (i32, i32) {
    %c0_i32 = arith.constant 0 : i32
    %c0_i32_0 = arith.constant 0 : i32
    return %arg0, %c0_i32 : i32, i32
  }
  func.func @transform_1(%arg0: i32) -> (i32, i32) {
    %c0_i32 = arith.constant 0 : i32
    %c0_i32_0 = arith.constant 0 : i32
    %c0_i32_1 = arith.constant 0 : i32
    return %c0_i32, %c0_i32_0 : i32, i32
  }
  func.func @transform_2(%arg0: i32) -> (i32, i32) {
    %c0_i32 = arith.constant 0 : i32
    %c0_i32_0 = arith.constant 0 : i32
    %c0_i32_1 = arith.constant 0 : i32
    return %c0_i32, %c0_i32_0 : i32, i32
  }
  func.func @transform_3(%arg0: i32) -> (i32, i32) {
    %c0_i32 = arith.constant 0 : i32
    %c0_i32_0 = arith.constant 0 : i32
    return %arg0, %c0_i32 : i32, i32
  }
}

module attributes {stable_mosaic.version = 11 : i64} {
  func.func @kernel(%arg0: i32, %arg1: i32, %arg2: memref<1x1x38x8xbf16, #tpu.memory_space<vmem>>, %arg3: memref<1x1x38x8xbf16, #tpu.memory_space<vmem>>, %arg4: memref<1x1x38x8xbf16, #tpu.memory_space<vmem>>, %arg5: memref<27x8x8xbf16, #tpu.memory_space<vmem>>, %arg6: memref<1x8xf32, #tpu.memory_space<vmem>>, %arg7: memref<1x1x24x8xbf16, #tpu.memory_space<vmem>>) attributes {dimension_semantics = [#tpu.dimension_semantics<parallel>, #tpu.dimension_semantics<parallel>], iteration_bounds = array<i64: 2, 4>, scalar_prefetch = 0 : i64, scratch_operands = 0 : i64, tpu.core_type = #tpu.core_type<tc>, window_params = [{transform_indices = @transform_0, window_bounds = array<i64: 1, 1, 38, 8>}, {transform_indices = @transform_1, window_bounds = array<i64: 1, 1, 38, 8>}, {transform_indices = @transform_2, window_bounds = array<i64: 1, 1, 38, 8>}, {pipeline_mode = #tpu.pipeline_mode<synchronous>, transform_indices = @transform_3, window_bounds = array<i64: 27, 8, 8>}, {pipeline_mode = #tpu.pipeline_mode<synchronous>, transform_indices = @transform_4, window_bounds = array<i64: 1, 8>}, {transform_indices = @transform_5, window_bounds = array<i64: 1, 1, 24, 8>}]} {
    %cst = arith.constant 0.000000e+00 : f32
    %0 = vector.broadcast %cst : f32 to vector<24x8xf32>
    %c0 = arith.constant 0 : index
    %c0_0 = arith.constant 0 : index
    %c0_1 = arith.constant 0 : index
    %c0_2 = arith.constant 0 : index
    %1 = vector.load %arg2[%c0, %c0_0, %c0_1, %c0_2] : memref<1x1x38x8xbf16, #tpu.memory_space<vmem>>, vector<1x1x24x8xbf16>
    %2 = vector.shape_cast %1 : vector<1x1x24x8xbf16> to vector<24x8xbf16>
    %c0_3 = arith.constant 0 : index
    %c0_4 = arith.constant 0 : index
    %c0_5 = arith.constant 0 : index
    %3 = vector.load %arg5[%c0_3, %c0_4, %c0_5] : memref<27x8x8xbf16, #tpu.memory_space<vmem>>, vector<1x8x8xbf16>
    %4 = vector.shape_cast %3 : vector<1x8x8xbf16> to vector<8x8xbf16>
    %cst_6 = arith.constant dense<0.000000e+00> : vector<24x8xf32>
    %5 = tpu.matmul %2, %4, %cst_6 {dimension_numbers = #tpu.dot_dimension_numbers<[1], [0], [0], [1], [0, 0, 1, 1], [], []>} : vector<24x8xbf16>, vector<8x8xbf16>, vector<24x8xf32> -> vector<24x8xf32>
    %6 = arith.addf %0, %5 : vector<24x8xf32>
    %c0_7 = arith.constant 0 : index
    %c0_8 = arith.constant 0 : index
    %c1 = arith.constant 1 : index
    %c0_9 = arith.constant 0 : index
    %7 = vector.load %arg2[%c0_7, %c0_8, %c1, %c0_9] : memref<1x1x38x8xbf16, #tpu.memory_space<vmem>>, vector<1x1x24x8xbf16>
    %8 = vector.shape_cast %7 : vector<1x1x24x8xbf16> to vector<24x8xbf16>
    %c1_10 = arith.constant 1 : index
    %c0_11 = arith.constant 0 : index
    %c0_12 = arith.constant 0 : index
    %9 = vector.load %arg5[%c1_10, %c0_11, %c0_12] : memref<27x8x8xbf16, #tpu.memory_space<vmem>>, vector<1x8x8xbf16>
    %10 = vector.shape_cast %9 : vector<1x8x8xbf16> to vector<8x8xbf16>
    %cst_13 = arith.constant dense<0.000000e+00> : vector<24x8xf32>
    %11 = tpu.matmul %8, %10, %cst_13 {dimension_numbers = #tpu.dot_dimension_numbers<[1], [0], [0], [1], [0, 0, 1, 1], [], []>} : vector<24x8xbf16>, vector<8x8xbf16>, vector<24x8xf32> -> vector<24x8xf32>
    %12 = arith.addf %6, %11 : vector<24x8xf32>
    %c0_14 = arith.constant 0 : index
    %c0_15 = arith.constant 0 : index
    %c2 = arith.constant 2 : index
    %c0_16 = arith.constant 0 : index
    %13 = vector.load %arg2[%c0_14, %c0_15, %c2, %c0_16] : memref<1x1x38x8xbf16, #tpu.memory_space<vmem>>, vector<1x1x24x8xbf16>
    %14 = vector.shape_cast %13 : vector<1x1x24x8xbf16> to vector<24x8xbf16>
    %c2_17 = arith.constant 2 : index
    %c0_18 = arith.constant 0 : index
    %c0_19 = arith.constant 0 : index
    %15 = vector.load %arg5[%c2_17, %c0_18, %c0_19] : memref<27x8x8xbf16, #tpu.memory_space<vmem>>, vector<1x8x8xbf16>
    %16 = vector.shape_cast %15 : vector<1x8x8xbf16> to vector<8x8xbf16>
    %cst_20 = arith.constant dense<0.000000e+00> : vector<24x8xf32>
    %17 = tpu.matmul %14, %16, %cst_20 {dimension_numbers = #tpu.dot_dimension_numbers<[1], [0], [0], [1], [0, 0, 1, 1], [], []>} : vector<24x8xbf16>, vector<8x8xbf16>, vector<24x8xf32> -> vector<24x8xf32>
    %18 = arith.addf %12, %17 : vector<24x8xf32>
    %c0_21 = arith.constant 0 : index
    %c0_22 = arith.constant 0 : index
    %c6 = arith.constant 6 : index
    %c0_23 = arith.constant 0 : index
    %19 = vector.load %arg2[%c0_21, %c0_22, %c6, %c0_23] : memref<1x1x38x8xbf16, #tpu.memory_space<vmem>>, vector<1x1x24x8xbf16>
    %20 = vector.shape_cast %19 : vector<1x1x24x8xbf16> to vector<24x8xbf16>
    %c3 = arith.constant 3 : index
    %c0_24 = arith.constant 0 : index
    %c0_25 = arith.constant 0 : index
    %21 = vector.load %arg5[%c3, %c0_24, %c0_25] : memref<27x8x8xbf16, #tpu.memory_space<vmem>>, vector<1x8x8xbf16>
    %22 = vector.shape_cast %21 : vector<1x8x8xbf16> to vector<8x8xbf16>
    %cst_26 = arith.constant dense<0.000000e+00> : vector<24x8xf32>
    %23 = tpu.matmul %20, %22, %cst_26 {dimension_numbers = #tpu.dot_dimension_numbers<[1], [0], [0], [1], [0, 0, 1, 1], [], []>} : vector<24x8xbf16>, vector<8x8xbf16>, vector<24x8xf32> -> vector<24x8xf32>
    %24 = arith.addf %18, %23 : vector<24x8xf32>
    %c0_27 = arith.constant 0 : index
    %c0_28 = arith.constant 0 : index
    %c7 = arith.constant 7 : index
    %c0_29 = arith.constant 0 : index
    %25 = vector.load %arg2[%c0_27, %c0_28, %c7, %c0_29] : memref<1x1x38x8xbf16, #tpu.memory_space<vmem>>, vector<1x1x24x8xbf16>
    %26 = vector.shape_cast %25 : vector<1x1x24x8xbf16> to vector<24x8xbf16>
    %c4 = arith.constant 4 : index
    %c0_30 = arith.constant 0 : index
    %c0_31 = arith.constant 0 : index
    %27 = vector.load %arg5[%c4, %c0_30, %c0_31] : memref<27x8x8xbf16, #tpu.memory_space<vmem>>, vector<1x8x8xbf16>
    %28 = vector.shape_cast %27 : vector<1x8x8xbf16> to vector<8x8xbf16>
    %cst_32 = arith.constant dense<0.000000e+00> : vector<24x8xf32>
    %29 = tpu.matmul %26, %28, %cst_32 {dimension_numbers = #tpu.dot_dimension_numbers<[1], [0], [0], [1], [0, 0, 1, 1], [], []>} : vector<24x8xbf16>, vector<8x8xbf16>, vector<24x8xf32> -> vector<24x8xf32>
    %30 = arith.addf %24, %29 : vector<24x8xf32>
    %c0_33 = arith.constant 0 : index
    %c0_34 = arith.constant 0 : index
    %c8 = arith.constant 8 : index
    %c0_35 = arith.constant 0 : index
    %31 = vector.load %arg2[%c0_33, %c0_34, %c8, %c0_35] : memref<1x1x38x8xbf16, #tpu.memory_space<vmem>>, vector<1x1x24x8xbf16>
    %32 = vector.shape_cast %31 : vector<1x1x24x8xbf16> to vector<24x8xbf16>
    %c5 = arith.constant 5 : index
    %c0_36 = arith.constant 0 : index
    %c0_37 = arith.constant 0 : index
    %33 = vector.load %arg5[%c5, %c0_36, %c0_37] : memref<27x8x8xbf16, #tpu.memory_space<vmem>>, vector<1x8x8xbf16>
    %34 = vector.shape_cast %33 : vector<1x8x8xbf16> to vector<8x8xbf16>
    %cst_38 = arith.constant dense<0.000000e+00> : vector<24x8xf32>
    %35 = tpu.matmul %32, %34, %cst_38 {dimension_numbers = #tpu.dot_dimension_numbers<[1], [0], [0], [1], [0, 0, 1, 1], [], []>} : vector<24x8xbf16>, vector<8x8xbf16>, vector<24x8xf32> -> vector<24x8xf32>
    %36 = arith.addf %30, %35 : vector<24x8xf32>
    %c0_39 = arith.constant 0 : index
    %c0_40 = arith.constant 0 : index
    %c12 = arith.constant 12 : index
    %c0_41 = arith.constant 0 : index
    %37 = vector.load %arg2[%c0_39, %c0_40, %c12, %c0_41] : memref<1x1x38x8xbf16, #tpu.memory_space<vmem>>, vector<1x1x24x8xbf16>
    %38 = vector.shape_cast %37 : vector<1x1x24x8xbf16> to vector<24x8xbf16>
    %c6_42 = arith.constant 6 : index
    %c0_43 = arith.constant 0 : index
    %c0_44 = arith.constant 0 : index
    %39 = vector.load %arg5[%c6_42, %c0_43, %c0_44] : memref<27x8x8xbf16, #tpu.memory_space<vmem>>, vector<1x8x8xbf16>
    %40 = vector.shape_cast %39 : vector<1x8x8xbf16> to vector<8x8xbf16>
    %cst_45 = arith.constant dense<0.000000e+00> : vector<24x8xf32>
    %41 = tpu.matmul %38, %40, %cst_45 {dimension_numbers = #tpu.dot_dimension_numbers<[1], [0], [0], [1], [0, 0, 1, 1], [], []>} : vector<24x8xbf16>, vector<8x8xbf16>, vector<24x8xf32> -> vector<24x8xf32>
    %42 = arith.addf %36, %41 : vector<24x8xf32>
    %c0_46 = arith.constant 0 : index
    %c0_47 = arith.constant 0 : index
    %c13 = arith.constant 13 : index
    %c0_48 = arith.constant 0 : index
    %43 = vector.load %arg2[%c0_46, %c0_47, %c13, %c0_48] : memref<1x1x38x8xbf16, #tpu.memory_space<vmem>>, vector<1x1x24x8xbf16>
    %44 = vector.shape_cast %43 : vector<1x1x24x8xbf16> to vector<24x8xbf16>
    %c7_49 = arith.constant 7 : index
    %c0_50 = arith.constant 0 : index
    %c0_51 = arith.constant 0 : index
    %45 = vector.load %arg5[%c7_49, %c0_50, %c0_51] : memref<27x8x8xbf16, #tpu.memory_space<vmem>>, vector<1x8x8xbf16>
    %46 = vector.shape_cast %45 : vector<1x8x8xbf16> to vector<8x8xbf16>
    %cst_52 = arith.constant dense<0.000000e+00> : vector<24x8xf32>
    %47 = tpu.matmul %44, %46, %cst_52 {dimension_numbers = #tpu.dot_dimension_numbers<[1], [0], [0], [1], [0, 0, 1, 1], [], []>} : vector<24x8xbf16>, vector<8x8xbf16>, vector<24x8xf32> -> vector<24x8xf32>
    %48 = arith.addf %42, %47 : vector<24x8xf32>
    %c0_53 = arith.constant 0 : index
    %c0_54 = arith.constant 0 : index
    %c14 = arith.constant 14 : index
    %c0_55 = arith.constant 0 : index
    %49 = vector.load %arg2[%c0_53, %c0_54, %c14, %c0_55] : memref<1x1x38x8xbf16, #tpu.memory_space<vmem>>, vector<1x1x24x8xbf16>
    %50 = vector.shape_cast %49 : vector<1x1x24x8xbf16> to vector<24x8xbf16>
    %c8_56 = arith.constant 8 : index
    %c0_57 = arith.constant 0 : index
    %c0_58 = arith.constant 0 : index
    %51 = vector.load %arg5[%c8_56, %c0_57, %c0_58] : memref<27x8x8xbf16, #tpu.memory_space<vmem>>, vector<1x8x8xbf16>
    %52 = vector.shape_cast %51 : vector<1x8x8xbf16> to vector<8x8xbf16>
    %cst_59 = arith.constant dense<0.000000e+00> : vector<24x8xf32>
    %53 = tpu.matmul %50, %52, %cst_59 {dimension_numbers = #tpu.dot_dimension_numbers<[1], [0], [0], [1], [0, 0, 1, 1], [], []>} : vector<24x8xbf16>, vector<8x8xbf16>, vector<24x8xf32> -> vector<24x8xf32>
    %54 = arith.addf %48, %53 : vector<24x8xf32>
    %c0_60 = arith.constant 0 : index
    %c0_61 = arith.constant 0 : index
    %c0_62 = arith.constant 0 : index
    %c0_63 = arith.constant 0 : index
    %55 = vector.load %arg3[%c0_60, %c0_61, %c0_62, %c0_63] : memref<1x1x38x8xbf16, #tpu.memory_space<vmem>>, vector<1x1x24x8xbf16>
    %56 = vector.shape_cast %55 : vector<1x1x24x8xbf16> to vector<24x8xbf16>
    %c9 = arith.constant 9 : index
    %c0_64 = arith.constant 0 : index
    %c0_65 = arith.constant 0 : index
    %57 = vector.load %arg5[%c9, %c0_64, %c0_65] : memref<27x8x8xbf16, #tpu.memory_space<vmem>>, vector<1x8x8xbf16>
    %58 = vector.shape_cast %57 : vector<1x8x8xbf16> to vector<8x8xbf16>
    %cst_66 = arith.constant dense<0.000000e+00> : vector<24x8xf32>
    %59 = tpu.matmul %56, %58, %cst_66 {dimension_numbers = #tpu.dot_dimension_numbers<[1], [0], [0], [1], [0, 0, 1, 1], [], []>} : vector<24x8xbf16>, vector<8x8xbf16>, vector<24x8xf32> -> vector<24x8xf32>
    %60 = arith.addf %54, %59 : vector<24x8xf32>
    %c0_67 = arith.constant 0 : index
    %c0_68 = arith.constant 0 : index
    %c1_69 = arith.constant 1 : index
    %c0_70 = arith.constant 0 : index
    %61 = vector.load %arg3[%c0_67, %c0_68, %c1_69, %c0_70] : memref<1x1x38x8xbf16, #tpu.memory_space<vmem>>, vector<1x1x24x8xbf16>
    %62 = vector.shape_cast %61 : vector<1x1x24x8xbf16> to vector<24x8xbf16>
    %c10 = arith.constant 10 : index
    %c0_71 = arith.constant 0 : index
    %c0_72 = arith.constant 0 : index
    %63 = vector.load %arg5[%c10, %c0_71, %c0_72] : memref<27x8x8xbf16, #tpu.memory_space<vmem>>, vector<1x8x8xbf16>
    %64 = vector.shape_cast %63 : vector<1x8x8xbf16> to vector<8x8xbf16>
    %cst_73 = arith.constant dense<0.000000e+00> : vector<24x8xf32>
    %65 = tpu.matmul %62, %64, %cst_73 {dimension_numbers = #tpu.dot_dimension_numbers<[1], [0], [0], [1], [0, 0, 1, 1], [], []>} : vector<24x8xbf16>, vector<8x8xbf16>, vector<24x8xf32> -> vector<24x8xf32>
    %66 = arith.addf %60, %65 : vector<24x8xf32>
    %c0_74 = arith.constant 0 : index
    %c0_75 = arith.constant 0 : index
    %c2_76 = arith.constant 2 : index
    %c0_77 = arith.constant 0 : index
    %67 = vector.load %arg3[%c0_74, %c0_75, %c2_76, %c0_77] : memref<1x1x38x8xbf16, #tpu.memory_space<vmem>>, vector<1x1x24x8xbf16>
    %68 = vector.shape_cast %67 : vector<1x1x24x8xbf16> to vector<24x8xbf16>
    %c11 = arith.constant 11 : index
    %c0_78 = arith.constant 0 : index
    %c0_79 = arith.constant 0 : index
    %69 = vector.load %arg5[%c11, %c0_78, %c0_79] : memref<27x8x8xbf16, #tpu.memory_space<vmem>>, vector<1x8x8xbf16>
    %70 = vector.shape_cast %69 : vector<1x8x8xbf16> to vector<8x8xbf16>
    %cst_80 = arith.constant dense<0.000000e+00> : vector<24x8xf32>
    %71 = tpu.matmul %68, %70, %cst_80 {dimension_numbers = #tpu.dot_dimension_numbers<[1], [0], [0], [1], [0, 0, 1, 1], [], []>} : vector<24x8xbf16>, vector<8x8xbf16>, vector<24x8xf32> -> vector<24x8xf32>
    %72 = arith.addf %66, %71 : vector<24x8xf32>
    %c0_81 = arith.constant 0 : index
    %c0_82 = arith.constant 0 : index
    %c6_83 = arith.constant 6 : index
    %c0_84 = arith.constant 0 : index
    %73 = vector.load %arg3[%c0_81, %c0_82, %c6_83, %c0_84] : memref<1x1x38x8xbf16, #tpu.memory_space<vmem>>, vector<1x1x24x8xbf16>
    %74 = vector.shape_cast %73 : vector<1x1x24x8xbf16> to vector<24x8xbf16>
    %c12_85 = arith.constant 12 : index
    %c0_86 = arith.constant 0 : index
    %c0_87 = arith.constant 0 : index
    %75 = vector.load %arg5[%c12_85, %c0_86, %c0_87] : memref<27x8x8xbf16, #tpu.memory_space<vmem>>, vector<1x8x8xbf16>
    %76 = vector.shape_cast %75 : vector<1x8x8xbf16> to vector<8x8xbf16>
    %cst_88 = arith.constant dense<0.000000e+00> : vector<24x8xf32>
    %77 = tpu.matmul %74, %76, %cst_88 {dimension_numbers = #tpu.dot_dimension_numbers<[1], [0], [0], [1], [0, 0, 1, 1], [], []>} : vector<24x8xbf16>, vector<8x8xbf16>, vector<24x8xf32> -> vector<24x8xf32>
    %78 = arith.addf %72, %77 : vector<24x8xf32>
    %c0_89 = arith.constant 0 : index
    %c0_90 = arith.constant 0 : index
    %c7_91 = arith.constant 7 : index
    %c0_92 = arith.constant 0 : index
    %79 = vector.load %arg3[%c0_89, %c0_90, %c7_91, %c0_92] : memref<1x1x38x8xbf16, #tpu.memory_space<vmem>>, vector<1x1x24x8xbf16>
    %80 = vector.shape_cast %79 : vector<1x1x24x8xbf16> to vector<24x8xbf16>
    %c13_93 = arith.constant 13 : index
    %c0_94 = arith.constant 0 : index
    %c0_95 = arith.constant 0 : index
    %81 = vector.load %arg5[%c13_93, %c0_94, %c0_95] : memref<27x8x8xbf16, #tpu.memory_space<vmem>>, vector<1x8x8xbf16>
    %82 = vector.shape_cast %81 : vector<1x8x8xbf16> to vector<8x8xbf16>
    %cst_96 = arith.constant dense<0.000000e+00> : vector<24x8xf32>
    %83 = tpu.matmul %80, %82, %cst_96 {dimension_numbers = #tpu.dot_dimension_numbers<[1], [0], [0], [1], [0, 0, 1, 1], [], []>} : vector<24x8xbf16>, vector<8x8xbf16>, vector<24x8xf32> -> vector<24x8xf32>
    %84 = arith.addf %78, %83 : vector<24x8xf32>
    %c0_97 = arith.constant 0 : index
    %c0_98 = arith.constant 0 : index
    %c8_99 = arith.constant 8 : index
    %c0_100 = arith.constant 0 : index
    %85 = vector.load %arg3[%c0_97, %c0_98, %c8_99, %c0_100] : memref<1x1x38x8xbf16, #tpu.memory_space<vmem>>, vector<1x1x24x8xbf16>
    %86 = vector.shape_cast %85 : vector<1x1x24x8xbf16> to vector<24x8xbf16>
    %c14_101 = arith.constant 14 : index
    %c0_102 = arith.constant 0 : index
    %c0_103 = arith.constant 0 : index
    %87 = vector.load %arg5[%c14_101, %c0_102, %c0_103] : memref<27x8x8xbf16, #tpu.memory_space<vmem>>, vector<1x8x8xbf16>
    %88 = vector.shape_cast %87 : vector<1x8x8xbf16> to vector<8x8xbf16>
    %cst_104 = arith.constant dense<0.000000e+00> : vector<24x8xf32>
    %89 = tpu.matmul %86, %88, %cst_104 {dimension_numbers = #tpu.dot_dimension_numbers<[1], [0], [0], [1], [0, 0, 1, 1], [], []>} : vector<24x8xbf16>, vector<8x8xbf16>, vector<24x8xf32> -> vector<24x8xf32>
    %90 = arith.addf %84, %89 : vector<24x8xf32>
    %c0_105 = arith.constant 0 : index
    %c0_106 = arith.constant 0 : index
    %c12_107 = arith.constant 12 : index
    %c0_108 = arith.constant 0 : index
    %91 = vector.load %arg3[%c0_105, %c0_106, %c12_107, %c0_108] : memref<1x1x38x8xbf16, #tpu.memory_space<vmem>>, vector<1x1x24x8xbf16>
    %92 = vector.shape_cast %91 : vector<1x1x24x8xbf16> to vector<24x8xbf16>
    %c15 = arith.constant 15 : index
    %c0_109 = arith.constant 0 : index
    %c0_110 = arith.constant 0 : index
    %93 = vector.load %arg5[%c15, %c0_109, %c0_110] : memref<27x8x8xbf16, #tpu.memory_space<vmem>>, vector<1x8x8xbf16>
    %94 = vector.shape_cast %93 : vector<1x8x8xbf16> to vector<8x8xbf16>
    %cst_111 = arith.constant dense<0.000000e+00> : vector<24x8xf32>
    %95 = tpu.matmul %92, %94, %cst_111 {dimension_numbers = #tpu.dot_dimension_numbers<[1], [0], [0], [1], [0, 0, 1, 1], [], []>} : vector<24x8xbf16>, vector<8x8xbf16>, vector<24x8xf32> -> vector<24x8xf32>
    %96 = arith.addf %90, %95 : vector<24x8xf32>
    %c0_112 = arith.constant 0 : index
    %c0_113 = arith.constant 0 : index
    %c13_114 = arith.constant 13 : index
    %c0_115 = arith.constant 0 : index
    %97 = vector.load %arg3[%c0_112, %c0_113, %c13_114, %c0_115] : memref<1x1x38x8xbf16, #tpu.memory_space<vmem>>, vector<1x1x24x8xbf16>
    %98 = vector.shape_cast %97 : vector<1x1x24x8xbf16> to vector<24x8xbf16>
    %c16 = arith.constant 16 : index
    %c0_116 = arith.constant 0 : index
    %c0_117 = arith.constant 0 : index
    %99 = vector.load %arg5[%c16, %c0_116, %c0_117] : memref<27x8x8xbf16, #tpu.memory_space<vmem>>, vector<1x8x8xbf16>
    %100 = vector.shape_cast %99 : vector<1x8x8xbf16> to vector<8x8xbf16>
    %cst_118 = arith.constant dense<0.000000e+00> : vector<24x8xf32>
    %101 = tpu.matmul %98, %100, %cst_118 {dimension_numbers = #tpu.dot_dimension_numbers<[1], [0], [0], [1], [0, 0, 1, 1], [], []>} : vector<24x8xbf16>, vector<8x8xbf16>, vector<24x8xf32> -> vector<24x8xf32>
    %102 = arith.addf %96, %101 : vector<24x8xf32>
    %c0_119 = arith.constant 0 : index
    %c0_120 = arith.constant 0 : index
    %c14_121 = arith.constant 14 : index
    %c0_122 = arith.constant 0 : index
    %103 = vector.load %arg3[%c0_119, %c0_120, %c14_121, %c0_122] : memref<1x1x38x8xbf16, #tpu.memory_space<vmem>>, vector<1x1x24x8xbf16>
    %104 = vector.shape_cast %103 : vector<1x1x24x8xbf16> to vector<24x8xbf16>
    %c17 = arith.constant 17 : index
    %c0_123 = arith.constant 0 : index
    %c0_124 = arith.constant 0 : index
    %105 = vector.load %arg5[%c17, %c0_123, %c0_124] : memref<27x8x8xbf16, #tpu.memory_space<vmem>>, vector<1x8x8xbf16>
    %106 = vector.shape_cast %105 : vector<1x8x8xbf16> to vector<8x8xbf16>
    %cst_125 = arith.constant dense<0.000000e+00> : vector<24x8xf32>
    %107 = tpu.matmul %104, %106, %cst_125 {dimension_numbers = #tpu.dot_dimension_numbers<[1], [0], [0], [1], [0, 0, 1, 1], [], []>} : vector<24x8xbf16>, vector<8x8xbf16>, vector<24x8xf32> -> vector<24x8xf32>
    %108 = arith.addf %102, %107 : vector<24x8xf32>
    %c0_126 = arith.constant 0 : index
    %c0_127 = arith.constant 0 : index
    %c0_128 = arith.constant 0 : index
    %c0_129 = arith.constant 0 : index
    %109 = vector.load %arg4[%c0_126, %c0_127, %c0_128, %c0_129] : memref<1x1x38x8xbf16, #tpu.memory_space<vmem>>, vector<1x1x24x8xbf16>
    %110 = vector.shape_cast %109 : vector<1x1x24x8xbf16> to vector<24x8xbf16>
    %c18 = arith.constant 18 : index
    %c0_130 = arith.constant 0 : index
    %c0_131 = arith.constant 0 : index
    %111 = vector.load %arg5[%c18, %c0_130, %c0_131] : memref<27x8x8xbf16, #tpu.memory_space<vmem>>, vector<1x8x8xbf16>
    %112 = vector.shape_cast %111 : vector<1x8x8xbf16> to vector<8x8xbf16>
    %cst_132 = arith.constant dense<0.000000e+00> : vector<24x8xf32>
    %113 = tpu.matmul %110, %112, %cst_132 {dimension_numbers = #tpu.dot_dimension_numbers<[1], [0], [0], [1], [0, 0, 1, 1], [], []>} : vector<24x8xbf16>, vector<8x8xbf16>, vector<24x8xf32> -> vector<24x8xf32>
    %114 = arith.addf %108, %113 : vector<24x8xf32>
    %c0_133 = arith.constant 0 : index
    %c0_134 = arith.constant 0 : index
    %c1_135 = arith.constant 1 : index
    %c0_136 = arith.constant 0 : index
    %115 = vector.load %arg4[%c0_133, %c0_134, %c1_135, %c0_136] : memref<1x1x38x8xbf16, #tpu.memory_space<vmem>>, vector<1x1x24x8xbf16>
    %116 = vector.shape_cast %115 : vector<1x1x24x8xbf16> to vector<24x8xbf16>
    %c19 = arith.constant 19 : index
    %c0_137 = arith.constant 0 : index
    %c0_138 = arith.constant 0 : index
    %117 = vector.load %arg5[%c19, %c0_137, %c0_138] : memref<27x8x8xbf16, #tpu.memory_space<vmem>>, vector<1x8x8xbf16>
    %118 = vector.shape_cast %117 : vector<1x8x8xbf16> to vector<8x8xbf16>
    %cst_139 = arith.constant dense<0.000000e+00> : vector<24x8xf32>
    %119 = tpu.matmul %116, %118, %cst_139 {dimension_numbers = #tpu.dot_dimension_numbers<[1], [0], [0], [1], [0, 0, 1, 1], [], []>} : vector<24x8xbf16>, vector<8x8xbf16>, vector<24x8xf32> -> vector<24x8xf32>
    %120 = arith.addf %114, %119 : vector<24x8xf32>
    %c0_140 = arith.constant 0 : index
    %c0_141 = arith.constant 0 : index
    %c2_142 = arith.constant 2 : index
    %c0_143 = arith.constant 0 : index
    %121 = vector.load %arg4[%c0_140, %c0_141, %c2_142, %c0_143] : memref<1x1x38x8xbf16, #tpu.memory_space<vmem>>, vector<1x1x24x8xbf16>
    %122 = vector.shape_cast %121 : vector<1x1x24x8xbf16> to vector<24x8xbf16>
    %c20 = arith.constant 20 : index
    %c0_144 = arith.constant 0 : index
    %c0_145 = arith.constant 0 : index
    %123 = vector.load %arg5[%c20, %c0_144, %c0_145] : memref<27x8x8xbf16, #tpu.memory_space<vmem>>, vector<1x8x8xbf16>
    %124 = vector.shape_cast %123 : vector<1x8x8xbf16> to vector<8x8xbf16>
    %cst_146 = arith.constant dense<0.000000e+00> : vector<24x8xf32>
    %125 = tpu.matmul %122, %124, %cst_146 {dimension_numbers = #tpu.dot_dimension_numbers<[1], [0], [0], [1], [0, 0, 1, 1], [], []>} : vector<24x8xbf16>, vector<8x8xbf16>, vector<24x8xf32> -> vector<24x8xf32>
    %126 = arith.addf %120, %125 : vector<24x8xf32>
    %c0_147 = arith.constant 0 : index
    %c0_148 = arith.constant 0 : index
    %c6_149 = arith.constant 6 : index
    %c0_150 = arith.constant 0 : index
    %127 = vector.load %arg4[%c0_147, %c0_148, %c6_149, %c0_150] : memref<1x1x38x8xbf16, #tpu.memory_space<vmem>>, vector<1x1x24x8xbf16>
    %128 = vector.shape_cast %127 : vector<1x1x24x8xbf16> to vector<24x8xbf16>
    %c21 = arith.constant 21 : index
    %c0_151 = arith.constant 0 : index
    %c0_152 = arith.constant 0 : index
    %129 = vector.load %arg5[%c21, %c0_151, %c0_152] : memref<27x8x8xbf16, #tpu.memory_space<vmem>>, vector<1x8x8xbf16>
    %130 = vector.shape_cast %129 : vector<1x8x8xbf16> to vector<8x8xbf16>
    %cst_153 = arith.constant dense<0.000000e+00> : vector<24x8xf32>
    %131 = tpu.matmul %128, %130, %cst_153 {dimension_numbers = #tpu.dot_dimension_numbers<[1], [0], [0], [1], [0, 0, 1, 1], [], []>} : vector<24x8xbf16>, vector<8x8xbf16>, vector<24x8xf32> -> vector<24x8xf32>
    %132 = arith.addf %126, %131 : vector<24x8xf32>
    %c0_154 = arith.constant 0 : index
    %c0_155 = arith.constant 0 : index
    %c7_156 = arith.constant 7 : index
    %c0_157 = arith.constant 0 : index
    %133 = vector.load %arg4[%c0_154, %c0_155, %c7_156, %c0_157] : memref<1x1x38x8xbf16, #tpu.memory_space<vmem>>, vector<1x1x24x8xbf16>
    %134 = vector.shape_cast %133 : vector<1x1x24x8xbf16> to vector<24x8xbf16>
    %c22 = arith.constant 22 : index
    %c0_158 = arith.constant 0 : index
    %c0_159 = arith.constant 0 : index
    %135 = vector.load %arg5[%c22, %c0_158, %c0_159] : memref<27x8x8xbf16, #tpu.memory_space<vmem>>, vector<1x8x8xbf16>
    %136 = vector.shape_cast %135 : vector<1x8x8xbf16> to vector<8x8xbf16>
    %cst_160 = arith.constant dense<0.000000e+00> : vector<24x8xf32>
    %137 = tpu.matmul %134, %136, %cst_160 {dimension_numbers = #tpu.dot_dimension_numbers<[1], [0], [0], [1], [0, 0, 1, 1], [], []>} : vector<24x8xbf16>, vector<8x8xbf16>, vector<24x8xf32> -> vector<24x8xf32>
    %138 = arith.addf %132, %137 : vector<24x8xf32>
    %c0_161 = arith.constant 0 : index
    %c0_162 = arith.constant 0 : index
    %c8_163 = arith.constant 8 : index
    %c0_164 = arith.constant 0 : index
    %139 = vector.load %arg4[%c0_161, %c0_162, %c8_163, %c0_164] : memref<1x1x38x8xbf16, #tpu.memory_space<vmem>>, vector<1x1x24x8xbf16>
    %140 = vector.shape_cast %139 : vector<1x1x24x8xbf16> to vector<24x8xbf16>
    %c23 = arith.constant 23 : index
    %c0_165 = arith.constant 0 : index
    %c0_166 = arith.constant 0 : index
    %141 = vector.load %arg5[%c23, %c0_165, %c0_166] : memref<27x8x8xbf16, #tpu.memory_space<vmem>>, vector<1x8x8xbf16>
    %142 = vector.shape_cast %141 : vector<1x8x8xbf16> to vector<8x8xbf16>
    %cst_167 = arith.constant dense<0.000000e+00> : vector<24x8xf32>
    %143 = tpu.matmul %140, %142, %cst_167 {dimension_numbers = #tpu.dot_dimension_numbers<[1], [0], [0], [1], [0, 0, 1, 1], [], []>} : vector<24x8xbf16>, vector<8x8xbf16>, vector<24x8xf32> -> vector<24x8xf32>
    %144 = arith.addf %138, %143 : vector<24x8xf32>
    %c0_168 = arith.constant 0 : index
    %c0_169 = arith.constant 0 : index
    %c12_170 = arith.constant 12 : index
    %c0_171 = arith.constant 0 : index
    %145 = vector.load %arg4[%c0_168, %c0_169, %c12_170, %c0_171] : memref<1x1x38x8xbf16, #tpu.memory_space<vmem>>, vector<1x1x24x8xbf16>
    %146 = vector.shape_cast %145 : vector<1x1x24x8xbf16> to vector<24x8xbf16>
    %c24 = arith.constant 24 : index
    %c0_172 = arith.constant 0 : index
    %c0_173 = arith.constant 0 : index
    %147 = vector.load %arg5[%c24, %c0_172, %c0_173] : memref<27x8x8xbf16, #tpu.memory_space<vmem>>, vector<1x8x8xbf16>
    %148 = vector.shape_cast %147 : vector<1x8x8xbf16> to vector<8x8xbf16>
    %cst_174 = arith.constant dense<0.000000e+00> : vector<24x8xf32>
    %149 = tpu.matmul %146, %148, %cst_174 {dimension_numbers = #tpu.dot_dimension_numbers<[1], [0], [0], [1], [0, 0, 1, 1], [], []>} : vector<24x8xbf16>, vector<8x8xbf16>, vector<24x8xf32> -> vector<24x8xf32>
    %150 = arith.addf %144, %149 : vector<24x8xf32>
    %c0_175 = arith.constant 0 : index
    %c0_176 = arith.constant 0 : index
    %c13_177 = arith.constant 13 : index
    %c0_178 = arith.constant 0 : index
    %151 = vector.load %arg4[%c0_175, %c0_176, %c13_177, %c0_178] : memref<1x1x38x8xbf16, #tpu.memory_space<vmem>>, vector<1x1x24x8xbf16>
    %152 = vector.shape_cast %151 : vector<1x1x24x8xbf16> to vector<24x8xbf16>
    %c25 = arith.constant 25 : index
    %c0_179 = arith.constant 0 : index
    %c0_180 = arith.constant 0 : index
    %153 = vector.load %arg5[%c25, %c0_179, %c0_180] : memref<27x8x8xbf16, #tpu.memory_space<vmem>>, vector<1x8x8xbf16>
    %154 = vector.shape_cast %153 : vector<1x8x8xbf16> to vector<8x8xbf16>
    %cst_181 = arith.constant dense<0.000000e+00> : vector<24x8xf32>
    %155 = tpu.matmul %152, %154, %cst_181 {dimension_numbers = #tpu.dot_dimension_numbers<[1], [0], [0], [1], [0, 0, 1, 1], [], []>} : vector<24x8xbf16>, vector<8x8xbf16>, vector<24x8xf32> -> vector<24x8xf32>
    %156 = arith.addf %150, %155 : vector<24x8xf32>
    %c0_182 = arith.constant 0 : index
    %c0_183 = arith.constant 0 : index
    %c14_184 = arith.constant 14 : index
    %c0_185 = arith.constant 0 : index
    %157 = vector.load %arg4[%c0_182, %c0_183, %c14_184, %c0_185] : memref<1x1x38x8xbf16, #tpu.memory_space<vmem>>, vector<1x1x24x8xbf16>
    %158 = vector.shape_cast %157 : vector<1x1x24x8xbf16> to vector<24x8xbf16>
    %c26 = arith.constant 26 : index
    %c0_186 = arith.constant 0 : index
    %c0_187 = arith.constant 0 : index
    %159 = vector.load %arg5[%c26, %c0_186, %c0_187] : memref<27x8x8xbf16, #tpu.memory_space<vmem>>, vector<1x8x8xbf16>
    %160 = vector.shape_cast %159 : vector<1x8x8xbf16> to vector<8x8xbf16>
    %cst_188 = arith.constant dense<0.000000e+00> : vector<24x8xf32>
    %161 = tpu.matmul %158, %160, %cst_188 {dimension_numbers = #tpu.dot_dimension_numbers<[1], [0], [0], [1], [0, 0, 1, 1], [], []>} : vector<24x8xbf16>, vector<8x8xbf16>, vector<24x8xf32> -> vector<24x8xf32>
    %162 = arith.addf %156, %161 : vector<24x8xf32>
    %c0_189 = arith.constant 0 : index
    %c0_190 = arith.constant 0 : index
    %163 = vector.load %arg6[%c0_189, %c0_190] : memref<1x8xf32, #tpu.memory_space<vmem>>, vector<1x8xf32>
    %164 = vector.broadcast %163 : vector<1x8xf32> to vector<24x8xf32>
    %165 = arith.addf %162, %164 : vector<24x8xf32>
    %cst_191 = arith.constant 0.000000e+00 : f32
    %166 = vector.broadcast %cst_191 : f32 to vector<24x8xf32>
    %167 = arith.maximumf %165, %166 : vector<24x8xf32>
    %168 = tpu.iota {dimensions = array<i32: 0>} : vector<24x1xi32>
    %c6_i32 = arith.constant 6 : i32
    %c0_i32 = arith.constant 0 : i32
    %169 = arith.cmpi eq, %c6_i32, %c0_i32 : i32
    %c1_i32 = arith.constant 1 : i32
    %170 = arith.select %169, %c1_i32, %c6_i32 : i32
    %171 = vector.broadcast %170 : i32 to vector<24x1xi32>
    %172 = arith.remsi %168, %171 : vector<24x1xi32>
    %c0_i32_192 = arith.constant 0 : i32
    %173 = vector.broadcast %c0_i32_192 : i32 to vector<24x1xi32>
    %174 = arith.cmpi ne, %172, %173 : vector<24x1xi32>
    %c0_i32_193 = arith.constant 0 : i32
    %175 = vector.broadcast %c0_i32_193 : i32 to vector<24x1xi32>
    %176 = arith.cmpi slt, %172, %175 : vector<24x1xi32>
    %c0_i32_194 = arith.constant 0 : i32
    %177 = arith.cmpi slt, %170, %c0_i32_194 : i32
    %178 = vector.broadcast %177 : i1 to vector<24x1xi1>
    %179 = vector.broadcast %178 : vector<24x1xi1> to vector<24x1xi1>
    %180 = arith.xori %176, %179 : vector<24x1xi1>
    %181 = arith.andi %180, %174 : vector<24x1xi1>
    %182 = vector.broadcast %170 : i32 to vector<24x1xi32>
    %183 = arith.addi %172, %182 : vector<24x1xi32>
    %184 = arith.select %181, %183, %172 : vector<24x1xi1>, vector<24x1xi32>
    %c1_i32_195 = arith.constant 1 : i32
    %185 = vector.broadcast %c1_i32_195 : i32 to vector<24x1xi32>
    %186 = arith.cmpi sge, %184, %185 : vector<24x1xi32>
    %c4_i32 = arith.constant 4 : i32
    %187 = vector.broadcast %c4_i32 : i32 to vector<24x1xi32>
    %188 = arith.cmpi sle, %184, %187 : vector<24x1xi32>
    %189 = arith.andi %186, %188 : vector<24x1xi1>
    %cst_196 = arith.constant 0.000000e+00 : f32
    %190 = vector.shape_cast %189 : vector<24x1xi1> to vector<24x1xi1>
    %191 = vector.broadcast %190 : vector<24x1xi1> to vector<24x8xi1>
    %192 = vector.broadcast %cst_196 : f32 to vector<24x8xf32>
    %193 = arith.select %191, %167, %192 : vector<24x8xi1>, vector<24x8xf32>
    %194 = arith.truncf %193 : vector<24x8xf32> to vector<24x8xbf16>
    %c0_197 = arith.constant 0 : index
    %c0_198 = arith.constant 0 : index
    %c0_199 = arith.constant 0 : index
    %c0_200 = arith.constant 0 : index
    %195 = vector.load %arg7[%c0_197, %c0_198, %c0_199, %c0_200] : memref<1x1x24x8xbf16, #tpu.memory_space<vmem>>, vector<1x1x24x8xbf16>
    %196 = vector.shape_cast %195 : vector<1x1x24x8xbf16> to vector<24x8xbf16>
    %197 = vector.shape_cast %194 : vector<24x8xbf16> to vector<1x1x24x8xbf16>
    tpu.vector_store %arg7[%c0_197, %c0_198, %c0_199, %c0_200], %197 {strides = array<i32>} : memref<1x1x24x8xbf16, #tpu.memory_space<vmem>>, vector<1x1x24x8xbf16>,
    return
  }
  func.func @transform_0(%arg0: i32, %arg1: i32) -> (i32, i32, i32, i32) {
    %c0_i32 = arith.constant 0 : i32
    %0 = arith.addi %arg1, %c0_i32 : i32
    %c0_i32_0 = arith.constant 0 : i32
    %c0_i32_1 = arith.constant 0 : i32
    %c0_i32_2 = arith.constant 0 : i32
    return %arg0, %0, %c0_i32_0, %c0_i32_1 : i32, i32, i32, i32
  }
  func.func @transform_1(%arg0: i32, %arg1: i32) -> (i32, i32, i32, i32) {
    %c1_i32 = arith.constant 1 : i32
    %0 = arith.addi %arg1, %c1_i32 : i32
    %c0_i32 = arith.constant 0 : i32
    %c0_i32_0 = arith.constant 0 : i32
    %c0_i32_1 = arith.constant 0 : i32
    return %arg0, %0, %c0_i32, %c0_i32_0 : i32, i32, i32, i32
  }
  func.func @transform_2(%arg0: i32, %arg1: i32) -> (i32, i32, i32, i32) {
    %c2_i32 = arith.constant 2 : i32
    %0 = arith.addi %arg1, %c2_i32 : i32
    %c0_i32 = arith.constant 0 : i32
    %c0_i32_0 = arith.constant 0 : i32
    %c0_i32_1 = arith.constant 0 : i32
    return %arg0, %0, %c0_i32, %c0_i32_0 : i32, i32, i32, i32
  }
  func.func @transform_3(%arg0: i32, %arg1: i32) -> (i32, i32, i32) {
    %c0_i32 = arith.constant 0 : i32
    %c0_i32_0 = arith.constant 0 : i32
    %c0_i32_1 = arith.constant 0 : i32
    %c0_i32_2 = arith.constant 0 : i32
    return %c0_i32, %c0_i32_0, %c0_i32_1 : i32, i32, i32
  }
  func.func @transform_4(%arg0: i32, %arg1: i32) -> (i32, i32) {
    %c0_i32 = arith.constant 0 : i32
    %c0_i32_0 = arith.constant 0 : i32
    %c0_i32_1 = arith.constant 0 : i32
    return %c0_i32, %c0_i32_0 : i32, i32
  }
  func.func @transform_5(%arg0: i32, %arg1: i32) -> (i32, i32, i32, i32) {
    %c0_i32 = arith.constant 0 : i32
    %c0_i32_0 = arith.constant 0 : i32
    %c0_i32_1 = arith.constant 0 : i32
    return %arg0, %arg1, %c0_i32, %c0_i32_0 : i32, i32, i32, i32
  }
}

module attributes {stable_mosaic.version = 11 : i64} {
  func.func @kernel(%arg0: i32, %arg1: i32, %arg2: memref<1x1x38x8xbf16, #tpu.memory_space<vmem>>, %arg3: memref<1x1x38x8xbf16, #tpu.memory_space<vmem>>, %arg4: memref<1x1x38x8xbf16, #tpu.memory_space<vmem>>, %arg5: memref<27x8x8xbf16, #tpu.memory_space<vmem>>, %arg6: memref<1x8xf32, #tpu.memory_space<vmem>>, %arg7: memref<1x1x24x8xbf16, #tpu.memory_space<vmem>>, %arg8: memref<1x1x24x8xbf16, #tpu.memory_space<vmem>>) attributes {dimension_semantics = [#tpu.dimension_semantics<parallel>, #tpu.dimension_semantics<parallel>], iteration_bounds = array<i64: 2, 4>, scalar_prefetch = 0 : i64, scratch_operands = 0 : i64, tpu.core_type = #tpu.core_type<tc>, window_params = [{transform_indices = @transform_0, window_bounds = array<i64: 1, 1, 38, 8>}, {transform_indices = @transform_1, window_bounds = array<i64: 1, 1, 38, 8>}, {transform_indices = @transform_2, window_bounds = array<i64: 1, 1, 38, 8>}, {pipeline_mode = #tpu.pipeline_mode<synchronous>, transform_indices = @transform_3, window_bounds = array<i64: 27, 8, 8>}, {pipeline_mode = #tpu.pipeline_mode<synchronous>, transform_indices = @transform_4, window_bounds = array<i64: 1, 8>}, {transform_indices = @transform_5, window_bounds = array<i64: 1, 1, 24, 8>}, {transform_indices = @transform_6, window_bounds = array<i64: 1, 1, 24, 8>}]} {
    %cst = arith.constant 0.000000e+00 : f32
    %0 = vector.broadcast %cst : f32 to vector<24x8xf32>
    %c0 = arith.constant 0 : index
    %c0_0 = arith.constant 0 : index
    %c0_1 = arith.constant 0 : index
    %c0_2 = arith.constant 0 : index
    %1 = vector.load %arg2[%c0, %c0_0, %c0_1, %c0_2] : memref<1x1x38x8xbf16, #tpu.memory_space<vmem>>, vector<1x1x24x8xbf16>
    %2 = vector.shape_cast %1 : vector<1x1x24x8xbf16> to vector<24x8xbf16>
    %c0_3 = arith.constant 0 : index
    %c0_4 = arith.constant 0 : index
    %c0_5 = arith.constant 0 : index
    %3 = vector.load %arg5[%c0_3, %c0_4, %c0_5] : memref<27x8x8xbf16, #tpu.memory_space<vmem>>, vector<1x8x8xbf16>
    %4 = vector.shape_cast %3 : vector<1x8x8xbf16> to vector<8x8xbf16>
    %cst_6 = arith.constant dense<0.000000e+00> : vector<24x8xf32>
    %5 = tpu.matmul %2, %4, %cst_6 {dimension_numbers = #tpu.dot_dimension_numbers<[1], [0], [0], [1], [0, 0, 1, 1], [], []>} : vector<24x8xbf16>, vector<8x8xbf16>, vector<24x8xf32> -> vector<24x8xf32>
    %6 = arith.addf %0, %5 : vector<24x8xf32>
    %c0_7 = arith.constant 0 : index
    %c0_8 = arith.constant 0 : index
    %c1 = arith.constant 1 : index
    %c0_9 = arith.constant 0 : index
    %7 = vector.load %arg2[%c0_7, %c0_8, %c1, %c0_9] : memref<1x1x38x8xbf16, #tpu.memory_space<vmem>>, vector<1x1x24x8xbf16>
    %8 = vector.shape_cast %7 : vector<1x1x24x8xbf16> to vector<24x8xbf16>
    %c1_10 = arith.constant 1 : index
    %c0_11 = arith.constant 0 : index
    %c0_12 = arith.constant 0 : index
    %9 = vector.load %arg5[%c1_10, %c0_11, %c0_12] : memref<27x8x8xbf16, #tpu.memory_space<vmem>>, vector<1x8x8xbf16>
    %10 = vector.shape_cast %9 : vector<1x8x8xbf16> to vector<8x8xbf16>
    %cst_13 = arith.constant dense<0.000000e+00> : vector<24x8xf32>
    %11 = tpu.matmul %8, %10, %cst_13 {dimension_numbers = #tpu.dot_dimension_numbers<[1], [0], [0], [1], [0, 0, 1, 1], [], []>} : vector<24x8xbf16>, vector<8x8xbf16>, vector<24x8xf32> -> vector<24x8xf32>
    %12 = arith.addf %6, %11 : vector<24x8xf32>
    %c0_14 = arith.constant 0 : index
    %c0_15 = arith.constant 0 : index
    %c2 = arith.constant 2 : index
    %c0_16 = arith.constant 0 : index
    %13 = vector.load %arg2[%c0_14, %c0_15, %c2, %c0_16] : memref<1x1x38x8xbf16, #tpu.memory_space<vmem>>, vector<1x1x24x8xbf16>
    %14 = vector.shape_cast %13 : vector<1x1x24x8xbf16> to vector<24x8xbf16>
    %c2_17 = arith.constant 2 : index
    %c0_18 = arith.constant 0 : index
    %c0_19 = arith.constant 0 : index
    %15 = vector.load %arg5[%c2_17, %c0_18, %c0_19] : memref<27x8x8xbf16, #tpu.memory_space<vmem>>, vector<1x8x8xbf16>
    %16 = vector.shape_cast %15 : vector<1x8x8xbf16> to vector<8x8xbf16>
    %cst_20 = arith.constant dense<0.000000e+00> : vector<24x8xf32>
    %17 = tpu.matmul %14, %16, %cst_20 {dimension_numbers = #tpu.dot_dimension_numbers<[1], [0], [0], [1], [0, 0, 1, 1], [], []>} : vector<24x8xbf16>, vector<8x8xbf16>, vector<24x8xf32> -> vector<24x8xf32>
    %18 = arith.addf %12, %17 : vector<24x8xf32>
    %c0_21 = arith.constant 0 : index
    %c0_22 = arith.constant 0 : index
    %c6 = arith.constant 6 : index
    %c0_23 = arith.constant 0 : index
    %19 = vector.load %arg2[%c0_21, %c0_22, %c6, %c0_23] : memref<1x1x38x8xbf16, #tpu.memory_space<vmem>>, vector<1x1x24x8xbf16>
    %20 = vector.shape_cast %19 : vector<1x1x24x8xbf16> to vector<24x8xbf16>
    %c3 = arith.constant 3 : index
    %c0_24 = arith.constant 0 : index
    %c0_25 = arith.constant 0 : index
    %21 = vector.load %arg5[%c3, %c0_24, %c0_25] : memref<27x8x8xbf16, #tpu.memory_space<vmem>>, vector<1x8x8xbf16>
    %22 = vector.shape_cast %21 : vector<1x8x8xbf16> to vector<8x8xbf16>
    %cst_26 = arith.constant dense<0.000000e+00> : vector<24x8xf32>
    %23 = tpu.matmul %20, %22, %cst_26 {dimension_numbers = #tpu.dot_dimension_numbers<[1], [0], [0], [1], [0, 0, 1, 1], [], []>} : vector<24x8xbf16>, vector<8x8xbf16>, vector<24x8xf32> -> vector<24x8xf32>
    %24 = arith.addf %18, %23 : vector<24x8xf32>
    %c0_27 = arith.constant 0 : index
    %c0_28 = arith.constant 0 : index
    %c7 = arith.constant 7 : index
    %c0_29 = arith.constant 0 : index
    %25 = vector.load %arg2[%c0_27, %c0_28, %c7, %c0_29] : memref<1x1x38x8xbf16, #tpu.memory_space<vmem>>, vector<1x1x24x8xbf16>
    %26 = vector.shape_cast %25 : vector<1x1x24x8xbf16> to vector<24x8xbf16>
    %c4 = arith.constant 4 : index
    %c0_30 = arith.constant 0 : index
    %c0_31 = arith.constant 0 : index
    %27 = vector.load %arg5[%c4, %c0_30, %c0_31] : memref<27x8x8xbf16, #tpu.memory_space<vmem>>, vector<1x8x8xbf16>
    %28 = vector.shape_cast %27 : vector<1x8x8xbf16> to vector<8x8xbf16>
    %cst_32 = arith.constant dense<0.000000e+00> : vector<24x8xf32>
    %29 = tpu.matmul %26, %28, %cst_32 {dimension_numbers = #tpu.dot_dimension_numbers<[1], [0], [0], [1], [0, 0, 1, 1], [], []>} : vector<24x8xbf16>, vector<8x8xbf16>, vector<24x8xf32> -> vector<24x8xf32>
    %30 = arith.addf %24, %29 : vector<24x8xf32>
    %c0_33 = arith.constant 0 : index
    %c0_34 = arith.constant 0 : index
    %c8 = arith.constant 8 : index
    %c0_35 = arith.constant 0 : index
    %31 = vector.load %arg2[%c0_33, %c0_34, %c8, %c0_35] : memref<1x1x38x8xbf16, #tpu.memory_space<vmem>>, vector<1x1x24x8xbf16>
    %32 = vector.shape_cast %31 : vector<1x1x24x8xbf16> to vector<24x8xbf16>
    %c5 = arith.constant 5 : index
    %c0_36 = arith.constant 0 : index
    %c0_37 = arith.constant 0 : index
    %33 = vector.load %arg5[%c5, %c0_36, %c0_37] : memref<27x8x8xbf16, #tpu.memory_space<vmem>>, vector<1x8x8xbf16>
    %34 = vector.shape_cast %33 : vector<1x8x8xbf16> to vector<8x8xbf16>
    %cst_38 = arith.constant dense<0.000000e+00> : vector<24x8xf32>
    %35 = tpu.matmul %32, %34, %cst_38 {dimension_numbers = #tpu.dot_dimension_numbers<[1], [0], [0], [1], [0, 0, 1, 1], [], []>} : vector<24x8xbf16>, vector<8x8xbf16>, vector<24x8xf32> -> vector<24x8xf32>
    %36 = arith.addf %30, %35 : vector<24x8xf32>
    %c0_39 = arith.constant 0 : index
    %c0_40 = arith.constant 0 : index
    %c12 = arith.constant 12 : index
    %c0_41 = arith.constant 0 : index
    %37 = vector.load %arg2[%c0_39, %c0_40, %c12, %c0_41] : memref<1x1x38x8xbf16, #tpu.memory_space<vmem>>, vector<1x1x24x8xbf16>
    %38 = vector.shape_cast %37 : vector<1x1x24x8xbf16> to vector<24x8xbf16>
    %c6_42 = arith.constant 6 : index
    %c0_43 = arith.constant 0 : index
    %c0_44 = arith.constant 0 : index
    %39 = vector.load %arg5[%c6_42, %c0_43, %c0_44] : memref<27x8x8xbf16, #tpu.memory_space<vmem>>, vector<1x8x8xbf16>
    %40 = vector.shape_cast %39 : vector<1x8x8xbf16> to vector<8x8xbf16>
    %cst_45 = arith.constant dense<0.000000e+00> : vector<24x8xf32>
    %41 = tpu.matmul %38, %40, %cst_45 {dimension_numbers = #tpu.dot_dimension_numbers<[1], [0], [0], [1], [0, 0, 1, 1], [], []>} : vector<24x8xbf16>, vector<8x8xbf16>, vector<24x8xf32> -> vector<24x8xf32>
    %42 = arith.addf %36, %41 : vector<24x8xf32>
    %c0_46 = arith.constant 0 : index
    %c0_47 = arith.constant 0 : index
    %c13 = arith.constant 13 : index
    %c0_48 = arith.constant 0 : index
    %43 = vector.load %arg2[%c0_46, %c0_47, %c13, %c0_48] : memref<1x1x38x8xbf16, #tpu.memory_space<vmem>>, vector<1x1x24x8xbf16>
    %44 = vector.shape_cast %43 : vector<1x1x24x8xbf16> to vector<24x8xbf16>
    %c7_49 = arith.constant 7 : index
    %c0_50 = arith.constant 0 : index
    %c0_51 = arith.constant 0 : index
    %45 = vector.load %arg5[%c7_49, %c0_50, %c0_51] : memref<27x8x8xbf16, #tpu.memory_space<vmem>>, vector<1x8x8xbf16>
    %46 = vector.shape_cast %45 : vector<1x8x8xbf16> to vector<8x8xbf16>
    %cst_52 = arith.constant dense<0.000000e+00> : vector<24x8xf32>
    %47 = tpu.matmul %44, %46, %cst_52 {dimension_numbers = #tpu.dot_dimension_numbers<[1], [0], [0], [1], [0, 0, 1, 1], [], []>} : vector<24x8xbf16>, vector<8x8xbf16>, vector<24x8xf32> -> vector<24x8xf32>
    %48 = arith.addf %42, %47 : vector<24x8xf32>
    %c0_53 = arith.constant 0 : index
    %c0_54 = arith.constant 0 : index
    %c14 = arith.constant 14 : index
    %c0_55 = arith.constant 0 : index
    %49 = vector.load %arg2[%c0_53, %c0_54, %c14, %c0_55] : memref<1x1x38x8xbf16, #tpu.memory_space<vmem>>, vector<1x1x24x8xbf16>
    %50 = vector.shape_cast %49 : vector<1x1x24x8xbf16> to vector<24x8xbf16>
    %c8_56 = arith.constant 8 : index
    %c0_57 = arith.constant 0 : index
    %c0_58 = arith.constant 0 : index
    %51 = vector.load %arg5[%c8_56, %c0_57, %c0_58] : memref<27x8x8xbf16, #tpu.memory_space<vmem>>, vector<1x8x8xbf16>
    %52 = vector.shape_cast %51 : vector<1x8x8xbf16> to vector<8x8xbf16>
    %cst_59 = arith.constant dense<0.000000e+00> : vector<24x8xf32>
    %53 = tpu.matmul %50, %52, %cst_59 {dimension_numbers = #tpu.dot_dimension_numbers<[1], [0], [0], [1], [0, 0, 1, 1], [], []>} : vector<24x8xbf16>, vector<8x8xbf16>, vector<24x8xf32> -> vector<24x8xf32>
    %54 = arith.addf %48, %53 : vector<24x8xf32>
    %c0_60 = arith.constant 0 : index
    %c0_61 = arith.constant 0 : index
    %c0_62 = arith.constant 0 : index
    %c0_63 = arith.constant 0 : index
    %55 = vector.load %arg3[%c0_60, %c0_61, %c0_62, %c0_63] : memref<1x1x38x8xbf16, #tpu.memory_space<vmem>>, vector<1x1x24x8xbf16>
    %56 = vector.shape_cast %55 : vector<1x1x24x8xbf16> to vector<24x8xbf16>
    %c9 = arith.constant 9 : index
    %c0_64 = arith.constant 0 : index
    %c0_65 = arith.constant 0 : index
    %57 = vector.load %arg5[%c9, %c0_64, %c0_65] : memref<27x8x8xbf16, #tpu.memory_space<vmem>>, vector<1x8x8xbf16>
    %58 = vector.shape_cast %57 : vector<1x8x8xbf16> to vector<8x8xbf16>
    %cst_66 = arith.constant dense<0.000000e+00> : vector<24x8xf32>
    %59 = tpu.matmul %56, %58, %cst_66 {dimension_numbers = #tpu.dot_dimension_numbers<[1], [0], [0], [1], [0, 0, 1, 1], [], []>} : vector<24x8xbf16>, vector<8x8xbf16>, vector<24x8xf32> -> vector<24x8xf32>
    %60 = arith.addf %54, %59 : vector<24x8xf32>
    %c0_67 = arith.constant 0 : index
    %c0_68 = arith.constant 0 : index
    %c1_69 = arith.constant 1 : index
    %c0_70 = arith.constant 0 : index
    %61 = vector.load %arg3[%c0_67, %c0_68, %c1_69, %c0_70] : memref<1x1x38x8xbf16, #tpu.memory_space<vmem>>, vector<1x1x24x8xbf16>
    %62 = vector.shape_cast %61 : vector<1x1x24x8xbf16> to vector<24x8xbf16>
    %c10 = arith.constant 10 : index
    %c0_71 = arith.constant 0 : index
    %c0_72 = arith.constant 0 : index
    %63 = vector.load %arg5[%c10, %c0_71, %c0_72] : memref<27x8x8xbf16, #tpu.memory_space<vmem>>, vector<1x8x8xbf16>
    %64 = vector.shape_cast %63 : vector<1x8x8xbf16> to vector<8x8xbf16>
    %cst_73 = arith.constant dense<0.000000e+00> : vector<24x8xf32>
    %65 = tpu.matmul %62, %64, %cst_73 {dimension_numbers = #tpu.dot_dimension_numbers<[1], [0], [0], [1], [0, 0, 1, 1], [], []>} : vector<24x8xbf16>, vector<8x8xbf16>, vector<24x8xf32> -> vector<24x8xf32>
    %66 = arith.addf %60, %65 : vector<24x8xf32>
    %c0_74 = arith.constant 0 : index
    %c0_75 = arith.constant 0 : index
    %c2_76 = arith.constant 2 : index
    %c0_77 = arith.constant 0 : index
    %67 = vector.load %arg3[%c0_74, %c0_75, %c2_76, %c0_77] : memref<1x1x38x8xbf16, #tpu.memory_space<vmem>>, vector<1x1x24x8xbf16>
    %68 = vector.shape_cast %67 : vector<1x1x24x8xbf16> to vector<24x8xbf16>
    %c11 = arith.constant 11 : index
    %c0_78 = arith.constant 0 : index
    %c0_79 = arith.constant 0 : index
    %69 = vector.load %arg5[%c11, %c0_78, %c0_79] : memref<27x8x8xbf16, #tpu.memory_space<vmem>>, vector<1x8x8xbf16>
    %70 = vector.shape_cast %69 : vector<1x8x8xbf16> to vector<8x8xbf16>
    %cst_80 = arith.constant dense<0.000000e+00> : vector<24x8xf32>
    %71 = tpu.matmul %68, %70, %cst_80 {dimension_numbers = #tpu.dot_dimension_numbers<[1], [0], [0], [1], [0, 0, 1, 1], [], []>} : vector<24x8xbf16>, vector<8x8xbf16>, vector<24x8xf32> -> vector<24x8xf32>
    %72 = arith.addf %66, %71 : vector<24x8xf32>
    %c0_81 = arith.constant 0 : index
    %c0_82 = arith.constant 0 : index
    %c6_83 = arith.constant 6 : index
    %c0_84 = arith.constant 0 : index
    %73 = vector.load %arg3[%c0_81, %c0_82, %c6_83, %c0_84] : memref<1x1x38x8xbf16, #tpu.memory_space<vmem>>, vector<1x1x24x8xbf16>
    %74 = vector.shape_cast %73 : vector<1x1x24x8xbf16> to vector<24x8xbf16>
    %c12_85 = arith.constant 12 : index
    %c0_86 = arith.constant 0 : index
    %c0_87 = arith.constant 0 : index
    %75 = vector.load %arg5[%c12_85, %c0_86, %c0_87] : memref<27x8x8xbf16, #tpu.memory_space<vmem>>, vector<1x8x8xbf16>
    %76 = vector.shape_cast %75 : vector<1x8x8xbf16> to vector<8x8xbf16>
    %cst_88 = arith.constant dense<0.000000e+00> : vector<24x8xf32>
    %77 = tpu.matmul %74, %76, %cst_88 {dimension_numbers = #tpu.dot_dimension_numbers<[1], [0], [0], [1], [0, 0, 1, 1], [], []>} : vector<24x8xbf16>, vector<8x8xbf16>, vector<24x8xf32> -> vector<24x8xf32>
    %78 = arith.addf %72, %77 : vector<24x8xf32>
    %c0_89 = arith.constant 0 : index
    %c0_90 = arith.constant 0 : index
    %c7_91 = arith.constant 7 : index
    %c0_92 = arith.constant 0 : index
    %79 = vector.load %arg3[%c0_89, %c0_90, %c7_91, %c0_92] : memref<1x1x38x8xbf16, #tpu.memory_space<vmem>>, vector<1x1x24x8xbf16>
    %80 = vector.shape_cast %79 : vector<1x1x24x8xbf16> to vector<24x8xbf16>
    %c13_93 = arith.constant 13 : index
    %c0_94 = arith.constant 0 : index
    %c0_95 = arith.constant 0 : index
    %81 = vector.load %arg5[%c13_93, %c0_94, %c0_95] : memref<27x8x8xbf16, #tpu.memory_space<vmem>>, vector<1x8x8xbf16>
    %82 = vector.shape_cast %81 : vector<1x8x8xbf16> to vector<8x8xbf16>
    %cst_96 = arith.constant dense<0.000000e+00> : vector<24x8xf32>
    %83 = tpu.matmul %80, %82, %cst_96 {dimension_numbers = #tpu.dot_dimension_numbers<[1], [0], [0], [1], [0, 0, 1, 1], [], []>} : vector<24x8xbf16>, vector<8x8xbf16>, vector<24x8xf32> -> vector<24x8xf32>
    %84 = arith.addf %78, %83 : vector<24x8xf32>
    %c0_97 = arith.constant 0 : index
    %c0_98 = arith.constant 0 : index
    %c8_99 = arith.constant 8 : index
    %c0_100 = arith.constant 0 : index
    %85 = vector.load %arg3[%c0_97, %c0_98, %c8_99, %c0_100] : memref<1x1x38x8xbf16, #tpu.memory_space<vmem>>, vector<1x1x24x8xbf16>
    %86 = vector.shape_cast %85 : vector<1x1x24x8xbf16> to vector<24x8xbf16>
    %c14_101 = arith.constant 14 : index
    %c0_102 = arith.constant 0 : index
    %c0_103 = arith.constant 0 : index
    %87 = vector.load %arg5[%c14_101, %c0_102, %c0_103] : memref<27x8x8xbf16, #tpu.memory_space<vmem>>, vector<1x8x8xbf16>
    %88 = vector.shape_cast %87 : vector<1x8x8xbf16> to vector<8x8xbf16>
    %cst_104 = arith.constant dense<0.000000e+00> : vector<24x8xf32>
    %89 = tpu.matmul %86, %88, %cst_104 {dimension_numbers = #tpu.dot_dimension_numbers<[1], [0], [0], [1], [0, 0, 1, 1], [], []>} : vector<24x8xbf16>, vector<8x8xbf16>, vector<24x8xf32> -> vector<24x8xf32>
    %90 = arith.addf %84, %89 : vector<24x8xf32>
    %c0_105 = arith.constant 0 : index
    %c0_106 = arith.constant 0 : index
    %c12_107 = arith.constant 12 : index
    %c0_108 = arith.constant 0 : index
    %91 = vector.load %arg3[%c0_105, %c0_106, %c12_107, %c0_108] : memref<1x1x38x8xbf16, #tpu.memory_space<vmem>>, vector<1x1x24x8xbf16>
    %92 = vector.shape_cast %91 : vector<1x1x24x8xbf16> to vector<24x8xbf16>
    %c15 = arith.constant 15 : index
    %c0_109 = arith.constant 0 : index
    %c0_110 = arith.constant 0 : index
    %93 = vector.load %arg5[%c15, %c0_109, %c0_110] : memref<27x8x8xbf16, #tpu.memory_space<vmem>>, vector<1x8x8xbf16>
    %94 = vector.shape_cast %93 : vector<1x8x8xbf16> to vector<8x8xbf16>
    %cst_111 = arith.constant dense<0.000000e+00> : vector<24x8xf32>
    %95 = tpu.matmul %92, %94, %cst_111 {dimension_numbers = #tpu.dot_dimension_numbers<[1], [0], [0], [1], [0, 0, 1, 1], [], []>} : vector<24x8xbf16>, vector<8x8xbf16>, vector<24x8xf32> -> vector<24x8xf32>
    %96 = arith.addf %90, %95 : vector<24x8xf32>
    %c0_112 = arith.constant 0 : index
    %c0_113 = arith.constant 0 : index
    %c13_114 = arith.constant 13 : index
    %c0_115 = arith.constant 0 : index
    %97 = vector.load %arg3[%c0_112, %c0_113, %c13_114, %c0_115] : memref<1x1x38x8xbf16, #tpu.memory_space<vmem>>, vector<1x1x24x8xbf16>
    %98 = vector.shape_cast %97 : vector<1x1x24x8xbf16> to vector<24x8xbf16>
    %c16 = arith.constant 16 : index
    %c0_116 = arith.constant 0 : index
    %c0_117 = arith.constant 0 : index
    %99 = vector.load %arg5[%c16, %c0_116, %c0_117] : memref<27x8x8xbf16, #tpu.memory_space<vmem>>, vector<1x8x8xbf16>
    %100 = vector.shape_cast %99 : vector<1x8x8xbf16> to vector<8x8xbf16>
    %cst_118 = arith.constant dense<0.000000e+00> : vector<24x8xf32>
    %101 = tpu.matmul %98, %100, %cst_118 {dimension_numbers = #tpu.dot_dimension_numbers<[1], [0], [0], [1], [0, 0, 1, 1], [], []>} : vector<24x8xbf16>, vector<8x8xbf16>, vector<24x8xf32> -> vector<24x8xf32>
    %102 = arith.addf %96, %101 : vector<24x8xf32>
    %c0_119 = arith.constant 0 : index
    %c0_120 = arith.constant 0 : index
    %c14_121 = arith.constant 14 : index
    %c0_122 = arith.constant 0 : index
    %103 = vector.load %arg3[%c0_119, %c0_120, %c14_121, %c0_122] : memref<1x1x38x8xbf16, #tpu.memory_space<vmem>>, vector<1x1x24x8xbf16>
    %104 = vector.shape_cast %103 : vector<1x1x24x8xbf16> to vector<24x8xbf16>
    %c17 = arith.constant 17 : index
    %c0_123 = arith.constant 0 : index
    %c0_124 = arith.constant 0 : index
    %105 = vector.load %arg5[%c17, %c0_123, %c0_124] : memref<27x8x8xbf16, #tpu.memory_space<vmem>>, vector<1x8x8xbf16>
    %106 = vector.shape_cast %105 : vector<1x8x8xbf16> to vector<8x8xbf16>
    %cst_125 = arith.constant dense<0.000000e+00> : vector<24x8xf32>
    %107 = tpu.matmul %104, %106, %cst_125 {dimension_numbers = #tpu.dot_dimension_numbers<[1], [0], [0], [1], [0, 0, 1, 1], [], []>} : vector<24x8xbf16>, vector<8x8xbf16>, vector<24x8xf32> -> vector<24x8xf32>
    %108 = arith.addf %102, %107 : vector<24x8xf32>
    %c0_126 = arith.constant 0 : index
    %c0_127 = arith.constant 0 : index
    %c0_128 = arith.constant 0 : index
    %c0_129 = arith.constant 0 : index
    %109 = vector.load %arg4[%c0_126, %c0_127, %c0_128, %c0_129] : memref<1x1x38x8xbf16, #tpu.memory_space<vmem>>, vector<1x1x24x8xbf16>
    %110 = vector.shape_cast %109 : vector<1x1x24x8xbf16> to vector<24x8xbf16>
    %c18 = arith.constant 18 : index
    %c0_130 = arith.constant 0 : index
    %c0_131 = arith.constant 0 : index
    %111 = vector.load %arg5[%c18, %c0_130, %c0_131] : memref<27x8x8xbf16, #tpu.memory_space<vmem>>, vector<1x8x8xbf16>
    %112 = vector.shape_cast %111 : vector<1x8x8xbf16> to vector<8x8xbf16>
    %cst_132 = arith.constant dense<0.000000e+00> : vector<24x8xf32>
    %113 = tpu.matmul %110, %112, %cst_132 {dimension_numbers = #tpu.dot_dimension_numbers<[1], [0], [0], [1], [0, 0, 1, 1], [], []>} : vector<24x8xbf16>, vector<8x8xbf16>, vector<24x8xf32> -> vector<24x8xf32>
    %114 = arith.addf %108, %113 : vector<24x8xf32>
    %c0_133 = arith.constant 0 : index
    %c0_134 = arith.constant 0 : index
    %c1_135 = arith.constant 1 : index
    %c0_136 = arith.constant 0 : index
    %115 = vector.load %arg4[%c0_133, %c0_134, %c1_135, %c0_136] : memref<1x1x38x8xbf16, #tpu.memory_space<vmem>>, vector<1x1x24x8xbf16>
    %116 = vector.shape_cast %115 : vector<1x1x24x8xbf16> to vector<24x8xbf16>
    %c19 = arith.constant 19 : index
    %c0_137 = arith.constant 0 : index
    %c0_138 = arith.constant 0 : index
    %117 = vector.load %arg5[%c19, %c0_137, %c0_138] : memref<27x8x8xbf16, #tpu.memory_space<vmem>>, vector<1x8x8xbf16>
    %118 = vector.shape_cast %117 : vector<1x8x8xbf16> to vector<8x8xbf16>
    %cst_139 = arith.constant dense<0.000000e+00> : vector<24x8xf32>
    %119 = tpu.matmul %116, %118, %cst_139 {dimension_numbers = #tpu.dot_dimension_numbers<[1], [0], [0], [1], [0, 0, 1, 1], [], []>} : vector<24x8xbf16>, vector<8x8xbf16>, vector<24x8xf32> -> vector<24x8xf32>
    %120 = arith.addf %114, %119 : vector<24x8xf32>
    %c0_140 = arith.constant 0 : index
    %c0_141 = arith.constant 0 : index
    %c2_142 = arith.constant 2 : index
    %c0_143 = arith.constant 0 : index
    %121 = vector.load %arg4[%c0_140, %c0_141, %c2_142, %c0_143] : memref<1x1x38x8xbf16, #tpu.memory_space<vmem>>, vector<1x1x24x8xbf16>
    %122 = vector.shape_cast %121 : vector<1x1x24x8xbf16> to vector<24x8xbf16>
    %c20 = arith.constant 20 : index
    %c0_144 = arith.constant 0 : index
    %c0_145 = arith.constant 0 : index
    %123 = vector.load %arg5[%c20, %c0_144, %c0_145] : memref<27x8x8xbf16, #tpu.memory_space<vmem>>, vector<1x8x8xbf16>
    %124 = vector.shape_cast %123 : vector<1x8x8xbf16> to vector<8x8xbf16>
    %cst_146 = arith.constant dense<0.000000e+00> : vector<24x8xf32>
    %125 = tpu.matmul %122, %124, %cst_146 {dimension_numbers = #tpu.dot_dimension_numbers<[1], [0], [0], [1], [0, 0, 1, 1], [], []>} : vector<24x8xbf16>, vector<8x8xbf16>, vector<24x8xf32> -> vector<24x8xf32>
    %126 = arith.addf %120, %125 : vector<24x8xf32>
    %c0_147 = arith.constant 0 : index
    %c0_148 = arith.constant 0 : index
    %c6_149 = arith.constant 6 : index
    %c0_150 = arith.constant 0 : index
    %127 = vector.load %arg4[%c0_147, %c0_148, %c6_149, %c0_150] : memref<1x1x38x8xbf16, #tpu.memory_space<vmem>>, vector<1x1x24x8xbf16>
    %128 = vector.shape_cast %127 : vector<1x1x24x8xbf16> to vector<24x8xbf16>
    %c21 = arith.constant 21 : index
    %c0_151 = arith.constant 0 : index
    %c0_152 = arith.constant 0 : index
    %129 = vector.load %arg5[%c21, %c0_151, %c0_152] : memref<27x8x8xbf16, #tpu.memory_space<vmem>>, vector<1x8x8xbf16>
    %130 = vector.shape_cast %129 : vector<1x8x8xbf16> to vector<8x8xbf16>
    %cst_153 = arith.constant dense<0.000000e+00> : vector<24x8xf32>
    %131 = tpu.matmul %128, %130, %cst_153 {dimension_numbers = #tpu.dot_dimension_numbers<[1], [0], [0], [1], [0, 0, 1, 1], [], []>} : vector<24x8xbf16>, vector<8x8xbf16>, vector<24x8xf32> -> vector<24x8xf32>
    %132 = arith.addf %126, %131 : vector<24x8xf32>
    %c0_154 = arith.constant 0 : index
    %c0_155 = arith.constant 0 : index
    %c7_156 = arith.constant 7 : index
    %c0_157 = arith.constant 0 : index
    %133 = vector.load %arg4[%c0_154, %c0_155, %c7_156, %c0_157] : memref<1x1x38x8xbf16, #tpu.memory_space<vmem>>, vector<1x1x24x8xbf16>
    %134 = vector.shape_cast %133 : vector<1x1x24x8xbf16> to vector<24x8xbf16>
    %c22 = arith.constant 22 : index
    %c0_158 = arith.constant 0 : index
    %c0_159 = arith.constant 0 : index
    %135 = vector.load %arg5[%c22, %c0_158, %c0_159] : memref<27x8x8xbf16, #tpu.memory_space<vmem>>, vector<1x8x8xbf16>
    %136 = vector.shape_cast %135 : vector<1x8x8xbf16> to vector<8x8xbf16>
    %cst_160 = arith.constant dense<0.000000e+00> : vector<24x8xf32>
    %137 = tpu.matmul %134, %136, %cst_160 {dimension_numbers = #tpu.dot_dimension_numbers<[1], [0], [0], [1], [0, 0, 1, 1], [], []>} : vector<24x8xbf16>, vector<8x8xbf16>, vector<24x8xf32> -> vector<24x8xf32>
    %138 = arith.addf %132, %137 : vector<24x8xf32>
    %c0_161 = arith.constant 0 : index
    %c0_162 = arith.constant 0 : index
    %c8_163 = arith.constant 8 : index
    %c0_164 = arith.constant 0 : index
    %139 = vector.load %arg4[%c0_161, %c0_162, %c8_163, %c0_164] : memref<1x1x38x8xbf16, #tpu.memory_space<vmem>>, vector<1x1x24x8xbf16>
    %140 = vector.shape_cast %139 : vector<1x1x24x8xbf16> to vector<24x8xbf16>
    %c23 = arith.constant 23 : index
    %c0_165 = arith.constant 0 : index
    %c0_166 = arith.constant 0 : index
    %141 = vector.load %arg5[%c23, %c0_165, %c0_166] : memref<27x8x8xbf16, #tpu.memory_space<vmem>>, vector<1x8x8xbf16>
    %142 = vector.shape_cast %141 : vector<1x8x8xbf16> to vector<8x8xbf16>
    %cst_167 = arith.constant dense<0.000000e+00> : vector<24x8xf32>
    %143 = tpu.matmul %140, %142, %cst_167 {dimension_numbers = #tpu.dot_dimension_numbers<[1], [0], [0], [1], [0, 0, 1, 1], [], []>} : vector<24x8xbf16>, vector<8x8xbf16>, vector<24x8xf32> -> vector<24x8xf32>
    %144 = arith.addf %138, %143 : vector<24x8xf32>
    %c0_168 = arith.constant 0 : index
    %c0_169 = arith.constant 0 : index
    %c12_170 = arith.constant 12 : index
    %c0_171 = arith.constant 0 : index
    %145 = vector.load %arg4[%c0_168, %c0_169, %c12_170, %c0_171] : memref<1x1x38x8xbf16, #tpu.memory_space<vmem>>, vector<1x1x24x8xbf16>
    %146 = vector.shape_cast %145 : vector<1x1x24x8xbf16> to vector<24x8xbf16>
    %c24 = arith.constant 24 : index
    %c0_172 = arith.constant 0 : index
    %c0_173 = arith.constant 0 : index
    %147 = vector.load %arg5[%c24, %c0_172, %c0_173] : memref<27x8x8xbf16, #tpu.memory_space<vmem>>, vector<1x8x8xbf16>
    %148 = vector.shape_cast %147 : vector<1x8x8xbf16> to vector<8x8xbf16>
    %cst_174 = arith.constant dense<0.000000e+00> : vector<24x8xf32>
    %149 = tpu.matmul %146, %148, %cst_174 {dimension_numbers = #tpu.dot_dimension_numbers<[1], [0], [0], [1], [0, 0, 1, 1], [], []>} : vector<24x8xbf16>, vector<8x8xbf16>, vector<24x8xf32> -> vector<24x8xf32>
    %150 = arith.addf %144, %149 : vector<24x8xf32>
    %c0_175 = arith.constant 0 : index
    %c0_176 = arith.constant 0 : index
    %c13_177 = arith.constant 13 : index
    %c0_178 = arith.constant 0 : index
    %151 = vector.load %arg4[%c0_175, %c0_176, %c13_177, %c0_178] : memref<1x1x38x8xbf16, #tpu.memory_space<vmem>>, vector<1x1x24x8xbf16>
    %152 = vector.shape_cast %151 : vector<1x1x24x8xbf16> to vector<24x8xbf16>
    %c25 = arith.constant 25 : index
    %c0_179 = arith.constant 0 : index
    %c0_180 = arith.constant 0 : index
    %153 = vector.load %arg5[%c25, %c0_179, %c0_180] : memref<27x8x8xbf16, #tpu.memory_space<vmem>>, vector<1x8x8xbf16>
    %154 = vector.shape_cast %153 : vector<1x8x8xbf16> to vector<8x8xbf16>
    %cst_181 = arith.constant dense<0.000000e+00> : vector<24x8xf32>
    %155 = tpu.matmul %152, %154, %cst_181 {dimension_numbers = #tpu.dot_dimension_numbers<[1], [0], [0], [1], [0, 0, 1, 1], [], []>} : vector<24x8xbf16>, vector<8x8xbf16>, vector<24x8xf32> -> vector<24x8xf32>
    %156 = arith.addf %150, %155 : vector<24x8xf32>
    %c0_182 = arith.constant 0 : index
    %c0_183 = arith.constant 0 : index
    %c14_184 = arith.constant 14 : index
    %c0_185 = arith.constant 0 : index
    %157 = vector.load %arg4[%c0_182, %c0_183, %c14_184, %c0_185] : memref<1x1x38x8xbf16, #tpu.memory_space<vmem>>, vector<1x1x24x8xbf16>
    %158 = vector.shape_cast %157 : vector<1x1x24x8xbf16> to vector<24x8xbf16>
    %c26 = arith.constant 26 : index
    %c0_186 = arith.constant 0 : index
    %c0_187 = arith.constant 0 : index
    %159 = vector.load %arg5[%c26, %c0_186, %c0_187] : memref<27x8x8xbf16, #tpu.memory_space<vmem>>, vector<1x8x8xbf16>
    %160 = vector.shape_cast %159 : vector<1x8x8xbf16> to vector<8x8xbf16>
    %cst_188 = arith.constant dense<0.000000e+00> : vector<24x8xf32>
    %161 = tpu.matmul %158, %160, %cst_188 {dimension_numbers = #tpu.dot_dimension_numbers<[1], [0], [0], [1], [0, 0, 1, 1], [], []>} : vector<24x8xbf16>, vector<8x8xbf16>, vector<24x8xf32> -> vector<24x8xf32>
    %162 = arith.addf %156, %161 : vector<24x8xf32>
    %c0_189 = arith.constant 0 : index
    %c0_190 = arith.constant 0 : index
    %163 = vector.load %arg6[%c0_189, %c0_190] : memref<1x8xf32, #tpu.memory_space<vmem>>, vector<1x8xf32>
    %164 = vector.broadcast %163 : vector<1x8xf32> to vector<24x8xf32>
    %165 = arith.addf %162, %164 : vector<24x8xf32>
    %cst_191 = arith.constant 0.000000e+00 : f32
    %166 = vector.broadcast %cst_191 : f32 to vector<24x8xf32>
    %167 = arith.maximumf %165, %166 : vector<24x8xf32>
    %c0_192 = arith.constant 0 : index
    %c0_193 = arith.constant 0 : index
    %c0_194 = arith.constant 0 : index
    %c0_195 = arith.constant 0 : index
    %168 = vector.load %arg7[%c0_192, %c0_193, %c0_194, %c0_195] : memref<1x1x24x8xbf16, #tpu.memory_space<vmem>>, vector<1x1x24x8xbf16>
    %169 = vector.shape_cast %168 : vector<1x1x24x8xbf16> to vector<24x8xbf16>
    %170 = arith.extf %169 : vector<24x8xbf16> to vector<24x8xf32>
    %171 = arith.addf %167, %170 : vector<24x8xf32>
    %172 = tpu.iota {dimensions = array<i32: 0>} : vector<24x1xi32>
    %c6_i32 = arith.constant 6 : i32
    %c0_i32 = arith.constant 0 : i32
    %173 = arith.cmpi eq, %c6_i32, %c0_i32 : i32
    %c1_i32 = arith.constant 1 : i32
    %174 = arith.select %173, %c1_i32, %c6_i32 : i32
    %175 = vector.broadcast %174 : i32 to vector<24x1xi32>
    %176 = arith.remsi %172, %175 : vector<24x1xi32>
    %c0_i32_196 = arith.constant 0 : i32
    %177 = vector.broadcast %c0_i32_196 : i32 to vector<24x1xi32>
    %178 = arith.cmpi ne, %176, %177 : vector<24x1xi32>
    %c0_i32_197 = arith.constant 0 : i32
    %179 = vector.broadcast %c0_i32_197 : i32 to vector<24x1xi32>
    %180 = arith.cmpi slt, %176, %179 : vector<24x1xi32>
    %c0_i32_198 = arith.constant 0 : i32
    %181 = arith.cmpi slt, %174, %c0_i32_198 : i32
    %182 = vector.broadcast %181 : i1 to vector<24x1xi1>
    %183 = vector.broadcast %182 : vector<24x1xi1> to vector<24x1xi1>
    %184 = arith.xori %180, %183 : vector<24x1xi1>
    %185 = arith.andi %184, %178 : vector<24x1xi1>
    %186 = vector.broadcast %174 : i32 to vector<24x1xi32>
    %187 = arith.addi %176, %186 : vector<24x1xi32>
    %188 = arith.select %185, %187, %176 : vector<24x1xi1>, vector<24x1xi32>
    %c1_i32_199 = arith.constant 1 : i32
    %189 = vector.broadcast %c1_i32_199 : i32 to vector<24x1xi32>
    %190 = arith.cmpi sge, %188, %189 : vector<24x1xi32>
    %c4_i32 = arith.constant 4 : i32
    %191 = vector.broadcast %c4_i32 : i32 to vector<24x1xi32>
    %192 = arith.cmpi sle, %188, %191 : vector<24x1xi32>
    %193 = arith.andi %190, %192 : vector<24x1xi1>
    %cst_200 = arith.constant 0.000000e+00 : f32
    %194 = vector.shape_cast %193 : vector<24x1xi1> to vector<24x1xi1>
    %195 = vector.broadcast %194 : vector<24x1xi1> to vector<24x8xi1>
    %196 = vector.broadcast %cst_200 : f32 to vector<24x8xf32>
    %197 = arith.select %195, %171, %196 : vector<24x8xi1>, vector<24x8xf32>
    %198 = arith.truncf %197 : vector<24x8xf32> to vector<24x8xbf16>
    %c0_201 = arith.constant 0 : index
    %c0_202 = arith.constant 0 : index
    %c0_203 = arith.constant 0 : index
    %c0_204 = arith.constant 0 : index
    %199 = vector.load %arg8[%c0_201, %c0_202, %c0_203, %c0_204] : memref<1x1x24x8xbf16, #tpu.memory_space<vmem>>, vector<1x1x24x8xbf16>
    %200 = vector.shape_cast %199 : vector<1x1x24x8xbf16> to vector<24x8xbf16>
    %201 = vector.shape_cast %198 : vector<24x8xbf16> to vector<1x1x24x8xbf16>
    tpu.vector_store %arg8[%c0_201, %c0_202, %c0_203, %c0_204], %201 {strides = array<i32>} : memref<1x1x24x8xbf16, #tpu.memory_space<vmem>>, vector<1x1x24x8xbf16>,
    return
  }
  func.func @transform_0(%arg0: i32, %arg1: i32) -> (i32, i32, i32, i32) {
    %c0_i32 = arith.constant 0 : i32
    %0 = arith.addi %arg1, %c0_i32 : i32
    %c0_i32_0 = arith.constant 0 : i32
    %c0_i32_1 = arith.constant 0 : i32
    %c0_i32_2 = arith.constant 0 : i32
    return %arg0, %0, %c0_i32_0, %c0_i32_1 : i32, i32, i32, i32
  }
  func.func @transform_1(%arg0: i32, %arg1: i32) -> (i32, i32, i32, i32) {
    %c1_i32 = arith.constant 1 : i32
    %0 = arith.addi %arg1, %c1_i32 : i32
    %c0_i32 = arith.constant 0 : i32
    %c0_i32_0 = arith.constant 0 : i32
    %c0_i32_1 = arith.constant 0 : i32
    return %arg0, %0, %c0_i32, %c0_i32_0 : i32, i32, i32, i32
  }
  func.func @transform_2(%arg0: i32, %arg1: i32) -> (i32, i32, i32, i32) {
    %c2_i32 = arith.constant 2 : i32
    %0 = arith.addi %arg1, %c2_i32 : i32
    %c0_i32 = arith.constant 0 : i32
    %c0_i32_0 = arith.constant 0 : i32
    %c0_i32_1 = arith.constant 0 : i32
    return %arg0, %0, %c0_i32, %c0_i32_0 : i32, i32, i32, i32
  }
  func.func @transform_3(%arg0: i32, %arg1: i32) -> (i32, i32, i32) {
    %c0_i32 = arith.constant 0 : i32
    %c0_i32_0 = arith.constant 0 : i32
    %c0_i32_1 = arith.constant 0 : i32
    %c0_i32_2 = arith.constant 0 : i32
    return %c0_i32, %c0_i32_0, %c0_i32_1 : i32, i32, i32
  }
  func.func @transform_4(%arg0: i32, %arg1: i32) -> (i32, i32) {
    %c0_i32 = arith.constant 0 : i32
    %c0_i32_0 = arith.constant 0 : i32
    %c0_i32_1 = arith.constant 0 : i32
    return %c0_i32, %c0_i32_0 : i32, i32
  }
  func.func @transform_5(%arg0: i32, %arg1: i32) -> (i32, i32, i32, i32) {
    %c0_i32 = arith.constant 0 : i32
    %c0_i32_0 = arith.constant 0 : i32
    %c0_i32_1 = arith.constant 0 : i32
    return %arg0, %arg1, %c0_i32, %c0_i32_0 : i32, i32, i32, i32
  }
  func.func @transform_6(%arg0: i32, %arg1: i32) -> (i32, i32, i32, i32) {
    %c0_i32 = arith.constant 0 : i32
    %c0_i32_0 = arith.constant 0 : i32
    %c0_i32_1 = arith.constant 0 : i32
    return %arg0, %arg1, %c0_i32, %c0_i32_0 : i32, i32, i32, i32
  }
}

</mosaic_0001>

<llo_original>
// kernel: downblock_forward.3
$region0: #{downblock_forward.3}
  #allocation0 [shape = 'u32[]', space=smem, size = 0x4, offset = 0x4, fixed_abs, tag = 'smem constant byte address 0x4 - core index']
  #allocation1 [shape = 'u32[72,128]{1,0:T(1,128)}', space=vmem, size = 0x9000, scoped, tag = 'internal scratch']
  %s0 = inlined_call_operand.vmem [shape: bf16[128,108], index: 0, kind: input, shape index: {}]
  %s1 = inlined_call_operand.vmem [shape: bf16[108,8], index: 1, kind: input, shape index: {}]
  %s2 = inlined_call_operand.vmem [shape: f32[1,8], index: 2, kind: input, shape index: {}]
  %s3 = inlined_call_operand.vmem [shape: bf16[128,8], index: 3, kind: output, shape index: {}]
  %s4 = sld [smem:[#allocation0]]
  $region45: #{downblock_forward.3} parent=0
    _
  %s6 = ssub.s32 1, %s4
  %s7 = scalar_select 0, %s6, %s4
  loop: start=0, step=1, limit=4
  $region2: #{downblock_forward.3} parent=0 // loop_pre_header
    _
  $region3: #{downblock_forward.3} parent=0 // loop_header
    %s9 = sphi 0, %s13
    %p10 = scmp.ge.s32.totalorder %s9, 4
    %s19 = sphi 0, %s21
    %s22 = sphi 0, %s19
    %s23 = sphi 0, %s22
    %s39 = sphi 0, %s23
    %s43 = sphi 0, %s43
    %s45 = sphi 0, %s43
    %s46 = sphi 0, %s45
    %s60 = sphi 0, %s46
    %s64 = sphi 0, %s64
    %s66 = sphi 0, %s64
    %s67 = sphi 0, %s66
    %s81 = sphi 0, %s67
    %s87 = sphi 0, %s89
    %s90 = sphi 0, %s87
    %s91 = sphi 0, %s90
    %s107 = sphi 0, %s91
  $region4: #{downblock_forward.3} parent=0 // loop_header_branch
    %12 = sbr.rel (%p10) target = $region8
  $region5: #{downblock_forward.3} parent=0 // loop_body
    %s14 = ssub.s32 %s9, 1
    %s15 = ssub.s32 %s9, 2
    %s16 = sadd.s32 %s9, 1
    %s17 = ssub.s32 %s9, %s16
    %p18 = scmp.eq.s32.totalorder %s17, 0
    %s20 = sadd.s32 %s19, 1
    %s21 = scalar_select %p18, %s19, %s20
    %p24 = pneg %p18
    %p25 = scmp.eq.s32.totalorder %s9, 1
    %p26 = por %p24, %p25
    %p27 = scmp.ne.s32.totalorder %s19, %s22
    %p28 = scmp.eq.s32.totalorder %s9, 0
    %p29 = por %p27, %p28
    %p30 = scmp.ne.s32.totalorder %s19, %s22
    %p31 = scmp.eq.s32.totalorder %s14, 1
    %p32 = por %p30, %p31
    %p33 = scmp.ne.s32.totalorder %s22, %s23
    %p34 = scmp.eq.s32.totalorder %s14, 0
    %p35 = por %p33, %p34
    %p36 = scmp.ne.s32.totalorder %s22, %s23
    %p37 = scmp.eq.s32.totalorder %s15, 1
    %p38 = por %p36, %p37
    %p40 = scmp.ne.s32.totalorder %s23, %s39
    %p41 = scmp.eq.s32.totalorder %s15, 0
    %p42 = por %p40, %p41
    %s44 = sadd.s32 %s43, 1
    %p47 = scmp.eq.s32.totalorder %s9, 1
    %p48 = scmp.ne.s32.totalorder %s43, %s45
    %p49 = scmp.eq.s32.totalorder %s9, 0
    %p50 = por %p48, %p49
    %p51 = scmp.ne.s32.totalorder %s43, %s45
    %p52 = scmp.eq.s32.totalorder %s14, 1
    %p53 = por %p51, %p52
    %p54 = scmp.ne.s32.totalorder %s45, %s46
    %p55 = scmp.eq.s32.totalorder %s14, 0
    %p56 = por %p54, %p55
    %p57 = scmp.ne.s32.totalorder %s45, %s46
    %p58 = scmp.eq.s32.totalorder %s15, 1
    %p59 = por %p57, %p58
    %p61 = scmp.ne.s32.totalorder %s46, %s60
    %p62 = scmp.eq.s32.totalorder %s15, 0
    %p63 = por %p61, %p62
    %s65 = sadd.s32 %s64, 1
    %p68 = scmp.eq.s32.totalorder %s9, 1
    %p69 = scmp.ne.s32.totalorder %s64, %s66
    %p70 = scmp.eq.s32.totalorder %s9, 0
    %p71 = por %p69, %p70
    %p72 = scmp.ne.s32.totalorder %s64, %s66
    %p73 = scmp.eq.s32.totalorder %s14, 1
    %p74 = por %p72, %p73
    %p75 = scmp.ne.s32.totalorder %s66, %s67
    %p76 = scmp.eq.s32.totalorder %s14, 0
    %p77 = por %p75, %p76
    %p78 = scmp.ne.s32.totalorder %s66, %s67
    %p79 = scmp.eq.s32.totalorder %s15, 1
    %p80 = por %p78, %p79
    %p82 = scmp.ne.s32.totalorder %s67, %s81
    %p83 = scmp.eq.s32.totalorder %s15, 0
    %p84 = por %p82, %p83
    %s85 = ssub.s32 %s9, %s16
    %p86 = scmp.eq.s32.totalorder %s85, 0
    %s88 = sadd.s32 %s87, 1
    %s89 = scalar_select %p86, %s87, %s88
    %p92 = pneg %p86
    %p93 = scmp.eq.s32.totalorder %s9, 1
    %p94 = por %p92, %p93
    %p95 = scmp.ne.s32.totalorder %s87, %s90
    %p96 = scmp.eq.s32.totalorder %s9, 0
    %p97 = por %p95, %p96
    %p98 = scmp.ne.s32.totalorder %s87, %s90
    %p99 = scmp.eq.s32.totalorder %s14, 1
    %p100 = por %p98, %p99
    %p101 = scmp.ne.s32.totalorder %s90, %s91
    %p102 = scmp.eq.s32.totalorder %s14, 0
    %p103 = por %p101, %p102
    %p104 = scmp.ne.s32.totalorder %s90, %s91
    %p105 = scmp.eq.s32.totalorder %s15, 1
    %p106 = por %p104, %p105
    %p108 = scmp.ne.s32.totalorder %s91, %s107
    %p109 = scmp.eq.s32.totalorder %s15, 0
    %p110 = por %p108, %p109
    %p111 = scmp.le.s32.totalorder 1, %s9
    %p112 = scmp.lt.s32.totalorder %s9, 3
    %p113 = pnand %p111, %p112
    %p114 = pneg %p113
    // Predicated region
    $region9: #{downblock_forward.3} parent=5 // pred_check
      _
    $region10: #{downblock_forward.3} parent=5 // pred_check_branch
      %116 = sbr.rel (%p113) target = $region12
    $region11: #{downblock_forward.3} parent=5 // pred_region
      %s117 = ssub.s32 %s9, 1
      // Predicated region
      $region13: #{downblock_forward.3} parent=11 // pred_check
        %p118 = pneg %p56
      $region14: #{downblock_forward.3} parent=11 // pred_check_branch
        %120 = sbr.rel (%p118) target = $region16
      $region15: #{downblock_forward.3} parent=11 // pred_region
        _
      $region16: #{downblock_forward.3} parent=11 // pred_fallthru
        _
      // Predicated region
      $region17: #{downblock_forward.3} parent=11 // pred_check
        %p121 = pneg %p77
      $region18: #{downblock_forward.3} parent=11 // pred_check_branch
        %123 = sbr.rel (%p121) target = $region20
      $region19: #{downblock_forward.3} parent=11 // pred_region
        _
      $region20: #{downblock_forward.3} parent=11 // pred_fallthru
        _
    $region12: #{downblock_forward.3} parent=5 // pred_fallthru
      _
    %p124 = scmp.lt.s32.totalorder %s9, 2
    // Predicated region
    $region21: #{downblock_forward.3} parent=5 // pred_check
      %p125 = pneg %p124
    $region22: #{downblock_forward.3} parent=5 // pred_check_branch
      %127 = sbr.rel (%p125) target = $region24
    $region23: #{downblock_forward.3} parent=5 // pred_region
      // Predicated region
      $region25: #{downblock_forward.3} parent=23 // pred_check
        %p128 = pneg %p29
      $region26: #{downblock_forward.3} parent=23 // pred_check_branch
        %130 = sbr.rel (%p128) target = $region28
      $region27: #{downblock_forward.3} parent=23 // pred_region
        %s131 = smul.u32 8, %s9
        %p132 = scmp.lt.s32.totalorder %s131, 15
        %s133 = scalar_select %p132, %s131, 15
        %s134 = smul.addr %s133, 4
        %s135 = scalar_lea.vmem %s0, %s134
        %s136 = smul.u32 8, %s9
      $region28: #{downblock_forward.3} parent=23 // pred_fallthru
        _
    $region24: #{downblock_forward.3} parent=5 // pred_fallthru
      _
    %p137 = scmp.le.s32.totalorder 1, %s9
    %p138 = scmp.lt.s32.totalorder %s9, 3
    %p139 = pnand %p137, %p138
    %p140 = pneg %p139
    // Predicated region
    $region29: #{downblock_forward.3} parent=5 // pred_check
      _
    $region30: #{downblock_forward.3} parent=5 // pred_check_branch
      %142 = sbr.rel (%p139) target = $region32
    $region31: #{downblock_forward.3} parent=5 // pred_region
      %s143 = ssub.s32 %s9, 1
      %s144 = smul.u32 8, %s14
      %p145 = scmp.lt.s32.totalorder %s144, 15
      %s146 = scalar_select %p145, %s144, 15
      %s147 = smul.addr %s146, 4
      %s148 = scalar_lea.vmem %s0, %s147
      %p149 = pneg %p35
      %p150 = pneg %p32
      %p151 = pneg %p56
      %p152 = pneg %p53
      %p153 = pneg %p77
      %p154 = pneg %p74
      %p155 = pneg %p103
      %p156 = pneg %p100
      %s157 = smul.u32 8, %s14
      %p158 = scmp.lt.s32.totalorder %s157, 15
      %s159 = scalar_select %p158, %s157, 15
      %s160 = smul.addr %s159, 4
      %s161 = scalar_lea.vmem %s3, %s160
      %s162 = smul.u32 8, %s14
      %p163 = scmp.lt.s32.totalorder %s162, 15
      %s164 = scalar_select %p163, %s162, 15
      %s165 = smul.addr %s164, 4
      %s166 = scalar_lea.vmem %s0, %s165
      %s167 = smul.u32 8, %s14
      %s168 = smul.u32 8, %s14
      %p169 = scmp.lt.s32.totalorder %s168, 15
      %s170 = scalar_select %p169, %s168, 15
      %s171 = smul.addr %s170, 4
      %s172 = scalar_lea.vmem %s3, %s171
      %s173 = smul.u32 8, %s14
      %v175 = vld [vmem:[%s166] sm:$0xf]
      %v176 = vld [vmem:[%s166 + $0x4] sm:$0xf]
      %v177 = vld [vmem:[%s166 + $0x8] sm:$0xf]
      %v178 = vld [vmem:[%s166 + $0xc] sm:$0xf]
      %v179 = vld [vmem:[%s166 + $0x10] sm:$0xf]
      %v180 = vld [vmem:[%s166 + $0x14] sm:$0xf]
      %v181 = vld [vmem:[%s166 + $0x18] sm:$0xf]
      %v182 = vld [vmem:[%s166 + $0x1c] sm:$0xf]
      %v183 = vld [vmem:[%s1] sm:$0xf]
      %v184 = vld [vmem:[%s1 + $0x4] sm:$0xf]
      %v185 = vld [vmem:[%s1 + $0x8] sm:$0xf]
      %v186 = vld [vmem:[%s1 + $0xc] sm:$0xf]
      %v187 = vld [vmem:[%s1 + $0x10] sm:$0xf]
      %v188 = vld [vmem:[%s1 + $0x14] sm:$0xf]
      %v189 = vld [vmem:[%s1 + $0x18] sm:$0xf]
      %v190 = vld [vmem:[%s1 + $0x1c] sm:$0xf]
      %v191 = vld [vmem:[%s1 + $0x20] sm:$0xf]
      %v192 = vld [vmem:[%s1 + $0x24] sm:$0xf]
      %v193 = vld [vmem:[%s1 + $0x28] sm:$0xf]
      %v194 = vld [vmem:[%s1 + $0x2c] sm:$0xf]
      %v195 = vld [vmem:[%s1 + $0x30] sm:$0xf]
      %v196 = vld [vmem:[%s1 + $0x34] sm:$0x3]
      %v197 = vld [vmem:[%s2] sm:$0x1]
      %v199 = vperm.slane %v197, 0
      %v209 = vunpack.c.l.b16 %v175
      %v210 = vunpack.c.l.b16 %v176
      %v211 = vunpack.c.l.b16 %v177
      %v212 = vunpack.c.l.b16 %v178
      %v213 = vunpack.c.l.b16 %v179
      %v214 = vunpack.c.l.b16 %v180
      %v215 = vunpack.c.l.b16 %v181
      %v216 = vunpack.c.l.b16 %v182
      %v217 = vpack.c.b16 %v210, %v209
      %v218 = vpack.c.b16 %v212, %v211
      %v219 = vpack.c.b16 %v214, %v213
      %v220 = vpack.c.b16 %v216, %v215
      %v235 = vunpack.c.l.b16 %v183
      %v236 = vunpack.c.l.b16 %v184
      %v237 = vunpack.c.l.b16 %v185
      %v238 = vunpack.c.l.b16 %v186
      %v239 = vunpack.c.l.b16 %v187
      %v240 = vunpack.c.l.b16 %v188
      %v241 = vunpack.c.l.b16 %v189
      %v242 = vunpack.c.l.b16 %v190
      %v243 = vunpack.c.l.b16 %v191
      %v244 = vunpack.c.l.b16 %v192
      %v245 = vunpack.c.l.b16 %v193
      %v246 = vunpack.c.l.b16 %v194
      %v247 = vunpack.c.l.b16 %v195
      %v248 = vunpack.c.l.b16 %v196
      %v249 = vpack.c.b16 %v236, %v235
      %v250 = vpack.c.b16 %v238, %v237
      %v251 = vpack.c.b16 %v240, %v239
      %v252 = vpack.c.b16 %v242, %v241
      %v253 = vpack.c.b16 %v244, %v243
      %v254 = vpack.c.b16 %v246, %v245
      %v255 = vpack.c.b16 %v248, %v247
      %vm262 = vcmask 883712
      %v264 = vsel %vm262, %v217, 0
      %v267 = vsel %vm262, %v218, 0
      %v270 = vsel %vm262, %v219, 0
      %v273 = vsel %vm262, %v220, 0
      %vm275 = vcmask 1045504
      %v277 = vsel %vm275, %v255, 0
      %279 = vmatpush.bf16.msra.mxu0 0
      %280 = vmatpush.bf16.msra.mxu0 %v277
      %281 = vmatpush.bf16.msra.mxu0 %v254
      %282 = vmatpush.bf16.msra.mxu0 %v253
      %283 = vmatpush.bf16.msra.mxu0 %v252
      %284 = vmatpush.bf16.msra.mxu0 %v251
      %285 = vmatpush.bf16.msra.mxu0 %v250
      %286 = vmatpush.bf16.msra.mxu0 %v249
      %287 = vmatmul.bf16.gmra.mxu0 %v264
      %v288 = vpop.f32.mrf.mxu0
      %v289 = vadd.f32 %v199, %v288
      %v290 = vpop.f32.mrf.mxu0
      %v291 = vadd.f32 %v199, %v290
      %292 = vmatmul.bf16.gmra.mxu0 %v267
      %v293 = vpop.f32.mrf.mxu0
      %v294 = vadd.f32 %v199, %v293
      %v295 = vpop.f32.mrf.mxu0
      %v296 = vadd.f32 %v199, %v295
      %297 = vmatmul.bf16.gmra.mxu0 %v270
      %v298 = vpop.f32.mrf.mxu0
      %v299 = vadd.f32 %v199, %v298
      %v300 = vpop.f32.mrf.mxu0
      %v301 = vadd.f32 %v199, %v300
      %302 = vmatmul.bf16.gmra.mxu0 %v273
      %v303 = vpop.f32.mrf.mxu0
      %v304 = vadd.f32 %v199, %v303
      %v305 = vpop.f32.mrf.mxu0
      %v306 = vadd.f32 %v199, %v305
      %307 = vdwg.mxu0
      %v308 = vmax.f32 %v289, 0.0
      %v309 = vmax.f32 %v291, 0.0
      %v310 = vmax.f32 %v294, 0.0
      %v311 = vmax.f32 %v296, 0.0
      %v312 = vmax.f32 %v299, 0.0
      %v313 = vmax.f32 %v301, 0.0
      %v314 = vmax.f32 %v304, 0.0
      %v315 = vmax.f32 %v306, 0.0
      %v316 = vpack.c.bf16 %v308, %v308
      %v317 = vpack.c.bf16 %v309, %v309
      %v318 = vpack.c.bf16 %v310, %v310
      %v319 = vpack.c.bf16 %v311, %v311
      %v320 = vpack.c.bf16 %v312, %v312
      %v321 = vpack.c.bf16 %v313, %v313
      %v322 = vpack.c.bf16 %v314, %v314
      %v323 = vpack.c.bf16 %v315, %v315
      %vm324 = vcmask 60416
      %325 = vst.msk [vmem:[%s172] sm:$0xf] %vm324, %v316
      %326 = vst.msk [vmem:[%s172 + $0x4] sm:$0xf] %vm324, %v317
      %327 = vst.msk [vmem:[%s172 + $0x8] sm:$0xf] %vm324, %v318
      %328 = vst.msk [vmem:[%s172 + $0xc] sm:$0xf] %vm324, %v319
      %329 = vst.msk [vmem:[%s172 + $0x10] sm:$0xf] %vm324, %v320
      %330 = vst.msk [vmem:[%s172 + $0x14] sm:$0xf] %vm324, %v321
      %331 = vst.msk [vmem:[%s172 + $0x18] sm:$0xf] %vm324, %v322
      %332 = vst.msk [vmem:[%s172 + $0x1c] sm:$0xf] %vm324, %v323
      %s333 = smul.u32 8, %s14
      %p334 = scmp.lt.s32.totalorder %s333, 15
      %s335 = scalar_select %p334, %s333, 15
      %s336 = smul.addr %s335, 4
      %s337 = scalar_lea.vmem %s3, %s336
      // Predicated region
      $region33: #{downblock_forward.3} parent=31 // pred_check
        %p338 = pneg %p100
      $region34: #{downblock_forward.3} parent=31 // pred_check_branch
        %340 = sbr.rel (%p338) target = $region36
      $region35: #{downblock_forward.3} parent=31 // pred_region
        %s341 = smul.u32 8, %s14
      $region36: #{downblock_forward.3} parent=31 // pred_fallthru
        _
    $region32: #{downblock_forward.3} parent=5 // pred_fallthru
      _
    %p342 = scmp.le.s32.totalorder 2, %s9
    // Predicated region
    $region37: #{downblock_forward.3} parent=5 // pred_check
      %p343 = pneg %p342
    $region38: #{downblock_forward.3} parent=5 // pred_check_branch
      %345 = sbr.rel (%p343) target = $region40
    $region39: #{downblock_forward.3} parent=5 // pred_region
      %s346 = ssub.s32 %s9, 2
      // Predicated region
      $region41: #{downblock_forward.3} parent=39 // pred_check
        %p347 = pneg %p106
      $region42: #{downblock_forward.3} parent=39 // pred_check_branch
        %349 = sbr.rel (%p347) target = $region44
      $region43: #{downblock_forward.3} parent=39 // pred_region
        %s350 = smul.u32 8, %s15
        %p351 = scmp.lt.s32.totalorder %s350, 15
        %s352 = scalar_select %p351, %s350, 15
        %s353 = smul.addr %s352, 4
        %s354 = scalar_lea.vmem %s3, %s353
      $region44: #{downblock_forward.3} parent=39 // pred_fallthru
        _
    $region40: #{downblock_forward.3} parent=5 // pred_fallthru
      _
  $region6: #{downblock_forward.3} parent=0 // loop_footer
    %s13 = sadd.s32 1, %s9
  $region7: #{downblock_forward.3} parent=0 // loop_footer_branch
    %8 = sbr.rel target = $region3
  $region8: #{downblock_forward.3} parent=0 // loop_exit
    _

// kernel: downblock_forward.4
$region0: #{downblock_forward.4}
  #allocation0 [shape = 'u32[]', space=smem, size = 0x4, offset = 0x4, fixed_abs, tag = 'smem constant byte address 0x4 - core index']
  #allocation1 [shape = 'u32[72,128]{1,0:T(1,128)}', space=vmem, size = 0x9000, scoped, tag = 'internal scratch']
  %s0 = inlined_call_operand.vmem [shape: bf16[2,6,38,8], index: 0, kind: input, shape index: {}, may-alias: {0,1,2}]
  %s1 = inlined_call_operand.vmem [shape: bf16[2,6,38,8], index: 1, kind: input, shape index: {}, may-alias: {0,1,2}]
  %s2 = inlined_call_operand.vmem [shape: bf16[2,6,38,8], index: 2, kind: input, shape index: {}, may-alias: {0,1,2}]
  %s3 = inlined_call_operand.vmem [shape: bf16[27,8,8], index: 3, kind: input, shape index: {}]
  %s4 = inlined_call_operand.vmem [shape: f32[1,8], index: 4, kind: input, shape index: {}]
  %s5 = inlined_call_operand.vmem [shape: bf16[2,4,24,8], index: 5, kind: output, shape index: {}]
  %s6 = sld [smem:[#allocation0]]
  $region53: #{downblock_forward.4} parent=0
    _
  %s8 = ssub.s32 1, %s6
  %s9 = scalar_select 0, %s8, %s6
  loop: start=0, step=1, limit=10
  $region2: #{downblock_forward.4} parent=0 // loop_pre_header
    _
  $region3: #{downblock_forward.4} parent=0 // loop_header
    %s11 = sphi 0, %s15
    %p12 = scmp.ge.s32.totalorder %s11, 10
    %s18 = sphi 0, %s30
    %s19 = sphi 0, %s26
    %s20 = sphi 0, %s18
    %s21 = sphi 0, %s19
    %s22 = sphi 0, %s20
    %s23 = sphi 0, %s21
    %s35 = sphi 0, %s37
    %s38 = sphi 0, %s35
    %s39 = sphi 0, %s38
    %s55 = sphi 0, %s39
    %s65 = sphi 0, %s67
    %s68 = sphi 0, %s65
    %s69 = sphi 0, %s68
    %s85 = sphi 0, %s69
    %s95 = sphi 0, %s97
    %s98 = sphi 0, %s95
    %s99 = sphi 0, %s98
    %s115 = sphi 0, %s99
    %s119 = sphi 0, %s119
    %s121 = sphi 0, %s119
    %s122 = sphi 0, %s121
    %s136 = sphi 0, %s122
    %s140 = sphi 0, %s140
    %s142 = sphi 0, %s140
    %s143 = sphi 0, %s142
    %s157 = sphi 0, %s143
    %s165 = sphi 0, %s167
    %s168 = sphi 0, %s165
    %s169 = sphi 0, %s168
    %s185 = sphi 0, %s169
  $region4: #{downblock_forward.4} parent=0 // loop_header_branch
    %14 = sbr.rel (%p12) target = $region8
  $region5: #{downblock_forward.4} parent=0 // loop_body
    %s16 = ssub.s32 %s11, 1
    %s17 = ssub.s32 %s11, 2
    %s24 = sadd.s32 1, %s19
    %p25 = scmp.ge.s32.totalorder %s24, 4
    %s26 = scalar_select %p25, 0, %s24
    %s27 = sadd.s32 1, %s18
    %s28 = scalar_select %p25, %s27, %s18
    %p29 = scmp.ge.s32.totalorder %s28, 2
    %s30 = scalar_select %p29, 0, %s28
    %s31 = ssub.s32 %s18, %s30
    %s32 = ssub.s32 %s19, %s26
    %s33 = sor.u32 %s31, %s32
    %p34 = scmp.eq.s32.totalorder %s33, 0
    %s36 = sadd.s32 %s35, 1
    %s37 = scalar_select %p34, %s35, %s36
    %p40 = pneg %p34
    %p41 = scmp.eq.s32.totalorder %s11, 7
    %p42 = por %p40, %p41
    %p43 = scmp.ne.s32.totalorder %s35, %s38
    %p44 = scmp.eq.s32.totalorder %s11, 0
    %p45 = por %p43, %p44
    %p46 = scmp.ne.s32.totalorder %s35, %s38
    %p47 = scmp.eq.s32.totalorder %s16, 7
    %p48 = por %p46, %p47
    %p49 = scmp.ne.s32.totalorder %s38, %s39
    %p50 = scmp.eq.s32.totalorder %s16, 0
    %p51 = por %p49, %p50
    %p52 = scmp.ne.s32.totalorder %s38, %s39
    %p53 = scmp.eq.s32.totalorder %s17, 7
    %p54 = por %p52, %p53
    %p56 = scmp.ne.s32.totalorder %s39, %s55
    %p57 = scmp.eq.s32.totalorder %s17, 0
    %p58 = por %p56, %p57
    %s59 = sadd.s32 %s19, 1
    %s60 = sadd.s32 %s26, 1
    %s61 = ssub.s32 %s18, %s30
    %s62 = ssub.s32 %s59, %s60
    %s63 = sor.u32 %s61, %s62
    %p64 = scmp.eq.s32.totalorder %s63, 0
    %s66 = sadd.s32 %s65, 1
    %s67 = scalar_select %p64, %s65, %s66
    %p70 = pneg %p64
    %p71 = scmp.eq.s32.totalorder %s11, 7
    %p72 = por %p70, %p71
    %p73 = scmp.ne.s32.totalorder %s65, %s68
    %p74 = scmp.eq.s32.totalorder %s11, 0
    %p75 = por %p73, %p74
    %p76 = scmp.ne.s32.totalorder %s65, %s68
    %p77 = scmp.eq.s32.totalorder %s16, 7
    %p78 = por %p76, %p77
    %p79 = scmp.ne.s32.totalorder %s68, %s69
    %p80 = scmp.eq.s32.totalorder %s16, 0
    %p81 = por %p79, %p80
    %p82 = scmp.ne.s32.totalorder %s68, %s69
    %p83 = scmp.eq.s32.totalorder %s17, 7
    %p84 = por %p82, %p83
    %p86 = scmp.ne.s32.totalorder %s69, %s85
    %p87 = scmp.eq.s32.totalorder %s17, 0
    %p88 = por %p86, %p87
    %s89 = sadd.s32 %s19, 2
    %s90 = sadd.s32 %s26, 2
    %s91 = ssub.s32 %s18, %s30
    %s92 = ssub.s32 %s89, %s90
    %s93 = sor.u32 %s91, %s92
    %p94 = scmp.eq.s32.totalorder %s93, 0
    %s96 = sadd.s32 %s95, 1
    %s97 = scalar_select %p94, %s95, %s96
    %p100 = pneg %p94
    %p101 = scmp.eq.s32.totalorder %s11, 7
    %p102 = por %p100, %p101
    %p103 = scmp.ne.s32.totalorder %s95, %s98
    %p104 = scmp.eq.s32.totalorder %s11, 0
    %p105 = por %p103, %p104
    %p106 = scmp.ne.s32.totalorder %s95, %s98
    %p107 = scmp.eq.s32.totalorder %s16, 7
    %p108 = por %p106, %p107
    %p109 = scmp.ne.s32.totalorder %s98, %s99
    %p110 = scmp.eq.s32.totalorder %s16, 0
    %p111 = por %p109, %p110
    %p112 = scmp.ne.s32.totalorder %s98, %s99
    %p113 = scmp.eq.s32.totalorder %s17, 7
    %p114 = por %p112, %p113
    %p116 = scmp.ne.s32.totalorder %s99, %s115
    %p117 = scmp.eq.s32.totalorder %s17, 0
    %p118 = por %p116, %p117
    %s120 = sadd.s32 %s119, 1
    %p123 = scmp.eq.s32.totalorder %s11, 7
    %p124 = scmp.ne.s32.totalorder %s119, %s121
    %p125 = scmp.eq.s32.totalorder %s11, 0
    %p126 = por %p124, %p125
    %p127 = scmp.ne.s32.totalorder %s119, %s121
    %p128 = scmp.eq.s32.totalorder %s16, 7
    %p129 = por %p127, %p128
    %p130 = scmp.ne.s32.totalorder %s121, %s122
    %p131 = scmp.eq.s32.totalorder %s16, 0
    %p132 = por %p130, %p131
    %p133 = scmp.ne.s32.totalorder %s121, %s122
    %p134 = scmp.eq.s32.totalorder %s17, 7
    %p135 = por %p133, %p134
    %p137 = scmp.ne.s32.totalorder %s122, %s136
    %p138 = scmp.eq.s32.totalorder %s17, 0
    %p139 = por %p137, %p138
    %s141 = sadd.s32 %s140, 1
    %p144 = scmp.eq.s32.totalorder %s11, 7
    %p145 = scmp.ne.s32.totalorder %s140, %s142
    %p146 = scmp.eq.s32.totalorder %s11, 0
    %p147 = por %p145, %p146
    %p148 = scmp.ne.s32.totalorder %s140, %s142
    %p149 = scmp.eq.s32.totalorder %s16, 7
    %p150 = por %p148, %p149
    %p151 = scmp.ne.s32.totalorder %s142, %s143
    %p152 = scmp.eq.s32.totalorder %s16, 0
    %p153 = por %p151, %p152
    %p154 = scmp.ne.s32.totalorder %s142, %s143
    %p155 = scmp.eq.s32.totalorder %s17, 7
    %p156 = por %p154, %p155
    %p158 = scmp.ne.s32.totalorder %s143, %s157
    %p159 = scmp.eq.s32.totalorder %s17, 0
    %p160 = por %p158, %p159
    %s161 = ssub.s32 %s18, %s30
    %s162 = ssub.s32 %s19, %s26
    %s163 = sor.u32 %s161, %s162
    %p164 = scmp.eq.s32.totalorder %s163, 0
    %s166 = sadd.s32 %s165, 1
    %s167 = scalar_select %p164, %s165, %s166
    %p170 = pneg %p164
    %p171 = scmp.eq.s32.totalorder %s11, 7
    %p172 = por %p170, %p171
    %p173 = scmp.ne.s32.totalorder %s165, %s168
    %p174 = scmp.eq.s32.totalorder %s11, 0
    %p175 = por %p173, %p174
    %p176 = scmp.ne.s32.totalorder %s165, %s168
    %p177 = scmp.eq.s32.totalorder %s16, 7
    %p178 = por %p176, %p177
    %p179 = scmp.ne.s32.totalorder %s168, %s169
    %p180 = scmp.eq.s32.totalorder %s16, 0
    %p181 = por %p179, %p180
    %p182 = scmp.ne.s32.totalorder %s168, %s169
    %p183 = scmp.eq.s32.totalorder %s17, 7
    %p184 = por %p182, %p183
    %p186 = scmp.ne.s32.totalorder %s169, %s185
    %p187 = scmp.eq.s32.totalorder %s17, 0
    %p188 = por %p186, %p187
    %p189 = scmp.le.s32.totalorder 1, %s11
    %p190 = scmp.lt.s32.totalorder %s11, 9
    %p191 = pnand %p189, %p190
    %p192 = pneg %p191
    // Predicated region
    $region9: #{downblock_forward.4} parent=5 // pred_check
      _
    $region10: #{downblock_forward.4} parent=5 // pred_check_branch
      %194 = sbr.rel (%p191) target = $region12
    $region11: #{downblock_forward.4} parent=5 // pred_region
      %s195 = ssub.s32 %s11, 1
      // Predicated region
      $region13: #{downblock_forward.4} parent=11 // pred_check
        %p196 = pneg %p132
      $region14: #{downblock_forward.4} parent=11 // pred_check_branch
        %198 = sbr.rel (%p196) target = $region16
      $region15: #{downblock_forward.4} parent=11 // pred_region
        _
      $region16: #{downblock_forward.4} parent=11 // pred_fallthru
        _
      // Predicated region
      $region17: #{downblock_forward.4} parent=11 // pred_check
        %p199 = pneg %p153
      $region18: #{downblock_forward.4} parent=11 // pred_check_branch
        %201 = sbr.rel (%p199) target = $region20
      $region19: #{downblock_forward.4} parent=11 // pred_region
        _
      $region20: #{downblock_forward.4} parent=11 // pred_fallthru
        _
    $region12: #{downblock_forward.4} parent=5 // pred_fallthru
      _
    %p202 = scmp.lt.s32.totalorder %s11, 8
    // Predicated region
    $region21: #{downblock_forward.4} parent=5 // pred_check
      %p203 = pneg %p202
    $region22: #{downblock_forward.4} parent=5 // pred_check_branch
      %205 = sbr.rel (%p203) target = $region24
    $region23: #{downblock_forward.4} parent=5 // pred_region
      // Predicated region
      $region25: #{downblock_forward.4} parent=23 // pred_check
        %p206 = pneg %p45
      $region26: #{downblock_forward.4} parent=23 // pred_check_branch
        %208 = sbr.rel (%p206) target = $region28
      $region27: #{downblock_forward.4} parent=23 // pred_region
        %p209 = scmp.lt.s32.totalorder %s18, 1
        %s210 = scalar_select %p209, %s18, 1
        %p211 = scmp.lt.s32.totalorder %s19, 5
        %s212 = scalar_select %p211, %s19, 5
        %s213 = smul.addr %s212, 5
        %s214 = smul.addr %s210, 30
        %s215 = sadd.s32 %s213, %s214
        %s216 = smul.addr %s215, 4
        %s217 = scalar_lea.vmem %s0, %s216
      $region28: #{downblock_forward.4} parent=23 // pred_fallthru
        _
      // Predicated region
      $region29: #{downblock_forward.4} parent=23 // pred_check
        %p218 = pneg %p75
      $region30: #{downblock_forward.4} parent=23 // pred_check_branch
        %220 = sbr.rel (%p218) target = $region32
      $region31: #{downblock_forward.4} parent=23 // pred_region
        %s221 = sadd.s32 %s19, 1
        %p222 = scmp.lt.s32.totalorder %s18, 1
        %s223 = scalar_select %p222, %s18, 1
        %p224 = scmp.lt.s32.totalorder %s221, 5
        %s225 = scalar_select %p224, %s221, 5
        %s226 = smul.addr %s225, 5
        %s227 = smul.addr %s223, 30
        %s228 = sadd.s32 %s226, %s227
        %s229 = smul.addr %s228, 4
        %s230 = scalar_lea.vmem %s1, %s229
        %s231 = sadd.s32 %s19, 1
      $region32: #{downblock_forward.4} parent=23 // pred_fallthru
        _
      // Predicated region
      $region33: #{downblock_forward.4} parent=23 // pred_check
        %p232 = pneg %p105
      $region34: #{downblock_forward.4} parent=23 // pred_check_branch
        %234 = sbr.rel (%p232) target = $region36
      $region35: #{downblock_forward.4} parent=23 // pred_region
        %s235 = sadd.s32 %s19, 2
        %p236 = scmp.lt.s32.totalorder %s18, 1
        %s237 = scalar_select %p236, %s18, 1
        %p238 = scmp.lt.s32.totalorder %s235, 5
        %s239 = scalar_select %p238, %s235, 5
        %s240 = smul.addr %s239, 5
        %s241 = smul.addr %s237, 30
        %s242 = sadd.s32 %s240, %s241
        %s243 = smul.addr %s242, 4
        %s244 = scalar_lea.vmem %s2, %s243
        %s245 = sadd.s32 %s19, 2
      $region36: #{downblock_forward.4} parent=23 // pred_fallthru
        _
    $region24: #{downblock_forward.4} parent=5 // pred_fallthru
      _
    %p246 = scmp.le.s32.totalorder 1, %s11
    %p247 = scmp.lt.s32.totalorder %s11, 9
    %p248 = pnand %p246, %p247
    %p249 = pneg %p248
    // Predicated region
    $region37: #{downblock_forward.4} parent=5 // pred_check
      _
    $region38: #{downblock_forward.4} parent=5 // pred_check_branch
      %251 = sbr.rel (%p248) target = $region40
    $region39: #{downblock_forward.4} parent=5 // pred_region
      %s252 = ssub.s32 %s11, 1
      %p253 = scmp.lt.s32.totalorder %s20, 1
      %s254 = scalar_select %p253, %s20, 1
      %p255 = scmp.lt.s32.totalorder %s21, 5
      %s256 = scalar_select %p255, %s21, 5
      %s257 = smul.addr %s256, 5
      %s258 = smul.addr %s254, 30
      %s259 = sadd.s32 %s257, %s258
      %s260 = smul.addr %s259, 4
      %s261 = scalar_lea.vmem %s0, %s260
      %p262 = pneg %p51
      %p263 = pneg %p48
      %s264 = sadd.s32 %s21, 1
      %p265 = scmp.lt.s32.totalorder %s20, 1
      %s266 = scalar_select %p265, %s20, 1
      %p267 = scmp.lt.s32.totalorder %s264, 5
      %s268 = scalar_select %p267, %s264, 5
      %s269 = smul.addr %s268, 5
      %s270 = smul.addr %s266, 30
      %s271 = sadd.s32 %s269, %s270
      %s272 = smul.addr %s271, 4
      %s273 = scalar_lea.vmem %s1, %s272
      %p274 = pneg %p81
      %p275 = pneg %p78
      %s276 = sadd.s32 %s21, 2
      %p277 = scmp.lt.s32.totalorder %s20, 1
      %s278 = scalar_select %p277, %s20, 1
      %p279 = scmp.lt.s32.totalorder %s276, 5
      %s280 = scalar_select %p279, %s276, 5
      %s281 = smul.addr %s280, 5
      %s282 = smul.addr %s278, 30
      %s283 = sadd.s32 %s281, %s282
      %s284 = smul.addr %s283, 4
      %s285 = scalar_lea.vmem %s2, %s284
      %p286 = pneg %p111
      %p287 = pneg %p108
      %p288 = pneg %p132
      %p289 = pneg %p129
      %p290 = pneg %p153
      %p291 = pneg %p150
      %p292 = pneg %p181
      %p293 = pneg %p178
      %p294 = scmp.lt.s32.totalorder %s20, 1
      %s295 = scalar_select %p294, %s20, 1
      %p296 = scmp.lt.s32.totalorder %s21, 3
      %s297 = scalar_select %p296, %s21, 3
      %s298 = smul.addr %s297, 3
      %s299 = smul.addr %s295, 12
      %s300 = sadd.s32 %s298, %s299
      %s301 = smul.addr %s300, 4
      %s302 = scalar_lea.vmem %s5, %s301
      %p303 = scmp.lt.s32.totalorder %s20, 1
      %s304 = scalar_select %p303, %s20, 1
      %p305 = scmp.lt.s32.totalorder %s21, 5
      %s306 = scalar_select %p305, %s21, 5
      %s307 = smul.addr %s306, 5
      %s308 = smul.addr %s304, 30
      %s309 = sadd.s32 %s307, %s308
      %s310 = smul.addr %s309, 4
      %s311 = scalar_lea.vmem %s0, %s310
      %s312 = sadd.s32 %s21, 1
      %p313 = scmp.lt.s32.totalorder %s20, 1
      %s314 = scalar_select %p313, %s20, 1
      %p315 = scmp.lt.s32.totalorder %s312, 5
      %s316 = scalar_select %p315, %s312, 5
      %s317 = smul.addr %s316, 5
      %s318 = smul.addr %s314, 30
      %s319 = sadd.s32 %s317, %s318
      %s320 = smul.addr %s319, 4
      %s321 = scalar_lea.vmem %s1, %s320
      %s322 = sadd.s32 %s21, 1
      %s323 = sadd.s32 %s21, 2
      %p324 = scmp.lt.s32.totalorder %s20, 1
      %s325 = scalar_select %p324, %s20, 1
      %p326 = scmp.lt.s32.totalorder %s323, 5
      %s327 = scalar_select %p326, %s323, 5
      %s328 = smul.addr %s327, 5
      %s329 = smul.addr %s325, 30
      %s330 = sadd.s32 %s328, %s329
      %s331 = smul.addr %s330, 4
      %s332 = scalar_lea.vmem %s2, %s331
      %s333 = sadd.s32 %s21, 2
      %p334 = scmp.lt.s32.totalorder %s20, 1
      %s335 = scalar_select %p334, %s20, 1
      %p336 = scmp.lt.s32.totalorder %s21, 3
      %s337 = scalar_select %p336, %s21, 3
      %s338 = smul.addr %s337, 3
      %s339 = smul.addr %s335, 12
      %s340 = sadd.s32 %s338, %s339
      %s341 = smul.addr %s340, 4
      %s342 = scalar_lea.vmem %s5, %s341
      %v344 = vld [vmem:[%s311] sm:$0xf]
      %v345 = vld [vmem:[%s311 + $0x4] sm:$0xf]
      %v346 = vld [vmem:[%s311 + $0x8] sm:$0xf]
      %v347 = vld [vmem:[%s3] sm:$0xf]
      %v348 = vld [vmem:[%s311 + $0xc] sm:$0x1]
      %s349 = scalar_lea.vmem %s3, 4
      %v350 = vld [vmem:[%s349] sm:$0xf]
      %v355 = vunpack.c.l.b16 %v344
      %v356 = vunpack.c.l.b16 %v345
      %v357 = vunpack.c.l.b16 %v346
      %v358 = vunpack.c.l.b16 %v348
      %v359 = vpack.c.b16 %v356, %v355
      %v360 = vpack.c.b16 %v358, %v357
      %vm361 = vsmask.f32 7424
      %v363 = vshrl.u32 %v359, 16
      %v365 = vshll.u32 %v359, 16
      %v367 = vrot.slane %v365, 1
      %v368 = vor.u32 %v363, %v367
      %v370 = vshll.u32 %v360, 16
      %v372 = vrot.slane %v370, 1
      %v373 = vsel %vm361, %v368, %v372
      %v374 = vshrl.u32 %v360, 16
      %v376 = vor.u32 %v374, %v372
      %vm377 = vcmask 64512
      %v379 = vsel %vm377, %v373, 0
      %v382 = vsel %vm377, %v376, 0
      %vm384 = vcmask 1043456
      %v386 = vsel %vm384, %v350, 0
      %388 = vmatpush.bf16.msra.mxu0 0
      %389 = vmatpush.bf16.msra.mxu0 0
      %390 = vmatpush.bf16.msra.mxu0 0
      %391 = vmatpush.bf16.msra.mxu0 0
      %392 = vmatpush.bf16.msra.mxu0 0
      %393 = vmatpush.bf16.msra.mxu0 0
      %394 = vmatpush.bf16.msra.mxu0 0
      %395 = vmatpush.bf16.msra.mxu0 %v386
      %396 = vmatmul.bf16.gmra.mxu0 %v379
      %v397 = vpop.f32.mrf.mxu0
      %v398 = vadd.f32 0.0, %v397
      %v399 = vpop.f32.mrf.mxu0
      %v400 = vadd.f32 0.0, %v399
      %401 = vmatmul.bf16.gmra.mxu0 %v382
      %v402 = vpop.f32.mrf.mxu0
      %v403 = vadd.f32 0.0, %v402
      %v404 = vpop.f32.mrf.mxu0
      %405 = vdwg.mxu0
      %v406 = vpack.c.b16 %v357, %v357
      %v407 = vsel %vm377, %v359, 0
      %v410 = vsel %vm377, %v406, 0
      %v413 = vsel %vm384, %v347, 0
      %415 = vmatpush.bf16.msra.mxu0 0
      %416 = vmatpush.bf16.msra.mxu0 0
      %417 = vmatpush.bf16.msra.mxu0 0
      %418 = vmatpush.bf16.msra.mxu0 0
      %419 = vmatpush.bf16.msra.mxu0 0
      %420 = vmatpush.bf16.msra.mxu0 0
      %421 = vmatpush.bf16.msra.mxu0 0
      %422 = vmatpush.bf16.msra.mxu0 %v413
      %423 = vmatmul.bf16.gmra.mxu0 %v407
      %v424 = vpop.f32.mrf.mxu0
      %v425 = vadd.f32 %v398, %v424
      %v426 = vpop.f32.mrf.mxu0
      %v427 = vadd.f32 %v400, %v426
      %428 = vmatmul.bf16.gmra.mxu0 %v410
      %v429 = vpop.f32.mrf.mxu0
      %v430 = vadd.f32 %v403, %v429
      %v431 = vpop.f32.mrf.mxu0
      %432 = vdwg.mxu0
      %v433 = vld [vmem:[%s311] sm:$0xe]
      %s434 = scalar_lea.vmem %s3, 8
      %v435 = vld [vmem:[%s434] sm:$0xf]
      %v437 = vunpack.c.l.b16 %v433
      %v438 = vpack.c.b16 %v356, %v437
      %vm439 = vcmask 1046528
      %v440 = vrot.slane %v438, 1
      %v441 = vrot.slane %v360, 1
      %v442 = vsel %vm439, %v440, %v441
      %v444 = vsel %vm377, %v442, 0
      %v447 = vsel %vm377, %v441, 0
      %v450 = vsel %vm384, %v435, 0
      %452 = vmatpush.bf16.msra.mxu0 0
      %453 = vmatpush.bf16.msra.mxu0 0
      %454 = vmatpush.bf16.msra.mxu0 0
      %455 = vmatpush.bf16.msra.mxu0 0
      %456 = vmatpush.bf16.msra.mxu0 0
      %457 = vmatpush.bf16.msra.mxu0 0
      %458 = vmatpush.bf16.msra.mxu0 0
      %459 = vmatpush.bf16.msra.mxu0 %v450
      %460 = vmatmul.bf16.gmra.mxu0 %v444
      %v461 = vpop.f32.mrf.mxu0
      %v462 = vadd.f32 0.0, %v461
      %v463 = vpop.f32.mrf.mxu0
      %v464 = vadd.f32 0.0, %v463
      %465 = vmatmul.bf16.gmra.mxu0 %v447
      %v466 = vpop.f32.mrf.mxu0
      %v467 = vadd.f32 0.0, %v466
      %v468 = vpop.f32.mrf.mxu0
      %469 = vdwg.mxu0
      %v470 = vadd.f32 %v425, %v462
      %v471 = vadd.f32 %v427, %v464
      %v472 = vadd.f32 %v430, %v467
      %v473 = vld [vmem:[%s311] sm:$0x8]
      %v474 = vld [vmem:[%s311 + $0xc] sm:$0x7]
      %s475 = scalar_lea.vmem %s3, 12
      %v476 = vld [vmem:[%s475] sm:$0xf]
      %v479 = vunpack.c.l.b16 %v473
      %v480 = vunpack.c.l.b16 %v474
      %v481 = vpack.c.b16 %v356, %v479
      %v482 = vpack.c.b16 %v480, %v357
      %vm483 = vcmask 1044480
      %v484 = vrot.slane %v481, 3
      %v485 = vrot.slane %v482, 3
      %v486 = vsel %vm483, %v484, %v485
      %v488 = vsel %vm377, %v486, 0
      %v491 = vsel %vm377, %v485, 0
      %v494 = vsel %vm384, %v476, 0
      %496 = vmatpush.bf16.msra.mxu0 0
      %497 = vmatpush.bf16.msra.mxu0 0
      %498 = vmatpush.bf16.msra.mxu0 0
      %499 = vmatpush.bf16.msra.mxu0 0
      %500 = vmatpush.bf16.msra.mxu0 0
      %501 = vmatpush.bf16.msra.mxu0 0
      %502 = vmatpush.bf16.msra.mxu0 0
      %503 = vmatpush.bf16.msra.mxu0 %v494
      %504 = vmatmul.bf16.gmra.mxu0 %v488
      %v505 = vpop.f32.mrf.mxu0
      %v506 = vadd.f32 0.0, %v505
      %v507 = vpop.f32.mrf.mxu0
      %v508 = vadd.f32 0.0, %v507
      %509 = vmatmul.bf16.gmra.mxu0 %v491
      %v510 = vpop.f32.mrf.mxu0
      %v511 = vadd.f32 0.0, %v510
      %v512 = vpop.f32.mrf.mxu0
      %513 = vdwg.mxu0
      %v514 = vadd.f32 %v470, %v506
      %v515 = vadd.f32 %v471, %v508
      %v516 = vadd.f32 %v472, %v511
      %v517 = vld [vmem:[%s311 + $0xc] sm:$0xf]
      %s518 = scalar_lea.vmem %s3, 16
      %v519 = vld [vmem:[%s518] sm:$0xf]
      %v521 = vunpack.c.l.b16 %v517
      %v522 = vpack.c.b16 %v521, %v357
      %vm523 = vsmask.f32 4352
      %v525 = vshrl.u32 %v481, 16
      %v527 = vrot.slane %v525, 3
      %v528 = vshll.u32 %v481, 16
      %v530 = vrot.slane %v528, 4
      %v531 = vor.u32 %v527, %v530
      %v533 = vshrl.u32 %v522, 16
      %v535 = vrot.slane %v533, 3
      %v536 = vshll.u32 %v522, 16
      %v538 = vrot.slane %v536, 4
      %v539 = vor.u32 %v535, %v538
      %v540 = vsel %vm523, %v531, %v539
      %v542 = vsel %vm377, %v540, 0
      %v545 = vsel %vm377, %v539, 0
      %v548 = vsel %vm384, %v519, 0
      %550 = vmatpush.bf16.msra.mxu0 0
      %551 = vmatpush.bf16.msra.mxu0 0
      %552 = vmatpush.bf16.msra.mxu0 0
      %553 = vmatpush.bf16.msra.mxu0 0
      %554 = vmatpush.bf16.msra.mxu0 0
      %555 = vmatpush.bf16.msra.mxu0 0
      %556 = vmatpush.bf16.msra.mxu0 0
      %557 = vmatpush.bf16.msra.mxu0 %v548
      %558 = vmatmul.bf16.gmra.mxu0 %v542
      %v559 = vpop.f32.mrf.mxu0
      %v560 = vadd.f32 0.0, %v559
      %v561 = vpop.f32.mrf.mxu0
      %v562 = vadd.f32 0.0, %v561
      %563 = vmatmul.bf16.gmra.mxu0 %v545
      %v564 = vpop.f32.mrf.mxu0
      %v565 = vadd.f32 0.0, %v564
      %v566 = vpop.f32.mrf.mxu0
      %567 = vdwg.mxu0
      %v568 = vadd.f32 %v514, %v560
      %v569 = vadd.f32 %v515, %v562
      %v570 = vadd.f32 %v516, %v565
      %s571 = scalar_lea.vmem %s3, 20
      %v572 = vld [vmem:[%s571] sm:$0xf]
      %v573 = vpack.c.b16 %v357, %v356
      %v574 = vpack.c.b16 %v521, %v521
      %v576 = vsel %vm377, %v573, 0
      %v579 = vsel %vm377, %v574, 0
      %v582 = vsel %vm384, %v572, 0
      %584 = vmatpush.bf16.msra.mxu0 0
      %585 = vmatpush.bf16.msra.mxu0 0
      %586 = vmatpush.bf16.msra.mxu0 0
      %587 = vmatpush.bf16.msra.mxu0 0
      %588 = vmatpush.bf16.msra.mxu0 0
      %589 = vmatpush.bf16.msra.mxu0 0
      %590 = vmatpush.bf16.msra.mxu0 0
      %591 = vmatpush.bf16.msra.mxu0 %v582
      %592 = vmatmul.bf16.gmra.mxu0 %v576
      %v593 = vpop.f32.mrf.mxu0
      %v594 = vadd.f32 0.0, %v593
      %v595 = vpop.f32.mrf.mxu0
      %v596 = vadd.f32 0.0, %v595
      %597 = vmatmul.bf16.gmra.mxu0 %v579
      %v598 = vpop.f32.mrf.mxu0
      %v599 = vadd.f32 0.0, %v598
      %v600 = vpop.f32.mrf.mxu0
      %601 = vdwg.mxu0
      %v602 = vadd.f32 %v568, %v594
      %v603 = vadd.f32 %v569, %v596
      %v604 = vadd.f32 %v570, %v599
      %v605 = vld [vmem:[%s311 + $0x4] sm:$0xc]
      %v606 = vld [vmem:[%s311 + $0x8] sm:$0xf]
      %v607 = vld [vmem:[%s311 + $0xc] sm:$0xf]
      %v608 = vld [vmem:[%s311 + $0x10] sm:$0x3]
      %s609 = scalar_lea.vmem %s3, 24
      %v610 = vld [vmem:[%s609] sm:$0xf]
      %v615 = vunpack.c.l.b16 %v605
      %v616 = vunpack.c.l.b16 %v606
      %v617 = vunpack.c.l.b16 %v607
      %v618 = vunpack.c.l.b16 %v608
      %v619 = vpack.c.b16 %v616, %v615
      %v620 = vpack.c.b16 %v618, %v617
      %vm621 = vcmask 1045504
      %v622 = vrot.slane %v619, 2
      %v623 = vrot.slane %v620, 2
      %v624 = vsel %vm621, %v622, %v623
      %v626 = vsel %vm377, %v624, 0
      %v629 = vsel %vm377, %v623, 0
      %v632 = vsel %vm384, %v610, 0
      %634 = vmatpush.bf16.msra.mxu0 0
      %635 = vmatpush.bf16.msra.mxu0 0
      %636 = vmatpush.bf16.msra.mxu0 0
      %637 = vmatpush.bf16.msra.mxu0 0
      %638 = vmatpush.bf16.msra.mxu0 0
      %639 = vmatpush.bf16.msra.mxu0 0
      %640 = vmatpush.bf16.msra.mxu0 0
      %641 = vmatpush.bf16.msra.mxu0 %v632
      %642 = vmatmul.bf16.gmra.mxu0 %v626
      %v643 = vpop.f32.mrf.mxu0
      %v644 = vadd.f32 0.0, %v643
      %v645 = vpop.f32.mrf.mxu0
      %v646 = vadd.f32 0.0, %v645
      %647 = vmatmul.bf16.gmra.mxu0 %v629
      %v648 = vpop.f32.mrf.mxu0
      %v649 = vadd.f32 0.0, %v648
      %v650 = vpop.f32.mrf.mxu0
      %651 = vdwg.mxu0
      %v652 = vadd.f32 %v602, %v644
      %v653 = vadd.f32 %v603, %v646
      %v654 = vadd.f32 %v604, %v649
      %v655 = vld [vmem:[%s311 + $0x10] sm:$0x7]
      %s656 = scalar_lea.vmem %s3, 28
      %v657 = vld [vmem:[%s656] sm:$0xf]
      %v659 = vunpack.c.l.b16 %v655
      %v660 = vpack.c.b16 %v659, %v617
      %vm661 = vsmask.f32 5376
      %v663 = vshrl.u32 %v619, 16
      %v665 = vrot.slane %v663, 2
      %v666 = vshll.u32 %v619, 16
      %v668 = vrot.slane %v666, 3
      %v669 = vor.u32 %v665, %v668
      %v671 = vshrl.u32 %v660, 16
      %v673 = vrot.slane %v671, 2
      %v674 = vshll.u32 %v660, 16
      %v676 = vrot.slane %v674, 3
      %v677 = vor.u32 %v673, %v676
      %v678 = vsel %vm661, %v669, %v677
      %v680 = vsel %vm377, %v678, 0
      %v683 = vsel %vm377, %v677, 0
      %v686 = vsel %vm384, %v657, 0
      %688 = vmatpush.bf16.msra.mxu0 0
      %689 = vmatpush.bf16.msra.mxu0 0
      %690 = vmatpush.bf16.msra.mxu0 0
      %691 = vmatpush.bf16.msra.mxu0 0
      %692 = vmatpush.bf16.msra.mxu0 0
      %693 = vmatpush.bf16.msra.mxu0 0
      %694 = vmatpush.bf16.msra.mxu0 0
      %695 = vmatpush.bf16.msra.mxu0 %v686
      %696 = vmatmul.bf16.gmra.mxu0 %v680
      %v697 = vpop.f32.mrf.mxu0
      %v698 = vadd.f32 0.0, %v697
      %v699 = vpop.f32.mrf.mxu0
      %v700 = vadd.f32 0.0, %v699
      %701 = vmatmul.bf16.gmra.mxu0 %v683
      %v702 = vpop.f32.mrf.mxu0
      %v703 = vadd.f32 0.0, %v702
      %v704 = vpop.f32.mrf.mxu0
      %705 = vdwg.mxu0
      %v706 = vadd.f32 %v652, %v698
      %v707 = vadd.f32 %v653, %v700
      %v708 = vadd.f32 %v654, %v703
      %v709 = vld [vmem:[%s311 + $0x4] sm:$0x8]
      %s710 = scalar_lea.vmem %s3, 32
      %v711 = vld [vmem:[%s710] sm:$0xf]
      %v713 = vunpack.c.l.b16 %v709
      %v714 = vpack.c.b16 %v616, %v713
      %v715 = vrot.slane %v714, 3
      %v716 = vrot.slane %v660, 3
      %v717 = vsel %vm483, %v715, %v716
      %v719 = vsel %vm377, %v717, 0
      %v722 = vsel %vm377, %v716, 0
      %v725 = vsel %vm384, %v711, 0
      %727 = vmatpush.bf16.msra.mxu0 0
      %728 = vmatpush.bf16.msra.mxu0 0
      %729 = vmatpush.bf16.msra.mxu0 0
      %730 = vmatpush.bf16.msra.mxu0 0
      %731 = vmatpush.bf16.msra.mxu0 0
      %732 = vmatpush.bf16.msra.mxu0 0
      %733 = vmatpush.bf16.msra.mxu0 0
      %734 = vmatpush.bf16.msra.mxu0 %v725
      %735 = vmatmul.bf16.gmra.mxu0 %v719
      %v736 = vpop.f32.mrf.mxu0
      %v737 = vadd.f32 0.0, %v736
      %v738 = vpop.f32.mrf.mxu0
      %v739 = vadd.f32 0.0, %v738
      %740 = vmatmul.bf16.gmra.mxu0 %v722
      %v741 = vpop.f32.mrf.mxu0
      %v742 = vadd.f32 0.0, %v741
      %v743 = vpop.f32.mrf.mxu0
      %744 = vdwg.mxu0
      %v745 = vadd.f32 %v706, %v737
      %v746 = vadd.f32 %v707, %v739
      %v747 = vadd.f32 %v708, %v742
      %v748 = vld [vmem:[%s321] sm:$0xf]
      %v749 = vld [vmem:[%s321 + $0x4] sm:$0xf]
      %v750 = vld [vmem:[%s321 + $0x8] sm:$0xf]
      %s751 = scalar_lea.vmem %s3, 36
      %v752 = vld [vmem:[%s751] sm:$0xf]
      %v756 = vunpack.c.l.b16 %v748
      %v757 = vunpack.c.l.b16 %v749
      %v758 = vunpack.c.l.b16 %v750
      %v759 = vpack.c.b16 %v757, %v756
      %v760 = vpack.c.b16 %v758, %v758
      %v762 = vsel %vm377, %v759, 0
      %v765 = vsel %vm377, %v760, 0
      %v768 = vsel %vm384, %v752, 0
      %770 = vmatpush.bf16.msra.mxu0 0
      %771 = vmatpush.bf16.msra.mxu0 0
      %772 = vmatpush.bf16.msra.mxu0 0
      %773 = vmatpush.bf16.msra.mxu0 0
      %774 = vmatpush.bf16.msra.mxu0 0
      %775 = vmatpush.bf16.msra.mxu0 0
      %776 = vmatpush.bf16.msra.mxu0 0
      %777 = vmatpush.bf16.msra.mxu0 %v768
      %778 = vmatmul.bf16.gmra.mxu0 %v762
      %v779 = vpop.f32.mrf.mxu0
      %v780 = vadd.f32 0.0, %v779
      %v781 = vpop.f32.mrf.mxu0
      %v782 = vadd.f32 0.0, %v781
      %783 = vmatmul.bf16.gmra.mxu0 %v765
      %v784 = vpop.f32.mrf.mxu0
      %v785 = vadd.f32 0.0, %v784
      %v786 = vpop.f32.mrf.mxu0
      %787 = vdwg.mxu0
      %v788 = vadd.f32 %v745, %v780
      %v789 = vadd.f32 %v746, %v782
      %v790 = vadd.f32 %v747, %v785
      %v791 = vld [vmem:[%s321] sm:$0xf]
      %v792 = vld [vmem:[%s321 + $0x4] sm:$0xf]
      %v793 = vld [vmem:[%s321 + $0x8] sm:$0xf]
      %v794 = vld [vmem:[%s321 + $0xc] sm:$0x1]
      %s795 = scalar_lea.vmem %s3, 40
      %v796 = vld [vmem:[%s795] sm:$0xf]
      %v801 = vunpack.c.l.b16 %v791
      %v802 = vunpack.c.l.b16 %v792
      %v803 = vunpack.c.l.b16 %v793
      %v804 = vunpack.c.l.b16 %v794
      %v805 = vpack.c.b16 %v802, %v801
      %v806 = vpack.c.b16 %v804, %v803
      %v808 = vshrl.u32 %v805, 16
      %v810 = vshll.u32 %v805, 16
      %v812 = vrot.slane %v810, 1
      %v813 = vor.u32 %v808, %v812
      %v815 = vshll.u32 %v806, 16
      %v817 = vrot.slane %v815, 1
      %v818 = vsel %vm361, %v813, %v817
      %v819 = vshrl.u32 %v806, 16
      %v821 = vor.u32 %v819, %v817
      %v823 = vsel %vm377, %v818, 0
      %v826 = vsel %vm377, %v821, 0
      %v829 = vsel %vm384, %v796, 0
      %831 = vmatpush.bf16.msra.mxu0 0
      %832 = vmatpush.bf16.msra.mxu0 0
      %833 = vmatpush.bf16.msra.mxu0 0
      %834 = vmatpush.bf16.msra.mxu0 0
      %835 = vmatpush.bf16.msra.mxu0 0
      %836 = vmatpush.bf16.msra.mxu0 0
      %837 = vmatpush.bf16.msra.mxu0 0
      %838 = vmatpush.bf16.msra.mxu0 %v829
      %839 = vmatmul.bf16.gmra.mxu0 %v823
      %v840 = vpop.f32.mrf.mxu0
      %v841 = vadd.f32 0.0, %v840
      %v842 = vpop.f32.mrf.mxu0
      %v843 = vadd.f32 0.0, %v842
      %844 = vmatmul.bf16.gmra.mxu0 %v826
      %v845 = vpop.f32.mrf.mxu0
      %v846 = vadd.f32 0.0, %v845
      %v847 = vpop.f32.mrf.mxu0
      %848 = vdwg.mxu0
      %v849 = vadd.f32 %v788, %v841
      %v850 = vadd.f32 %v789, %v843
      %v851 = vadd.f32 %v790, %v846
      %v852 = vld [vmem:[%s321] sm:$0xe]
      %s853 = scalar_lea.vmem %s3, 44
      %v854 = vld [vmem:[%s853] sm:$0xf]
      %v856 = vunpack.c.l.b16 %v852
      %v857 = vpack.c.b16 %v802, %v856
      %v858 = vrot.slane %v857, 1
      %v859 = vrot.slane %v806, 1
      %v860 = vsel %vm439, %v858, %v859
      %v862 = vsel %vm377, %v860, 0
      %v865 = vsel %vm377, %v859, 0
      %v868 = vsel %vm384, %v854, 0
      %870 = vmatpush.bf16.msra.mxu0 0
      %871 = vmatpush.bf16.msra.mxu0 0
      %872 = vmatpush.bf16.msra.mxu0 0
      %873 = vmatpush.bf16.msra.mxu0 0
      %874 = vmatpush.bf16.msra.mxu0 0
      %875 = vmatpush.bf16.msra.mxu0 0
      %876 = vmatpush.bf16.msra.mxu0 0
      %877 = vmatpush.bf16.msra.mxu0 %v868
      %878 = vmatmul.bf16.gmra.mxu0 %v862
      %v879 = vpop.f32.mrf.mxu0
      %v880 = vadd.f32 0.0, %v879
      %v881 = vpop.f32.mrf.mxu0
      %v882 = vadd.f32 0.0, %v881
      %883 = vmatmul.bf16.gmra.mxu0 %v865
      %v884 = vpop.f32.mrf.mxu0
      %v885 = vadd.f32 0.0, %v884
      %v886 = vpop.f32.mrf.mxu0
      %887 = vdwg.mxu0
      %v888 = vadd.f32 %v849, %v880
      %v889 = vadd.f32 %v850, %v882
      %v890 = vadd.f32 %v851, %v885
      %v891 = vld [vmem:[%s321] sm:$0x8]
      %v892 = vld [vmem:[%s321 + $0xc] sm:$0x7]
      %s893 = scalar_lea.vmem %s3, 48
      %v894 = vld [vmem:[%s893] sm:$0xf]
      %v897 = vunpack.c.l.b16 %v891
      %v898 = vunpack.c.l.b16 %v892
      %v899 = vpack.c.b16 %v802, %v897
      %v900 = vpack.c.b16 %v898, %v803
      %v901 = vrot.slane %v899, 3
      %v902 = vrot.slane %v900, 3
      %v903 = vsel %vm483, %v901, %v902
      %v905 = vsel %vm377, %v903, 0
      %v908 = vsel %vm377, %v902, 0
      %v911 = vsel %vm384, %v894, 0
      %913 = vmatpush.bf16.msra.mxu0 0
      %914 = vmatpush.bf16.msra.mxu0 0
      %915 = vmatpush.bf16.msra.mxu0 0
      %916 = vmatpush.bf16.msra.mxu0 0
      %917 = vmatpush.bf16.msra.mxu0 0
      %918 = vmatpush.bf16.msra.mxu0 0
      %919 = vmatpush.bf16.msra.mxu0 0
      %920 = vmatpush.bf16.msra.mxu0 %v911
      %921 = vmatmul.bf16.gmra.mxu0 %v905
      %v922 = vpop.f32.mrf.mxu0
      %v923 = vadd.f32 0.0, %v922
      %v924 = vpop.f32.mrf.mxu0
      %v925 = vadd.f32 0.0, %v924
      %926 = vmatmul.bf16.gmra.mxu0 %v908
      %v927 = vpop.f32.mrf.mxu0
      %v928 = vadd.f32 0.0, %v927
      %v929 = vpop.f32.mrf.mxu0
      %930 = vdwg.mxu0
      %v931 = vadd.f32 %v888, %v923
      %v932 = vadd.f32 %v889, %v925
      %v933 = vadd.f32 %v890, %v928
      %v934 = vld [vmem:[%s321 + $0xc] sm:$0xf]
      %s935 = scalar_lea.vmem %s3, 52
      %v936 = vld [vmem:[%s935] sm:$0xf]
      %v938 = vunpack.c.l.b16 %v934
      %v939 = vpack.c.b16 %v938, %v803
      %v941 = vshrl.u32 %v899, 16
      %v943 = vrot.slane %v941, 3
      %v944 = vshll.u32 %v899, 16
      %v946 = vrot.slane %v944, 4
      %v947 = vor.u32 %v943, %v946
      %v949 = vshrl.u32 %v939, 16
      %v951 = vrot.slane %v949, 3
      %v952 = vshll.u32 %v939, 16
      %v954 = vrot.slane %v952, 4
      %v955 = vor.u32 %v951, %v954
      %v956 = vsel %vm523, %v947, %v955
      %v958 = vsel %vm377, %v956, 0
      %v961 = vsel %vm377, %v955, 0
      %v964 = vsel %vm384, %v936, 0
      %966 = vmatpush.bf16.msra.mxu0 0
      %967 = vmatpush.bf16.msra.mxu0 0
      %968 = vmatpush.bf16.msra.mxu0 0
      %969 = vmatpush.bf16.msra.mxu0 0
      %970 = vmatpush.bf16.msra.mxu0 0
      %971 = vmatpush.bf16.msra.mxu0 0
      %972 = vmatpush.bf16.msra.mxu0 0
      %973 = vmatpush.bf16.msra.mxu0 %v964
      %974 = vmatmul.bf16.gmra.mxu0 %v958
      %v975 = vpop.f32.mrf.mxu0
      %v976 = vadd.f32 0.0, %v975
      %v977 = vpop.f32.mrf.mxu0
      %v978 = vadd.f32 0.0, %v977
      %979 = vmatmul.bf16.gmra.mxu0 %v961
      %v980 = vpop.f32.mrf.mxu0
      %v981 = vadd.f32 0.0, %v980
      %v982 = vpop.f32.mrf.mxu0
      %983 = vdwg.mxu0
      %v984 = vadd.f32 %v931, %v976
      %v985 = vadd.f32 %v932, %v978
      %v986 = vadd.f32 %v933, %v981
      %s987 = scalar_lea.vmem %s3, 56
      %v988 = vld [vmem:[%s987] sm:$0xf]
      %v989 = vpack.c.b16 %v803, %v802
      %v990 = vpack.c.b16 %v938, %v938
      %v992 = vsel %vm377, %v989, 0
      %v995 = vsel %vm377, %v990, 0
      %v998 = vsel %vm384, %v988, 0
      %1000 = vmatpush.bf16.msra.mxu0 0
      %1001 = vmatpush.bf16.msra.mxu0 0
      %1002 = vmatpush.bf16.msra.mxu0 0
      %1003 = vmatpush.bf16.msra.mxu0 0
      %1004 = vmatpush.bf16.msra.mxu0 0
      %1005 = vmatpush.bf16.msra.mxu0 0
      %1006 = vmatpush.bf16.msra.mxu0 0
      %1007 = vmatpush.bf16.msra.mxu0 %v998
      %1008 = vmatmul.bf16.gmra.mxu0 %v992
      %v1009 = vpop.f32.mrf.mxu0
      %v1010 = vadd.f32 0.0, %v1009
      %v1011 = vpop.f32.mrf.mxu0
      %v1012 = vadd.f32 0.0, %v1011
      %1013 = vmatmul.bf16.gmra.mxu0 %v995
      %v1014 = vpop.f32.mrf.mxu0
      %v1015 = vadd.f32 0.0, %v1014
      %v1016 = vpop.f32.mrf.mxu0
      %1017 = vdwg.mxu0
      %v1018 = vadd.f32 %v984, %v1010
      %v1019 = vadd.f32 %v985, %v1012
      %v1020 = vadd.f32 %v986, %v1015
      %v1021 = vld [vmem:[%s321 + $0x4] sm:$0xc]
      %v1022 = vld [vmem:[%s321 + $0x8] sm:$0xf]
      %v1023 = vld [vmem:[%s321 + $0xc] sm:$0xf]
      %v1024 = vld [vmem:[%s321 + $0x10] sm:$0x3]
      %s1025 = scalar_lea.vmem %s3, 60
      %v1026 = vld [vmem:[%s1025] sm:$0xf]
      %v1031 = vunpack.c.l.b16 %v1021
      %v1032 = vunpack.c.l.b16 %v1022
      %v1033 = vunpack.c.l.b16 %v1023
      %v1034 = vunpack.c.l.b16 %v1024
      %v1035 = vpack.c.b16 %v1032, %v1031
      %v1036 = vpack.c.b16 %v1034, %v1033
      %v1037 = vrot.slane %v1035, 2
      %v1038 = vrot.slane %v1036, 2
      %v1039 = vsel %vm621, %v1037, %v1038
      %v1041 = vsel %vm377, %v1039, 0
      %v1044 = vsel %vm377, %v1038, 0
      %v1047 = vsel %vm384, %v1026, 0
      %1049 = vmatpush.bf16.msra.mxu0 0
      %1050 = vmatpush.bf16.msra.mxu0 0
      %1051 = vmatpush.bf16.msra.mxu0 0
      %1052 = vmatpush.bf16.msra.mxu0 0
      %1053 = vmatpush.bf16.msra.mxu0 0
      %1054 = vmatpush.bf16.msra.mxu0 0
      %1055 = vmatpush.bf16.msra.mxu0 0
      %1056 = vmatpush.bf16.msra.mxu0 %v1047
      %1057 = vmatmul.bf16.gmra.mxu0 %v1041
      %v1058 = vpop.f32.mrf.mxu0
      %v1059 = vadd.f32 0.0, %v1058
      %v1060 = vpop.f32.mrf.mxu0
      %v1061 = vadd.f32 0.0, %v1060
      %1062 = vmatmul.bf16.gmra.mxu0 %v1044
      %v1063 = vpop.f32.mrf.mxu0
      %v1064 = vadd.f32 0.0, %v1063
      %v1065 = vpop.f32.mrf.mxu0
      %1066 = vdwg.mxu0
      %v1067 = vadd.f32 %v1018, %v1059
      %v1068 = vadd.f32 %v1019, %v1061
      %v1069 = vadd.f32 %v1020, %v1064
      %v1070 = vld [vmem:[%s321 + $0x10] sm:$0x7]
      %s1071 = scalar_lea.vmem %s3, 64
      %v1072 = vld [vmem:[%s1071] sm:$0xf]
      %v1074 = vunpack.c.l.b16 %v1070
      %v1075 = vpack.c.b16 %v1074, %v1033
      %v1077 = vshrl.u32 %v1035, 16
      %v1079 = vrot.slane %v1077, 2
      %v1080 = vshll.u32 %v1035, 16
      %v1082 = vrot.slane %v1080, 3
      %v1083 = vor.u32 %v1079, %v1082
      %v1085 = vshrl.u32 %v1075, 16
      %v1087 = vrot.slane %v1085, 2
      %v1088 = vshll.u32 %v1075, 16
      %v1090 = vrot.slane %v1088, 3
      %v1091 = vor.u32 %v1087, %v1090
      %v1092 = vsel %vm661, %v1083, %v1091
      %v1094 = vsel %vm377, %v1092, 0
      %v1097 = vsel %vm377, %v1091, 0
      %v1100 = vsel %vm384, %v1072, 0
      %1102 = vmatpush.bf16.msra.mxu0 0
      %1103 = vmatpush.bf16.msra.mxu0 0
      %1104 = vmatpush.bf16.msra.mxu0 0
      %1105 = vmatpush.bf16.msra.mxu0 0
      %1106 = vmatpush.bf16.msra.mxu0 0
      %1107 = vmatpush.bf16.msra.mxu0 0
      %1108 = vmatpush.bf16.msra.mxu0 0
      %1109 = vmatpush.bf16.msra.mxu0 %v1100
      %1110 = vmatmul.bf16.gmra.mxu0 %v1094
      %v1111 = vpop.f32.mrf.mxu0
      %v1112 = vadd.f32 0.0, %v1111
      %v1113 = vpop.f32.mrf.mxu0
      %v1114 = vadd.f32 0.0, %v1113
      %1115 = vmatmul.bf16.gmra.mxu0 %v1097
      %v1116 = vpop.f32.mrf.mxu0
      %v1117 = vadd.f32 0.0, %v1116
      %v1118 = vpop.f32.mrf.mxu0
      %1119 = vdwg.mxu0
      %v1120 = vadd.f32 %v1067, %v1112
      %v1121 = vadd.f32 %v1068, %v1114
      %v1122 = vadd.f32 %v1069, %v1117
      %v1123 = vld [vmem:[%s321 + $0x4] sm:$0x8]
      %s1124 = scalar_lea.vmem %s3, 68
      %v1125 = vld [vmem:[%s1124] sm:$0xf]
      %v1127 = vunpack.c.l.b16 %v1123
      %v1128 = vpack.c.b16 %v1032, %v1127
      %v1129 = vrot.slane %v1128, 3
      %v1130 = vrot.slane %v1075, 3
      %v1131 = vsel %vm483, %v1129, %v1130
      %v1133 = vsel %vm377, %v1131, 0
      %v1136 = vsel %vm377, %v1130, 0
      %v1139 = vsel %vm384, %v1125, 0
      %1141 = vmatpush.bf16.msra.mxu0 0
      %1142 = vmatpush.bf16.msra.mxu0 0
      %1143 = vmatpush.bf16.msra.mxu0 0
      %1144 = vmatpush.bf16.msra.mxu0 0
      %1145 = vmatpush.bf16.msra.mxu0 0
      %1146 = vmatpush.bf16.msra.mxu0 0
      %1147 = vmatpush.bf16.msra.mxu0 0
      %1148 = vmatpush.bf16.msra.mxu0 %v1139
      %1149 = vmatmul.bf16.gmra.mxu0 %v1133
      %v1150 = vpop.f32.mrf.mxu0
      %v1151 = vadd.f32 0.0, %v1150
      %v1152 = vpop.f32.mrf.mxu0
      %v1153 = vadd.f32 0.0, %v1152
      %1154 = vmatmul.bf16.gmra.mxu0 %v1136
      %v1155 = vpop.f32.mrf.mxu0
      %v1156 = vadd.f32 0.0, %v1155
      %v1157 = vpop.f32.mrf.mxu0
      %1158 = vdwg.mxu0
      %v1159 = vadd.f32 %v1120, %v1151
      %v1160 = vadd.f32 %v1121, %v1153
      %v1161 = vadd.f32 %v1122, %v1156
      %v1162 = vld [vmem:[%s332] sm:$0xf]
      %v1163 = vld [vmem:[%s332 + $0x4] sm:$0xf]
      %v1164 = vld [vmem:[%s332 + $0x8] sm:$0xf]
      %s1165 = scalar_lea.vmem %s3, 72
      %v1166 = vld [vmem:[%s1165] sm:$0xf]
      %v1170 = vunpack.c.l.b16 %v1162
      %v1171 = vunpack.c.l.b16 %v1163
      %v1172 = vunpack.c.l.b16 %v1164
      %v1173 = vpack.c.b16 %v1171, %v1170
      %v1174 = vpack.c.b16 %v1172, %v1172
      %v1176 = vsel %vm377, %v1173, 0
      %v1179 = vsel %vm377, %v1174, 0
      %v1182 = vsel %vm384, %v1166, 0
      %1184 = vmatpush.bf16.msra.mxu0 0
      %1185 = vmatpush.bf16.msra.mxu0 0
      %1186 = vmatpush.bf16.msra.mxu0 0
      %1187 = vmatpush.bf16.msra.mxu0 0
      %1188 = vmatpush.bf16.msra.mxu0 0
      %1189 = vmatpush.bf16.msra.mxu0 0
      %1190 = vmatpush.bf16.msra.mxu0 0
      %1191 = vmatpush.bf16.msra.mxu0 %v1182
      %1192 = vmatmul.bf16.gmra.mxu0 %v1176
      %v1193 = vpop.f32.mrf.mxu0
      %v1194 = vadd.f32 0.0, %v1193
      %v1195 = vpop.f32.mrf.mxu0
      %v1196 = vadd.f32 0.0, %v1195
      %1197 = vmatmul.bf16.gmra.mxu0 %v1179
      %v1198 = vpop.f32.mrf.mxu0
      %v1199 = vadd.f32 0.0, %v1198
      %v1200 = vpop.f32.mrf.mxu0
      %1201 = vdwg.mxu0
      %v1202 = vadd.f32 %v1159, %v1194
      %v1203 = vadd.f32 %v1160, %v1196
      %v1204 = vadd.f32 %v1161, %v1199
      %v1205 = vld [vmem:[%s332] sm:$0xf]
      %v1206 = vld [vmem:[%s332 + $0x4] sm:$0xf]
      %v1207 = vld [vmem:[%s332 + $0x8] sm:$0xf]
      %v1208 = vld [vmem:[%s332 + $0xc] sm:$0x1]
      %s1209 = scalar_lea.vmem %s3, 76
      %v1210 = vld [vmem:[%s1209] sm:$0xf]
      %v1215 = vunpack.c.l.b16 %v1205
      %v1216 = vunpack.c.l.b16 %v1206
      %v1217 = vunpack.c.l.b16 %v1207
      %v1218 = vunpack.c.l.b16 %v1208
      %v1219 = vpack.c.b16 %v1216, %v1215
      %v1220 = vpack.c.b16 %v1218, %v1217
      %v1222 = vshrl.u32 %v1219, 16
      %v1224 = vshll.u32 %v1219, 16
      %v1226 = vrot.slane %v1224, 1
      %v1227 = vor.u32 %v1222, %v1226
      %v1229 = vshll.u32 %v1220, 16
      %v1231 = vrot.slane %v1229, 1
      %v1232 = vsel %vm361, %v1227, %v1231
      %v1233 = vshrl.u32 %v1220, 16
      %v1235 = vor.u32 %v1233, %v1231
      %v1237 = vsel %vm377, %v1232, 0
      %v1240 = vsel %vm377, %v1235, 0
      %v1243 = vsel %vm384, %v1210, 0
      %1245 = vmatpush.bf16.msra.mxu0 0
      %1246 = vmatpush.bf16.msra.mxu0 0
      %1247 = vmatpush.bf16.msra.mxu0 0
      %1248 = vmatpush.bf16.msra.mxu0 0
      %1249 = vmatpush.bf16.msra.mxu0 0
      %1250 = vmatpush.bf16.msra.mxu0 0
      %1251 = vmatpush.bf16.msra.mxu0 0
      %1252 = vmatpush.bf16.msra.mxu0 %v1243
      %1253 = vmatmul.bf16.gmra.mxu0 %v1237
      %v1254 = vpop.f32.mrf.mxu0
      %v1255 = vadd.f32 0.0, %v1254
      %v1256 = vpop.f32.mrf.mxu0
      %v1257 = vadd.f32 0.0, %v1256
      %1258 = vmatmul.bf16.gmra.mxu0 %v1240
      %v1259 = vpop.f32.mrf.mxu0
      %v1260 = vadd.f32 0.0, %v1259
      %v1261 = vpop.f32.mrf.mxu0
      %1262 = vdwg.mxu0
      %v1263 = vadd.f32 %v1202, %v1255
      %v1264 = vadd.f32 %v1203, %v1257
      %v1265 = vadd.f32 %v1204, %v1260
      %v1266 = vld [vmem:[%s332] sm:$0xe]
      %s1267 = scalar_lea.vmem %s3, 80
      %v1268 = vld [vmem:[%s1267] sm:$0xf]
      %v1270 = vunpack.c.l.b16 %v1266
      %v1271 = vpack.c.b16 %v1216, %v1270
      %v1272 = vrot.slane %v1271, 1
      %v1273 = vrot.slane %v1220, 1
      %v1274 = vsel %vm439, %v1272, %v1273
      %v1276 = vsel %vm377, %v1274, 0
      %v1279 = vsel %vm377, %v1273, 0
      %v1282 = vsel %vm384, %v1268, 0
      %1284 = vmatpush.bf16.msra.mxu0 0
      %1285 = vmatpush.bf16.msra.mxu0 0
      %1286 = vmatpush.bf16.msra.mxu0 0
      %1287 = vmatpush.bf16.msra.mxu0 0
      %1288 = vmatpush.bf16.msra.mxu0 0
      %1289 = vmatpush.bf16.msra.mxu0 0
      %1290 = vmatpush.bf16.msra.mxu0 0
      %1291 = vmatpush.bf16.msra.mxu0 %v1282
      %1292 = vmatmul.bf16.gmra.mxu0 %v1276
      %v1293 = vpop.f32.mrf.mxu0
      %v1294 = vadd.f32 0.0, %v1293
      %v1295 = vpop.f32.mrf.mxu0
      %v1296 = vadd.f32 0.0, %v1295
      %1297 = vmatmul.bf16.gmra.mxu0 %v1279
      %v1298 = vpop.f32.mrf.mxu0
      %v1299 = vadd.f32 0.0, %v1298
      %v1300 = vpop.f32.mrf.mxu0
      %1301 = vdwg.mxu0
      %v1302 = vadd.f32 %v1263, %v1294
      %v1303 = vadd.f32 %v1264, %v1296
      %v1304 = vadd.f32 %v1265, %v1299
      %v1305 = vld [vmem:[%s332] sm:$0x8]
      %v1306 = vld [vmem:[%s332 + $0xc] sm:$0x7]
      %s1307 = scalar_lea.vmem %s3, 84
      %v1308 = vld [vmem:[%s1307] sm:$0xf]
      %v1311 = vunpack.c.l.b16 %v1305
      %v1312 = vunpack.c.l.b16 %v1306
      %v1313 = vpack.c.b16 %v1216, %v1311
      %v1314 = vpack.c.b16 %v1312, %v1217
      %v1315 = vrot.slane %v1313, 3
      %v1316 = vrot.slane %v1314, 3
      %v1317 = vsel %vm483, %v1315, %v1316
      %v1319 = vsel %vm377, %v1317, 0
      %v1322 = vsel %vm377, %v1316, 0
      %v1325 = vsel %vm384, %v1308, 0
      %1327 = vmatpush.bf16.msra.mxu0 0
      %1328 = vmatpush.bf16.msra.mxu0 0
      %1329 = vmatpush.bf16.msra.mxu0 0
      %1330 = vmatpush.bf16.msra.mxu0 0
      %1331 = vmatpush.bf16.msra.mxu0 0
      %1332 = vmatpush.bf16.msra.mxu0 0
      %1333 = vmatpush.bf16.msra.mxu0 0
      %1334 = vmatpush.bf16.msra.mxu0 %v1325
      %1335 = vmatmul.bf16.gmra.mxu0 %v1319
      %v1336 = vpop.f32.mrf.mxu0
      %v1337 = vadd.f32 0.0, %v1336
      %v1338 = vpop.f32.mrf.mxu0
      %v1339 = vadd.f32 0.0, %v1338
      %1340 = vmatmul.bf16.gmra.mxu0 %v1322
      %v1341 = vpop.f32.mrf.mxu0
      %v1342 = vadd.f32 0.0, %v1341
      %v1343 = vpop.f32.mrf.mxu0
      %1344 = vdwg.mxu0
      %v1345 = vadd.f32 %v1302, %v1337
      %v1346 = vadd.f32 %v1303, %v1339
      %v1347 = vadd.f32 %v1304, %v1342
      %v1348 = vld [vmem:[%s332 + $0xc] sm:$0xf]
      %s1349 = scalar_lea.vmem %s3, 88
      %v1350 = vld [vmem:[%s1349] sm:$0xf]
      %v1352 = vunpack.c.l.b16 %v1348
      %v1353 = vpack.c.b16 %v1352, %v1217
      %v1355 = vshrl.u32 %v1313, 16
      %v1357 = vrot.slane %v1355, 3
      %v1358 = vshll.u32 %v1313, 16
      %v1360 = vrot.slane %v1358, 4
      %v1361 = vor.u32 %v1357, %v1360
      %v1363 = vshrl.u32 %v1353, 16
      %v1365 = vrot.slane %v1363, 3
      %v1366 = vshll.u32 %v1353, 16
      %v1368 = vrot.slane %v1366, 4
      %v1369 = vor.u32 %v1365, %v1368
      %v1370 = vsel %vm523, %v1361, %v1369
      %v1372 = vsel %vm377, %v1370, 0
      %v1375 = vsel %vm377, %v1369, 0
      %v1378 = vsel %vm384, %v1350, 0
      %1380 = vmatpush.bf16.msra.mxu0 0
      %1381 = vmatpush.bf16.msra.mxu0 0
      %1382 = vmatpush.bf16.msra.mxu0 0
      %1383 = vmatpush.bf16.msra.mxu0 0
      %1384 = vmatpush.bf16.msra.mxu0 0
      %1385 = vmatpush.bf16.msra.mxu0 0
      %1386 = vmatpush.bf16.msra.mxu0 0
      %1387 = vmatpush.bf16.msra.mxu0 %v1378
      %1388 = vmatmul.bf16.gmra.mxu0 %v1372
      %v1389 = vpop.f32.mrf.mxu0
      %v1390 = vadd.f32 0.0, %v1389
      %v1391 = vpop.f32.mrf.mxu0
      %v1392 = vadd.f32 0.0, %v1391
      %1393 = vmatmul.bf16.gmra.mxu0 %v1375
      %v1394 = vpop.f32.mrf.mxu0
      %v1395 = vadd.f32 0.0, %v1394
      %v1396 = vpop.f32.mrf.mxu0
      %1397 = vdwg.mxu0
      %v1398 = vadd.f32 %v1345, %v1390
      %v1399 = vadd.f32 %v1346, %v1392
      %v1400 = vadd.f32 %v1347, %v1395
      %s1401 = scalar_lea.vmem %s3, 92
      %v1402 = vld [vmem:[%s1401] sm:$0xf]
      %v1403 = vpack.c.b16 %v1217, %v1216
      %v1404 = vpack.c.b16 %v1352, %v1352
      %v1406 = vsel %vm377, %v1403, 0
      %v1409 = vsel %vm377, %v1404, 0
      %v1412 = vsel %vm384, %v1402, 0
      %1414 = vmatpush.bf16.msra.mxu0 0
      %1415 = vmatpush.bf16.msra.mxu0 0
      %1416 = vmatpush.bf16.msra.mxu0 0
      %1417 = vmatpush.bf16.msra.mxu0 0
      %1418 = vmatpush.bf16.msra.mxu0 0
      %1419 = vmatpush.bf16.msra.mxu0 0
      %1420 = vmatpush.bf16.msra.mxu0 0
      %1421 = vmatpush.bf16.msra.mxu0 %v1412
      %1422 = vmatmul.bf16.gmra.mxu0 %v1406
      %v1423 = vpop.f32.mrf.mxu0
      %v1424 = vadd.f32 0.0, %v1423
      %v1425 = vpop.f32.mrf.mxu0
      %v1426 = vadd.f32 0.0, %v1425
      %1427 = vmatmul.bf16.gmra.mxu0 %v1409
      %v1428 = vpop.f32.mrf.mxu0
      %v1429 = vadd.f32 0.0, %v1428
      %v1430 = vpop.f32.mrf.mxu0
      %1431 = vdwg.mxu0
      %v1432 = vadd.f32 %v1398, %v1424
      %v1433 = vadd.f32 %v1399, %v1426
      %v1434 = vadd.f32 %v1400, %v1429
      %v1435 = vld [vmem:[%s332 + $0x4] sm:$0xc]
      %v1436 = vld [vmem:[%s332 + $0x8] sm:$0xf]
      %v1437 = vld [vmem:[%s332 + $0xc] sm:$0xf]
      %v1438 = vld [vmem:[%s332 + $0x10] sm:$0x3]
      %s1439 = scalar_lea.vmem %s3, 96
      %v1440 = vld [vmem:[%s1439] sm:$0xf]
      %v1445 = vunpack.c.l.b16 %v1435
      %v1446 = vunpack.c.l.b16 %v1436
      %v1447 = vunpack.c.l.b16 %v1437
      %v1448 = vunpack.c.l.b16 %v1438
      %v1449 = vpack.c.b16 %v1446, %v1445
      %v1450 = vpack.c.b16 %v1448, %v1447
      %v1451 = vrot.slane %v1449, 2
      %v1452 = vrot.slane %v1450, 2
      %v1453 = vsel %vm621, %v1451, %v1452
      %v1455 = vsel %vm377, %v1453, 0
      %v1458 = vsel %vm377, %v1452, 0
      %v1461 = vsel %vm384, %v1440, 0
      %1463 = vmatpush.bf16.msra.mxu0 0
      %1464 = vmatpush.bf16.msra.mxu0 0
      %1465 = vmatpush.bf16.msra.mxu0 0
      %1466 = vmatpush.bf16.msra.mxu0 0
      %1467 = vmatpush.bf16.msra.mxu0 0
      %1468 = vmatpush.bf16.msra.mxu0 0
      %1469 = vmatpush.bf16.msra.mxu0 0
      %1470 = vmatpush.bf16.msra.mxu0 %v1461
      %1471 = vmatmul.bf16.gmra.mxu0 %v1455
      %v1472 = vpop.f32.mrf.mxu0
      %v1473 = vadd.f32 0.0, %v1472
      %v1474 = vpop.f32.mrf.mxu0
      %v1475 = vadd.f32 0.0, %v1474
      %1476 = vmatmul.bf16.gmra.mxu0 %v1458
      %v1477 = vpop.f32.mrf.mxu0
      %v1478 = vadd.f32 0.0, %v1477
      %v1479 = vpop.f32.mrf.mxu0
      %1480 = vdwg.mxu0
      %v1481 = vadd.f32 %v1432, %v1473
      %v1482 = vadd.f32 %v1433, %v1475
      %v1483 = vadd.f32 %v1434, %v1478
      %v1484 = vld [vmem:[%s332 + $0x10] sm:$0x7]
      %s1485 = scalar_lea.vmem %s3, 100
      %v1486 = vld [vmem:[%s1485] sm:$0xf]
      %v1488 = vunpack.c.l.b16 %v1484
      %v1489 = vpack.c.b16 %v1488, %v1447
      %v1491 = vshrl.u32 %v1449, 16
      %v1493 = vrot.slane %v1491, 2
      %v1494 = vshll.u32 %v1449, 16
      %v1496 = vrot.slane %v1494, 3
      %v1497 = vor.u32 %v1493, %v1496
      %v1499 = vshrl.u32 %v1489, 16
      %v1501 = vrot.slane %v1499, 2
      %v1502 = vshll.u32 %v1489, 16
      %v1504 = vrot.slane %v1502, 3
      %v1505 = vor.u32 %v1501, %v1504
      %v1506 = vsel %vm661, %v1497, %v1505
      %v1508 = vsel %vm377, %v1506, 0
      %v1511 = vsel %vm377, %v1505, 0
      %v1514 = vsel %vm384, %v1486, 0
      %1516 = vmatpush.bf16.msra.mxu0 0
      %1517 = vmatpush.bf16.msra.mxu0 0
      %1518 = vmatpush.bf16.msra.mxu0 0
      %1519 = vmatpush.bf16.msra.mxu0 0
      %1520 = vmatpush.bf16.msra.mxu0 0
      %1521 = vmatpush.bf16.msra.mxu0 0
      %1522 = vmatpush.bf16.msra.mxu0 0
      %1523 = vmatpush.bf16.msra.mxu0 %v1514
      %1524 = vmatmul.bf16.gmra.mxu0 %v1508
      %v1525 = vpop.f32.mrf.mxu0
      %v1526 = vadd.f32 0.0, %v1525
      %v1527 = vpop.f32.mrf.mxu0
      %v1528 = vadd.f32 0.0, %v1527
      %1529 = vmatmul.bf16.gmra.mxu0 %v1511
      %v1530 = vpop.f32.mrf.mxu0
      %v1531 = vadd.f32 0.0, %v1530
      %v1532 = vpop.f32.mrf.mxu0
      %1533 = vdwg.mxu0
      %v1534 = vadd.f32 %v1481, %v1526
      %v1535 = vadd.f32 %v1482, %v1528
      %v1536 = vadd.f32 %v1483, %v1531
      %v1537 = vld [vmem:[%s332 + $0x4] sm:$0x8]
      %s1538 = scalar_lea.vmem %s3, 104
      %v1539 = vld [vmem:[%s1538] sm:$0xf]
      %v1541 = vunpack.c.l.b16 %v1537
      %v1542 = vpack.c.b16 %v1446, %v1541
      %v1543 = vrot.slane %v1542, 3
      %v1544 = vrot.slane %v1489, 3
      %v1545 = vsel %vm483, %v1543, %v1544
      %v1547 = vsel %vm377, %v1545, 0
      %v1550 = vsel %vm377, %v1544, 0
      %v1553 = vsel %vm384, %v1539, 0
      %1555 = vmatpush.bf16.msra.mxu0 0
      %1556 = vmatpush.bf16.msra.mxu0 0
      %1557 = vmatpush.bf16.msra.mxu0 0
      %1558 = vmatpush.bf16.msra.mxu0 0
      %1559 = vmatpush.bf16.msra.mxu0 0
      %1560 = vmatpush.bf16.msra.mxu0 0
      %1561 = vmatpush.bf16.msra.mxu0 0
      %1562 = vmatpush.bf16.msra.mxu0 %v1553
      %1563 = vmatmul.bf16.gmra.mxu0 %v1547
      %v1564 = vpop.f32.mrf.mxu0
      %v1565 = vadd.f32 0.0, %v1564
      %v1566 = vpop.f32.mrf.mxu0
      %v1567 = vadd.f32 0.0, %v1566
      %1568 = vmatmul.bf16.gmra.mxu0 %v1550
      %v1569 = vpop.f32.mrf.mxu0
      %v1570 = vadd.f32 0.0, %v1569
      %v1571 = vpop.f32.mrf.mxu0
      %1572 = vdwg.mxu0
      %v1573 = vadd.f32 %v1534, %v1565
      %v1574 = vadd.f32 %v1535, %v1567
      %v1575 = vadd.f32 %v1536, %v1570
      %v1576 = vld [vmem:[%s4] sm:$0x1]
      %v1578 = vperm.slane %v1576, 0
      %v1580 = vadd.f32 %v1573, %v1578
      %v1581 = vadd.f32 %v1574, %v1578
      %v1582 = vadd.f32 %v1575, %v1578
      %v1583 = vmax.f32 %v1580, 0.0
      %v1584 = vmax.f32 %v1581, 0.0
      %v1585 = vmax.f32 %v1582, 0.0
      %v1586 = vlaneseq
      %v1587 = vshrl.u32 %v1586, 7
      %v1588 = vadd.s32 %v1587, 8
      %v1589 = vadd.s32 %v1587, 16
      %vm1590 = vcmp.lt.s32.totalorder %v1587, 0
      %v1591 = vsub.s32 0, %v1587
      %v1592 = vsel %vm1590, %v1591, %v1587
      %v1593 = vand.u32 %v1592, 65535
      %v1594 = vshrl.u32 %v1592, 16
      %v1596 = vmul.u32 %v1593, 43691
      %v1597 = vmul.u32 %v1593, 43690
      %v1598 = vmul.u32 %v1594, 43691
      %v1599 = vmul.u32 %v1594, 43690
      %v1600 = vshll.u32 %v1597, 16
      %v1601 = vshrl.u32 %v1597, 16
      %v1602 = vshll.u32 %v1598, 16
      %v1603 = vshrl.u32 %v1598, 16
      %vm1604 = vc.u32 %v1596, %v1600
      %v1605 = vsel %vm1604, 1, 0
      %v1606 = vadd.s32 %v1596, %v1600
      %v1607 = vadd.s32 %v1599, %v1605
      %vm1608 = vc.u32 %v1606, %v1602
      %v1609 = vsel %vm1608, 1, 0
      %v1610 = vadd.s32 %v1606, %v1602
      %v1611 = vadd.s32 %v1607, %v1609
      %v1612 = vadd.s32 %v1611, %v1601
      %v1613 = vadd.s32 %v1612, %v1603
      %v1614 = vshrl.u32 %v1613, 2
      %v1615 = vmul.u32 %v1614, 6
      %v1616 = vsub.s32 %v1592, %v1615
      %v1617 = vsub.s32 0, %v1616
      %v1618 = vsel %vm1590, %v1617, %v1616
      %vm1619 = vcmp.lt.s32.totalorder %v1588, 0
      %v1620 = vsub.s32 0, %v1588
      %v1621 = vsel %vm1619, %v1620, %v1588
      %v1622 = vand.u32 %v1621, 65535
      %v1623 = vshrl.u32 %v1621, 16
      %v1625 = vmul.u32 %v1622, 43691
      %v1626 = vmul.u32 %v1622, 43690
      %v1627 = vmul.u32 %v1623, 43691
      %v1628 = vmul.u32 %v1623, 43690
      %v1629 = vshll.u32 %v1626, 16
      %v1630 = vshrl.u32 %v1626, 16
      %v1631 = vshll.u32 %v1627, 16
      %v1632 = vshrl.u32 %v1627, 16
      %vm1633 = vc.u32 %v1625, %v1629
      %v1634 = vsel %vm1633, 1, 0
      %v1635 = vadd.s32 %v1625, %v1629
      %v1636 = vadd.s32 %v1628, %v1634
      %vm1637 = vc.u32 %v1635, %v1631
      %v1638 = vsel %vm1637, 1, 0
      %v1639 = vadd.s32 %v1635, %v1631
      %v1640 = vadd.s32 %v1636, %v1638
      %v1641 = vadd.s32 %v1640, %v1630
      %v1642 = vadd.s32 %v1641, %v1632
      %v1643 = vshrl.u32 %v1642, 2
      %v1644 = vmul.u32 %v1643, 6
      %v1645 = vsub.s32 %v1621, %v1644
      %v1646 = vsub.s32 0, %v1645
      %v1647 = vsel %vm1619, %v1646, %v1645
      %vm1648 = vcmp.lt.s32.totalorder %v1589, 0
      %v1649 = vsub.s32 0, %v1589
      %v1650 = vsel %vm1648, %v1649, %v1589
      %v1651 = vand.u32 %v1650, 65535
      %v1652 = vshrl.u32 %v1650, 16
      %v1654 = vmul.u32 %v1651, 43691
      %v1655 = vmul.u32 %v1651, 43690
      %v1656 = vmul.u32 %v1652, 43691
      %v1657 = vmul.u32 %v1652, 43690
      %v1658 = vshll.u32 %v1655, 16
      %v1659 = vshrl.u32 %v1655, 16
      %v1660 = vshll.u32 %v1656, 16
      %v1661 = vshrl.u32 %v1656, 16
      %vm1662 = vc.u32 %v1654, %v1658
      %v1663 = vsel %vm1662, 1, 0
      %v1664 = vadd.s32 %v1654, %v1658
      %v1665 = vadd.s32 %v1657, %v1663
      %vm1666 = vc.u32 %v1664, %v1660
      %v1667 = vsel %vm1666, 1, 0
      %v1668 = vadd.s32 %v1664, %v1660
      %v1669 = vadd.s32 %v1665, %v1667
      %v1670 = vadd.s32 %v1669, %v1659
      %v1671 = vadd.s32 %v1670, %v1661
      %v1672 = vshrl.u32 %v1671, 2
      %v1673 = vmul.u32 %v1672, 6
      %v1674 = vsub.s32 %v1650, %v1673
      %v1675 = vsub.s32 0, %v1674
      %v1676 = vsel %vm1648, %v1675, %v1674
      %vm1677 = vcmp.ne.s32.totalorder %v1618, 0
      %vm1678 = vcmp.ne.s32.totalorder %v1647, 0
      %vm1679 = vcmp.ne.s32.totalorder %v1676, 0
      %vm1680 = vcmp.lt.s32.totalorder %v1618, 0
      %vm1681 = vcmp.lt.s32.totalorder %v1647, 0
      %vm1682 = vcmp.lt.s32.totalorder %v1676, 0
      %vm1683 = vmand %vm1680, %vm1677
      %vm1684 = vmand %vm1681, %vm1678
      %vm1685 = vmand %vm1682, %vm1679
      %v1686 = vadd.s32 %v1618, 6
      %v1687 = vadd.s32 %v1647, 6
      %v1688 = vadd.s32 %v1676, 6
      %v1689 = vsel %vm1683, %v1686, %v1618
      %v1690 = vsel %vm1684, %v1687, %v1647
      %v1691 = vsel %vm1685, %v1688, %v1676
      %vm1692 = vcmp.ge.s32.totalorder %v1689, 1
      %vm1693 = vcmp.ge.s32.totalorder %v1690, 1
      %vm1694 = vcmp.ge.s32.totalorder %v1691, 1
      %vm1695 = vcmp.le.s32.totalorder %v1689, 4
      %vm1696 = vcmp.le.s32.totalorder %v1690, 4
      %vm1697 = vcmp.le.s32.totalorder %v1691, 4
      %vm1698 = vmand %vm1692, %vm1695
      %vm1699 = vmand %vm1693, %vm1696
      %vm1700 = vmand %vm1694, %vm1697
      %v1701 = vsel %vm1698, 1, 0
      %v1702 = vsel %vm1699, 1, 0
      %v1703 = vsel %vm1700, 1, 0
      %vm1704 = vcmp.eq.s32.totalorder %v1701, 1
      %vm1705 = vcmp.eq.s32.totalorder %v1702, 1
      %vm1706 = vcmp.eq.s32.totalorder %v1703, 1
      %v1707 = vsel %vm1704, %v1583, 0.0
      %v1708 = vsel %vm1705, %v1584, 0.0
      %v1709 = vsel %vm1706, %v1585, 0.0
      %v1710 = vpack.c.bf16 %v1707, %v1707
      %v1711 = vpack.c.bf16 %v1708, %v1708
      %v1712 = vpack.c.bf16 %v1709, %v1709
      %vm1713 = vcmask 60416
      %1714 = vst.msk [vmem:[%s342] sm:$0xf] %vm1713, %v1710
      %1715 = vst.msk [vmem:[%s342 + $0x4] sm:$0xf] %vm1713, %v1711
      %1716 = vst.msk [vmem:[%s342 + $0x8] sm:$0xf] %vm1713, %v1712
      %p1717 = scmp.lt.s32.totalorder %s20, 1
      %s1718 = scalar_select %p1717, %s20, 1
      %p1719 = scmp.lt.s32.totalorder %s21, 3
      %s1720 = scalar_select %p1719, %s21, 3
      %s1721 = smul.addr %s1720, 3
      %s1722 = smul.addr %s1718, 12
      %s1723 = sadd.s32 %s1721, %s1722
      %s1724 = smul.addr %s1723, 4
      %s1725 = scalar_lea.vmem %s5, %s1724
      // Predicated region
      $region41: #{downblock_forward.4} parent=39 // pred_check
        %p1726 = pneg %p178
      $region42: #{downblock_forward.4} parent=39 // pred_check_branch
        %1728 = sbr.rel (%p1726) target = $region44
      $region43: #{downblock_forward.4} parent=39 // pred_region
        _
      $region44: #{downblock_forward.4} parent=39 // pred_fallthru
        _
    $region40: #{downblock_forward.4} parent=5 // pred_fallthru
      _
    %p1729 = scmp.le.s32.totalorder 2, %s11
    // Predicated region
    $region45: #{downblock_forward.4} parent=5 // pred_check
      %p1730 = pneg %p1729
    $region46: #{downblock_forward.4} parent=5 // pred_check_branch
      %1732 = sbr.rel (%p1730) target = $region48
    $region47: #{downblock_forward.4} parent=5 // pred_region
      %s1733 = ssub.s32 %s11, 2
      // Predicated region
      $region49: #{downblock_forward.4} parent=47 // pred_check
        %p1734 = pneg %p184
      $region50: #{downblock_forward.4} parent=47 // pred_check_branch
        %1736 = sbr.rel (%p1734) target = $region52
      $region51: #{downblock_forward.4} parent=47 // pred_region
        %p1737 = scmp.lt.s32.totalorder %s22, 1
        %s1738 = scalar_select %p1737, %s22, 1
        %p1739 = scmp.lt.s32.totalorder %s23, 3
        %s1740 = scalar_select %p1739, %s23, 3
        %s1741 = smul.addr %s1740, 3
        %s1742 = smul.addr %s1738, 12
        %s1743 = sadd.s32 %s1741, %s1742
        %s1744 = smul.addr %s1743, 4
        %s1745 = scalar_lea.vmem %s5, %s1744
      $region52: #{downblock_forward.4} parent=47 // pred_fallthru
        _
    $region48: #{downblock_forward.4} parent=5 // pred_fallthru
      _
  $region6: #{downblock_forward.4} parent=0 // loop_footer
    %s15 = sadd.s32 1, %s11
  $region7: #{downblock_forward.4} parent=0 // loop_footer_branch
    %10 = sbr.rel target = $region3
  $region8: #{downblock_forward.4} parent=0 // loop_exit
    _

// kernel: downblock_forward.5
$region0: #{downblock_forward.5}
  #allocation0 [shape = 'u32[]', space=smem, size = 0x4, offset = 0x4, fixed_abs, tag = 'smem constant byte address 0x4 - core index']
  #allocation1 [shape = 'u32[72,128]{1,0:T(1,128)}', space=vmem, size = 0x9000, scoped, tag = 'internal scratch']
  %s0 = inlined_call_operand.vmem [shape: bf16[2,6,38,8], index: 0, kind: input, shape index: {}, may-alias: {0,1,2}]
  %s1 = inlined_call_operand.vmem [shape: bf16[2,6,38,8], index: 1, kind: input, shape index: {}, may-alias: {0,1,2}]
  %s2 = inlined_call_operand.vmem [shape: bf16[2,6,38,8], index: 2, kind: input, shape index: {}, may-alias: {0,1,2}]
  %s3 = inlined_call_operand.vmem [shape: bf16[27,8,8], index: 3, kind: input, shape index: {}]
  %s4 = inlined_call_operand.vmem [shape: f32[1,8], index: 4, kind: input, shape index: {}]
  %s5 = inlined_call_operand.vmem [shape: bf16[2,4,24,8], index: 5, kind: input, shape index: {}]
  %s6 = inlined_call_operand.vmem [shape: bf16[2,4,24,8], index: 6, kind: output, shape index: {}]
  %s7 = sld [smem:[#allocation0]]
  $region57: #{downblock_forward.5} parent=0
    _
  %s9 = ssub.s32 1, %s7
  %s10 = scalar_select 0, %s9, %s7
  loop: start=0, step=1, limit=10
  $region2: #{downblock_forward.5} parent=0 // loop_pre_header
    _
  $region3: #{downblock_forward.5} parent=0 // loop_header
    %s12 = sphi 0, %s16
    %p13 = scmp.ge.s32.totalorder %s12, 10
    %s19 = sphi 0, %s31
    %s20 = sphi 0, %s27
    %s21 = sphi 0, %s19
    %s22 = sphi 0, %s20
    %s23 = sphi 0, %s21
    %s24 = sphi 0, %s22
    %s36 = sphi 0, %s38
    %s39 = sphi 0, %s36
    %s40 = sphi 0, %s39
    %s56 = sphi 0, %s40
    %s66 = sphi 0, %s68
    %s69 = sphi 0, %s66
    %s70 = sphi 0, %s69
    %s86 = sphi 0, %s70
    %s96 = sphi 0, %s98
    %s99 = sphi 0, %s96
    %s100 = sphi 0, %s99
    %s116 = sphi 0, %s100
    %s120 = sphi 0, %s120
    %s122 = sphi 0, %s120
    %s123 = sphi 0, %s122
    %s137 = sphi 0, %s123
    %s141 = sphi 0, %s141
    %s143 = sphi 0, %s141
    %s144 = sphi 0, %s143
    %s158 = sphi 0, %s144
    %s166 = sphi 0, %s168
    %s169 = sphi 0, %s166
    %s170 = sphi 0, %s169
    %s186 = sphi 0, %s170
    %s194 = sphi 0, %s196
    %s197 = sphi 0, %s194
    %s198 = sphi 0, %s197
    %s214 = sphi 0, %s198
  $region4: #{downblock_forward.5} parent=0 // loop_header_branch
    %15 = sbr.rel (%p13) target = $region8
  $region5: #{downblock_forward.5} parent=0 // loop_body
    %s17 = ssub.s32 %s12, 1
    %s18 = ssub.s32 %s12, 2
    %s25 = sadd.s32 1, %s20
    %p26 = scmp.ge.s32.totalorder %s25, 4
    %s27 = scalar_select %p26, 0, %s25
    %s28 = sadd.s32 1, %s19
    %s29 = scalar_select %p26, %s28, %s19
    %p30 = scmp.ge.s32.totalorder %s29, 2
    %s31 = scalar_select %p30, 0, %s29
    %s32 = ssub.s32 %s19, %s31
    %s33 = ssub.s32 %s20, %s27
    %s34 = sor.u32 %s32, %s33
    %p35 = scmp.eq.s32.totalorder %s34, 0
    %s37 = sadd.s32 %s36, 1
    %s38 = scalar_select %p35, %s36, %s37
    %p41 = pneg %p35
    %p42 = scmp.eq.s32.totalorder %s12, 7
    %p43 = por %p41, %p42
    %p44 = scmp.ne.s32.totalorder %s36, %s39
    %p45 = scmp.eq.s32.totalorder %s12, 0
    %p46 = por %p44, %p45
    %p47 = scmp.ne.s32.totalorder %s36, %s39
    %p48 = scmp.eq.s32.totalorder %s17, 7
    %p49 = por %p47, %p48
    %p50 = scmp.ne.s32.totalorder %s39, %s40
    %p51 = scmp.eq.s32.totalorder %s17, 0
    %p52 = por %p50, %p51
    %p53 = scmp.ne.s32.totalorder %s39, %s40
    %p54 = scmp.eq.s32.totalorder %s18, 7
    %p55 = por %p53, %p54
    %p57 = scmp.ne.s32.totalorder %s40, %s56
    %p58 = scmp.eq.s32.totalorder %s18, 0
    %p59 = por %p57, %p58
    %s60 = sadd.s32 %s20, 1
    %s61 = sadd.s32 %s27, 1
    %s62 = ssub.s32 %s19, %s31
    %s63 = ssub.s32 %s60, %s61
    %s64 = sor.u32 %s62, %s63
    %p65 = scmp.eq.s32.totalorder %s64, 0
    %s67 = sadd.s32 %s66, 1
    %s68 = scalar_select %p65, %s66, %s67
    %p71 = pneg %p65
    %p72 = scmp.eq.s32.totalorder %s12, 7
    %p73 = por %p71, %p72
    %p74 = scmp.ne.s32.totalorder %s66, %s69
    %p75 = scmp.eq.s32.totalorder %s12, 0
    %p76 = por %p74, %p75
    %p77 = scmp.ne.s32.totalorder %s66, %s69
    %p78 = scmp.eq.s32.totalorder %s17, 7
    %p79 = por %p77, %p78
    %p80 = scmp.ne.s32.totalorder %s69, %s70
    %p81 = scmp.eq.s32.totalorder %s17, 0
    %p82 = por %p80, %p81
    %p83 = scmp.ne.s32.totalorder %s69, %s70
    %p84 = scmp.eq.s32.totalorder %s18, 7
    %p85 = por %p83, %p84
    %p87 = scmp.ne.s32.totalorder %s70, %s86
    %p88 = scmp.eq.s32.totalorder %s18, 0
    %p89 = por %p87, %p88
    %s90 = sadd.s32 %s20, 2
    %s91 = sadd.s32 %s27, 2
    %s92 = ssub.s32 %s19, %s31
    %s93 = ssub.s32 %s90, %s91
    %s94 = sor.u32 %s92, %s93
    %p95 = scmp.eq.s32.totalorder %s94, 0
    %s97 = sadd.s32 %s96, 1
    %s98 = scalar_select %p95, %s96, %s97
    %p101 = pneg %p95
    %p102 = scmp.eq.s32.totalorder %s12, 7
    %p103 = por %p101, %p102
    %p104 = scmp.ne.s32.totalorder %s96, %s99
    %p105 = scmp.eq.s32.totalorder %s12, 0
    %p106 = por %p104, %p105
    %p107 = scmp.ne.s32.totalorder %s96, %s99
    %p108 = scmp.eq.s32.totalorder %s17, 7
    %p109 = por %p107, %p108
    %p110 = scmp.ne.s32.totalorder %s99, %s100
    %p111 = scmp.eq.s32.totalorder %s17, 0
    %p112 = por %p110, %p111
    %p113 = scmp.ne.s32.totalorder %s99, %s100
    %p114 = scmp.eq.s32.totalorder %s18, 7
    %p115 = por %p113, %p114
    %p117 = scmp.ne.s32.totalorder %s100, %s116
    %p118 = scmp.eq.s32.totalorder %s18, 0
    %p119 = por %p117, %p118
    %s121 = sadd.s32 %s120, 1
    %p124 = scmp.eq.s32.totalorder %s12, 7
    %p125 = scmp.ne.s32.totalorder %s120, %s122
    %p126 = scmp.eq.s32.totalorder %s12, 0
    %p127 = por %p125, %p126
    %p128 = scmp.ne.s32.totalorder %s120, %s122
    %p129 = scmp.eq.s32.totalorder %s17, 7
    %p130 = por %p128, %p129
    %p131 = scmp.ne.s32.totalorder %s122, %s123
    %p132 = scmp.eq.s32.totalorder %s17, 0
    %p133 = por %p131, %p132
    %p134 = scmp.ne.s32.totalorder %s122, %s123
    %p135 = scmp.eq.s32.totalorder %s18, 7
    %p136 = por %p134, %p135
    %p138 = scmp.ne.s32.totalorder %s123, %s137
    %p139 = scmp.eq.s32.totalorder %s18, 0
    %p140 = por %p138, %p139
    %s142 = sadd.s32 %s141, 1
    %p145 = scmp.eq.s32.totalorder %s12, 7
    %p146 = scmp.ne.s32.totalorder %s141, %s143
    %p147 = scmp.eq.s32.totalorder %s12, 0
    %p148 = por %p146, %p147
    %p149 = scmp.ne.s32.totalorder %s141, %s143
    %p150 = scmp.eq.s32.totalorder %s17, 7
    %p151 = por %p149, %p150
    %p152 = scmp.ne.s32.totalorder %s143, %s144
    %p153 = scmp.eq.s32.totalorder %s17, 0
    %p154 = por %p152, %p153
    %p155 = scmp.ne.s32.totalorder %s143, %s144
    %p156 = scmp.eq.s32.totalorder %s18, 7
    %p157 = por %p155, %p156
    %p159 = scmp.ne.s32.totalorder %s144, %s158
    %p160 = scmp.eq.s32.totalorder %s18, 0
    %p161 = por %p159, %p160
    %s162 = ssub.s32 %s19, %s31
    %s163 = ssub.s32 %s20, %s27
    %s164 = sor.u32 %s162, %s163
    %p165 = scmp.eq.s32.totalorder %s164, 0
    %s167 = sadd.s32 %s166, 1
    %s168 = scalar_select %p165, %s166, %s167
    %p171 = pneg %p165
    %p172 = scmp.eq.s32.totalorder %s12, 7
    %p173 = por %p171, %p172
    %p174 = scmp.ne.s32.totalorder %s166, %s169
    %p175 = scmp.eq.s32.totalorder %s12, 0
    %p176 = por %p174, %p175
    %p177 = scmp.ne.s32.totalorder %s166, %s169
    %p178 = scmp.eq.s32.totalorder %s17, 7
    %p179 = por %p177, %p178
    %p180 = scmp.ne.s32.totalorder %s169, %s170
    %p181 = scmp.eq.s32.totalorder %s17, 0
    %p182 = por %p180, %p181
    %p183 = scmp.ne.s32.totalorder %s169, %s170
    %p184 = scmp.eq.s32.totalorder %s18, 7
    %p185 = por %p183, %p184
    %p187 = scmp.ne.s32.totalorder %s170, %s186
    %p188 = scmp.eq.s32.totalorder %s18, 0
    %p189 = por %p187, %p188
    %s190 = ssub.s32 %s19, %s31
    %s191 = ssub.s32 %s20, %s27
    %s192 = sor.u32 %s190, %s191
    %p193 = scmp.eq.s32.totalorder %s192, 0
    %s195 = sadd.s32 %s194, 1
    %s196 = scalar_select %p193, %s194, %s195
    %p199 = pneg %p193
    %p200 = scmp.eq.s32.totalorder %s12, 7
    %p201 = por %p199, %p200
    %p202 = scmp.ne.s32.totalorder %s194, %s197
    %p203 = scmp.eq.s32.totalorder %s12, 0
    %p204 = por %p202, %p203
    %p205 = scmp.ne.s32.totalorder %s194, %s197
    %p206 = scmp.eq.s32.totalorder %s17, 7
    %p207 = por %p205, %p206
    %p208 = scmp.ne.s32.totalorder %s197, %s198
    %p209 = scmp.eq.s32.totalorder %s17, 0
    %p210 = por %p208, %p209
    %p211 = scmp.ne.s32.totalorder %s197, %s198
    %p212 = scmp.eq.s32.totalorder %s18, 7
    %p213 = por %p211, %p212
    %p215 = scmp.ne.s32.totalorder %s198, %s214
    %p216 = scmp.eq.s32.totalorder %s18, 0
    %p217 = por %p215, %p216
    %p218 = scmp.le.s32.totalorder 1, %s12
    %p219 = scmp.lt.s32.totalorder %s12, 9
    %p220 = pnand %p218, %p219
    %p221 = pneg %p220
    // Predicated region
    $region9: #{downblock_forward.5} parent=5 // pred_check
      _
    $region10: #{downblock_forward.5} parent=5 // pred_check_branch
      %223 = sbr.rel (%p220) target = $region12
    $region11: #{downblock_forward.5} parent=5 // pred_region
      %s224 = ssub.s32 %s12, 1
      // Predicated region
      $region13: #{downblock_forward.5} parent=11 // pred_check
        %p225 = pneg %p133
      $region14: #{downblock_forward.5} parent=11 // pred_check_branch
        %227 = sbr.rel (%p225) target = $region16
      $region15: #{downblock_forward.5} parent=11 // pred_region
        _
      $region16: #{downblock_forward.5} parent=11 // pred_fallthru
        _
      // Predicated region
      $region17: #{downblock_forward.5} parent=11 // pred_check
        %p228 = pneg %p154
      $region18: #{downblock_forward.5} parent=11 // pred_check_branch
        %230 = sbr.rel (%p228) target = $region20
      $region19: #{downblock_forward.5} parent=11 // pred_region
        _
      $region20: #{downblock_forward.5} parent=11 // pred_fallthru
        _
    $region12: #{downblock_forward.5} parent=5 // pred_fallthru
      _
    %p231 = scmp.lt.s32.totalorder %s12, 8
    // Predicated region
    $region21: #{downblock_forward.5} parent=5 // pred_check
      %p232 = pneg %p231
    $region22: #{downblock_forward.5} parent=5 // pred_check_branch
      %234 = sbr.rel (%p232) target = $region24
    $region23: #{downblock_forward.5} parent=5 // pred_region
      // Predicated region
      $region25: #{downblock_forward.5} parent=23 // pred_check
        %p235 = pneg %p46
      $region26: #{downblock_forward.5} parent=23 // pred_check_branch
        %237 = sbr.rel (%p235) target = $region28
      $region27: #{downblock_forward.5} parent=23 // pred_region
        %p238 = scmp.lt.s32.totalorder %s19, 1
        %s239 = scalar_select %p238, %s19, 1
        %p240 = scmp.lt.s32.totalorder %s20, 5
        %s241 = scalar_select %p240, %s20, 5
        %s242 = smul.addr %s241, 5
        %s243 = smul.addr %s239, 30
        %s244 = sadd.s32 %s242, %s243
        %s245 = smul.addr %s244, 4
        %s246 = scalar_lea.vmem %s0, %s245
      $region28: #{downblock_forward.5} parent=23 // pred_fallthru
        _
      // Predicated region
      $region29: #{downblock_forward.5} parent=23 // pred_check
        %p247 = pneg %p76
      $region30: #{downblock_forward.5} parent=23 // pred_check_branch
        %249 = sbr.rel (%p247) target = $region32
      $region31: #{downblock_forward.5} parent=23 // pred_region
        %s250 = sadd.s32 %s20, 1
        %p251 = scmp.lt.s32.totalorder %s19, 1
        %s252 = scalar_select %p251, %s19, 1
        %p253 = scmp.lt.s32.totalorder %s250, 5
        %s254 = scalar_select %p253, %s250, 5
        %s255 = smul.addr %s254, 5
        %s256 = smul.addr %s252, 30
        %s257 = sadd.s32 %s255, %s256
        %s258 = smul.addr %s257, 4
        %s259 = scalar_lea.vmem %s1, %s258
        %s260 = sadd.s32 %s20, 1
      $region32: #{downblock_forward.5} parent=23 // pred_fallthru
        _
      // Predicated region
      $region33: #{downblock_forward.5} parent=23 // pred_check
        %p261 = pneg %p106
      $region34: #{downblock_forward.5} parent=23 // pred_check_branch
        %263 = sbr.rel (%p261) target = $region36
      $region35: #{downblock_forward.5} parent=23 // pred_region
        %s264 = sadd.s32 %s20, 2
        %p265 = scmp.lt.s32.totalorder %s19, 1
        %s266 = scalar_select %p265, %s19, 1
        %p267 = scmp.lt.s32.totalorder %s264, 5
        %s268 = scalar_select %p267, %s264, 5
        %s269 = smul.addr %s268, 5
        %s270 = smul.addr %s266, 30
        %s271 = sadd.s32 %s269, %s270
        %s272 = smul.addr %s271, 4
        %s273 = scalar_lea.vmem %s2, %s272
        %s274 = sadd.s32 %s20, 2
      $region36: #{downblock_forward.5} parent=23 // pred_fallthru
        _
      // Predicated region
      $region37: #{downblock_forward.5} parent=23 // pred_check
        %p275 = pneg %p176
      $region38: #{downblock_forward.5} parent=23 // pred_check_branch
        %277 = sbr.rel (%p275) target = $region40
      $region39: #{downblock_forward.5} parent=23 // pred_region
        %p278 = scmp.lt.s32.totalorder %s19, 1
        %s279 = scalar_select %p278, %s19, 1
        %p280 = scmp.lt.s32.totalorder %s20, 3
        %s281 = scalar_select %p280, %s20, 3
        %s282 = smul.addr %s281, 3
        %s283 = smul.addr %s279, 12
        %s284 = sadd.s32 %s282, %s283
        %s285 = smul.addr %s284, 4
        %s286 = scalar_lea.vmem %s5, %s285
      $region40: #{downblock_forward.5} parent=23 // pred_fallthru
        _
    $region24: #{downblock_forward.5} parent=5 // pred_fallthru
      _
    %p287 = scmp.le.s32.totalorder 1, %s12
    %p288 = scmp.lt.s32.totalorder %s12, 9
    %p289 = pnand %p287, %p288
    %p290 = pneg %p289
    // Predicated region
    $region41: #{downblock_forward.5} parent=5 // pred_check
      _
    $region42: #{downblock_forward.5} parent=5 // pred_check_branch
      %292 = sbr.rel (%p289) target = $region44
    $region43: #{downblock_forward.5} parent=5 // pred_region
      %s293 = ssub.s32 %s12, 1
      %p294 = scmp.lt.s32.totalorder %s21, 1
      %s295 = scalar_select %p294, %s21, 1
      %p296 = scmp.lt.s32.totalorder %s22, 5
      %s297 = scalar_select %p296, %s22, 5
      %s298 = smul.addr %s297, 5
      %s299 = smul.addr %s295, 30
      %s300 = sadd.s32 %s298, %s299
      %s301 = smul.addr %s300, 4
      %s302 = scalar_lea.vmem %s0, %s301
      %p303 = pneg %p52
      %p304 = pneg %p49
      %s305 = sadd.s32 %s22, 1
      %p306 = scmp.lt.s32.totalorder %s21, 1
      %s307 = scalar_select %p306, %s21, 1
      %p308 = scmp.lt.s32.totalorder %s305, 5
      %s309 = scalar_select %p308, %s305, 5
      %s310 = smul.addr %s309, 5
      %s311 = smul.addr %s307, 30
      %s312 = sadd.s32 %s310, %s311
      %s313 = smul.addr %s312, 4
      %s314 = scalar_lea.vmem %s1, %s313
      %p315 = pneg %p82
      %p316 = pneg %p79
      %s317 = sadd.s32 %s22, 2
      %p318 = scmp.lt.s32.totalorder %s21, 1
      %s319 = scalar_select %p318, %s21, 1
      %p320 = scmp.lt.s32.totalorder %s317, 5
      %s321 = scalar_select %p320, %s317, 5
      %s322 = smul.addr %s321, 5
      %s323 = smul.addr %s319, 30
      %s324 = sadd.s32 %s322, %s323
      %s325 = smul.addr %s324, 4
      %s326 = scalar_lea.vmem %s2, %s325
      %p327 = pneg %p112
      %p328 = pneg %p109
      %p329 = pneg %p133
      %p330 = pneg %p130
      %p331 = pneg %p154
      %p332 = pneg %p151
      %p333 = scmp.lt.s32.totalorder %s21, 1
      %s334 = scalar_select %p333, %s21, 1
      %p335 = scmp.lt.s32.totalorder %s22, 3
      %s336 = scalar_select %p335, %s22, 3
      %s337 = smul.addr %s336, 3
      %s338 = smul.addr %s334, 12
      %s339 = sadd.s32 %s337, %s338
      %s340 = smul.addr %s339, 4
      %s341 = scalar_lea.vmem %s5, %s340
      %p342 = pneg %p182
      %p343 = pneg %p179
      %p344 = pneg %p210
      %p345 = pneg %p207
      %p346 = scmp.lt.s32.totalorder %s21, 1
      %s347 = scalar_select %p346, %s21, 1
      %p348 = scmp.lt.s32.totalorder %s22, 3
      %s349 = scalar_select %p348, %s22, 3
      %s350 = smul.addr %s349, 3
      %s351 = smul.addr %s347, 12
      %s352 = sadd.s32 %s350, %s351
      %s353 = smul.addr %s352, 4
      %s354 = scalar_lea.vmem %s6, %s353
      %p355 = scmp.lt.s32.totalorder %s21, 1
      %s356 = scalar_select %p355, %s21, 1
      %p357 = scmp.lt.s32.totalorder %s22, 5
      %s358 = scalar_select %p357, %s22, 5
      %s359 = smul.addr %s358, 5
      %s360 = smul.addr %s356, 30
      %s361 = sadd.s32 %s359, %s360
      %s362 = smul.addr %s361, 4
      %s363 = scalar_lea.vmem %s0, %s362
      %s364 = sadd.s32 %s22, 1
      %p365 = scmp.lt.s32.totalorder %s21, 1
      %s366 = scalar_select %p365, %s21, 1
      %p367 = scmp.lt.s32.totalorder %s364, 5
      %s368 = scalar_select %p367, %s364, 5
      %s369 = smul.addr %s368, 5
      %s370 = smul.addr %s366, 30
      %s371 = sadd.s32 %s369, %s370
      %s372 = smul.addr %s371, 4
      %s373 = scalar_lea.vmem %s1, %s372
      %s374 = sadd.s32 %s22, 1
      %s375 = sadd.s32 %s22, 2
      %p376 = scmp.lt.s32.totalorder %s21, 1
      %s377 = scalar_select %p376, %s21, 1
      %p378 = scmp.lt.s32.totalorder %s375, 5
      %s379 = scalar_select %p378, %s375, 5
      %s380 = smul.addr %s379, 5
      %s381 = smul.addr %s377, 30
      %s382 = sadd.s32 %s380, %s381
      %s383 = smul.addr %s382, 4
      %s384 = scalar_lea.vmem %s2, %s383
      %s385 = sadd.s32 %s22, 2
      %p386 = scmp.lt.s32.totalorder %s21, 1
      %s387 = scalar_select %p386, %s21, 1
      %p388 = scmp.lt.s32.totalorder %s22, 3
      %s389 = scalar_select %p388, %s22, 3
      %s390 = smul.addr %s389, 3
      %s391 = smul.addr %s387, 12
      %s392 = sadd.s32 %s390, %s391
      %s393 = smul.addr %s392, 4
      %s394 = scalar_lea.vmem %s5, %s393
      %p395 = scmp.lt.s32.totalorder %s21, 1
      %s396 = scalar_select %p395, %s21, 1
      %p397 = scmp.lt.s32.totalorder %s22, 3
      %s398 = scalar_select %p397, %s22, 3
      %s399 = smul.addr %s398, 3
      %s400 = smul.addr %s396, 12
      %s401 = sadd.s32 %s399, %s400
      %s402 = smul.addr %s401, 4
      %s403 = scalar_lea.vmem %s6, %s402
      %v405 = vld [vmem:[%s363] sm:$0xf]
      %v406 = vld [vmem:[%s363 + $0x4] sm:$0xf]
      %v407 = vld [vmem:[%s363 + $0x8] sm:$0xf]
      %v408 = vld [vmem:[%s3] sm:$0xf]
      %v409 = vld [vmem:[%s363 + $0xc] sm:$0x1]
      %s410 = scalar_lea.vmem %s3, 4
      %v411 = vld [vmem:[%s410] sm:$0xf]
      %v416 = vunpack.c.l.b16 %v405
      %v417 = vunpack.c.l.b16 %v406
      %v418 = vunpack.c.l.b16 %v407
      %v419 = vunpack.c.l.b16 %v409
      %v420 = vpack.c.b16 %v417, %v416
      %v421 = vpack.c.b16 %v419, %v418
      %vm422 = vsmask.f32 7424
      %v424 = vshrl.u32 %v420, 16
      %v426 = vshll.u32 %v420, 16
      %v428 = vrot.slane %v426, 1
      %v429 = vor.u32 %v424, %v428
      %v431 = vshll.u32 %v421, 16
      %v433 = vrot.slane %v431, 1
      %v434 = vsel %vm422, %v429, %v433
      %v435 = vshrl.u32 %v421, 16
      %v437 = vor.u32 %v435, %v433
      %vm438 = vcmask 64512
      %v440 = vsel %vm438, %v434, 0
      %v443 = vsel %vm438, %v437, 0
      %vm445 = vcmask 1043456
      %v447 = vsel %vm445, %v411, 0
      %449 = vmatpush.bf16.msra.mxu0 0
      %450 = vmatpush.bf16.msra.mxu0 0
      %451 = vmatpush.bf16.msra.mxu0 0
      %452 = vmatpush.bf16.msra.mxu0 0
      %453 = vmatpush.bf16.msra.mxu0 0
      %454 = vmatpush.bf16.msra.mxu0 0
      %455 = vmatpush.bf16.msra.mxu0 0
      %456 = vmatpush.bf16.msra.mxu0 %v447
      %457 = vmatmul.bf16.gmra.mxu0 %v440
      %v458 = vpop.f32.mrf.mxu0
      %v459 = vadd.f32 0.0, %v458
      %v460 = vpop.f32.mrf.mxu0
      %v461 = vadd.f32 0.0, %v460
      %462 = vmatmul.bf16.gmra.mxu0 %v443
      %v463 = vpop.f32.mrf.mxu0
      %v464 = vadd.f32 0.0, %v463
      %v465 = vpop.f32.mrf.mxu0
      %466 = vdwg.mxu0
      %v467 = vpack.c.b16 %v418, %v418
      %v468 = vsel %vm438, %v420, 0
      %v471 = vsel %vm438, %v467, 0
      %v474 = vsel %vm445, %v408, 0
      %476 = vmatpush.bf16.msra.mxu0 0
      %477 = vmatpush.bf16.msra.mxu0 0
      %478 = vmatpush.bf16.msra.mxu0 0
      %479 = vmatpush.bf16.msra.mxu0 0
      %480 = vmatpush.bf16.msra.mxu0 0
      %481 = vmatpush.bf16.msra.mxu0 0
      %482 = vmatpush.bf16.msra.mxu0 0
      %483 = vmatpush.bf16.msra.mxu0 %v474
      %484 = vmatmul.bf16.gmra.mxu0 %v468
      %v485 = vpop.f32.mrf.mxu0
      %v486 = vadd.f32 %v459, %v485
      %v487 = vpop.f32.mrf.mxu0
      %v488 = vadd.f32 %v461, %v487
      %489 = vmatmul.bf16.gmra.mxu0 %v471
      %v490 = vpop.f32.mrf.mxu0
      %v491 = vadd.f32 %v464, %v490
      %v492 = vpop.f32.mrf.mxu0
      %493 = vdwg.mxu0
      %v494 = vld [vmem:[%s363] sm:$0xe]
      %s495 = scalar_lea.vmem %s3, 8
      %v496 = vld [vmem:[%s495] sm:$0xf]
      %v498 = vunpack.c.l.b16 %v494
      %v499 = vpack.c.b16 %v417, %v498
      %vm500 = vcmask 1046528
      %v501 = vrot.slane %v499, 1
      %v502 = vrot.slane %v421, 1
      %v503 = vsel %vm500, %v501, %v502
      %v505 = vsel %vm438, %v503, 0
      %v508 = vsel %vm438, %v502, 0
      %v511 = vsel %vm445, %v496, 0
      %513 = vmatpush.bf16.msra.mxu0 0
      %514 = vmatpush.bf16.msra.mxu0 0
      %515 = vmatpush.bf16.msra.mxu0 0
      %516 = vmatpush.bf16.msra.mxu0 0
      %517 = vmatpush.bf16.msra.mxu0 0
      %518 = vmatpush.bf16.msra.mxu0 0
      %519 = vmatpush.bf16.msra.mxu0 0
      %520 = vmatpush.bf16.msra.mxu0 %v511
      %521 = vmatmul.bf16.gmra.mxu0 %v505
      %v522 = vpop.f32.mrf.mxu0
      %v523 = vadd.f32 0.0, %v522
      %v524 = vpop.f32.mrf.mxu0
      %v525 = vadd.f32 0.0, %v524
      %526 = vmatmul.bf16.gmra.mxu0 %v508
      %v527 = vpop.f32.mrf.mxu0
      %v528 = vadd.f32 0.0, %v527
      %v529 = vpop.f32.mrf.mxu0
      %530 = vdwg.mxu0
      %v531 = vadd.f32 %v486, %v523
      %v532 = vadd.f32 %v488, %v525
      %v533 = vadd.f32 %v491, %v528
      %v534 = vld [vmem:[%s363] sm:$0x8]
      %v535 = vld [vmem:[%s363 + $0xc] sm:$0x7]
      %s536 = scalar_lea.vmem %s3, 12
      %v537 = vld [vmem:[%s536] sm:$0xf]
      %v540 = vunpack.c.l.b16 %v534
      %v541 = vunpack.c.l.b16 %v535
      %v542 = vpack.c.b16 %v417, %v540
      %v543 = vpack.c.b16 %v541, %v418
      %vm544 = vcmask 1044480
      %v545 = vrot.slane %v542, 3
      %v546 = vrot.slane %v543, 3
      %v547 = vsel %vm544, %v545, %v546
      %v549 = vsel %vm438, %v547, 0
      %v552 = vsel %vm438, %v546, 0
      %v555 = vsel %vm445, %v537, 0
      %557 = vmatpush.bf16.msra.mxu0 0
      %558 = vmatpush.bf16.msra.mxu0 0
      %559 = vmatpush.bf16.msra.mxu0 0
      %560 = vmatpush.bf16.msra.mxu0 0
      %561 = vmatpush.bf16.msra.mxu0 0
      %562 = vmatpush.bf16.msra.mxu0 0
      %563 = vmatpush.bf16.msra.mxu0 0
      %564 = vmatpush.bf16.msra.mxu0 %v555
      %565 = vmatmul.bf16.gmra.mxu0 %v549
      %v566 = vpop.f32.mrf.mxu0
      %v567 = vadd.f32 0.0, %v566
      %v568 = vpop.f32.mrf.mxu0
      %v569 = vadd.f32 0.0, %v568
      %570 = vmatmul.bf16.gmra.mxu0 %v552
      %v571 = vpop.f32.mrf.mxu0
      %v572 = vadd.f32 0.0, %v571
      %v573 = vpop.f32.mrf.mxu0
      %574 = vdwg.mxu0
      %v575 = vadd.f32 %v531, %v567
      %v576 = vadd.f32 %v532, %v569
      %v577 = vadd.f32 %v533, %v572
      %v578 = vld [vmem:[%s363 + $0xc] sm:$0xf]
      %s579 = scalar_lea.vmem %s3, 16
      %v580 = vld [vmem:[%s579] sm:$0xf]
      %v582 = vunpack.c.l.b16 %v578
      %v583 = vpack.c.b16 %v582, %v418
      %vm584 = vsmask.f32 4352
      %v586 = vshrl.u32 %v542, 16
      %v588 = vrot.slane %v586, 3
      %v589 = vshll.u32 %v542, 16
      %v591 = vrot.slane %v589, 4
      %v592 = vor.u32 %v588, %v591
      %v594 = vshrl.u32 %v583, 16
      %v596 = vrot.slane %v594, 3
      %v597 = vshll.u32 %v583, 16
      %v599 = vrot.slane %v597, 4
      %v600 = vor.u32 %v596, %v599
      %v601 = vsel %vm584, %v592, %v600
      %v603 = vsel %vm438, %v601, 0
      %v606 = vsel %vm438, %v600, 0
      %v609 = vsel %vm445, %v580, 0
      %611 = vmatpush.bf16.msra.mxu0 0
      %612 = vmatpush.bf16.msra.mxu0 0
      %613 = vmatpush.bf16.msra.mxu0 0
      %614 = vmatpush.bf16.msra.mxu0 0
      %615 = vmatpush.bf16.msra.mxu0 0
      %616 = vmatpush.bf16.msra.mxu0 0
      %617 = vmatpush.bf16.msra.mxu0 0
      %618 = vmatpush.bf16.msra.mxu0 %v609
      %619 = vmatmul.bf16.gmra.mxu0 %v603
      %v620 = vpop.f32.mrf.mxu0
      %v621 = vadd.f32 0.0, %v620
      %v622 = vpop.f32.mrf.mxu0
      %v623 = vadd.f32 0.0, %v622
      %624 = vmatmul.bf16.gmra.mxu0 %v606
      %v625 = vpop.f32.mrf.mxu0
      %v626 = vadd.f32 0.0, %v625
      %v627 = vpop.f32.mrf.mxu0
      %628 = vdwg.mxu0
      %v629 = vadd.f32 %v575, %v621
      %v630 = vadd.f32 %v576, %v623
      %v631 = vadd.f32 %v577, %v626
      %s632 = scalar_lea.vmem %s3, 20
      %v633 = vld [vmem:[%s632] sm:$0xf]
      %v634 = vpack.c.b16 %v418, %v417
      %v635 = vpack.c.b16 %v582, %v582
      %v637 = vsel %vm438, %v634, 0
      %v640 = vsel %vm438, %v635, 0
      %v643 = vsel %vm445, %v633, 0
      %645 = vmatpush.bf16.msra.mxu0 0
      %646 = vmatpush.bf16.msra.mxu0 0
      %647 = vmatpush.bf16.msra.mxu0 0
      %648 = vmatpush.bf16.msra.mxu0 0
      %649 = vmatpush.bf16.msra.mxu0 0
      %650 = vmatpush.bf16.msra.mxu0 0
      %651 = vmatpush.bf16.msra.mxu0 0
      %652 = vmatpush.bf16.msra.mxu0 %v643
      %653 = vmatmul.bf16.gmra.mxu0 %v637
      %v654 = vpop.f32.mrf.mxu0
      %v655 = vadd.f32 0.0, %v654
      %v656 = vpop.f32.mrf.mxu0
      %v657 = vadd.f32 0.0, %v656
      %658 = vmatmul.bf16.gmra.mxu0 %v640
      %v659 = vpop.f32.mrf.mxu0
      %v660 = vadd.f32 0.0, %v659
      %v661 = vpop.f32.mrf.mxu0
      %662 = vdwg.mxu0
      %v663 = vadd.f32 %v629, %v655
      %v664 = vadd.f32 %v630, %v657
      %v665 = vadd.f32 %v631, %v660
      %v666 = vld [vmem:[%s363 + $0x4] sm:$0xc]
      %v667 = vld [vmem:[%s363 + $0x8] sm:$0xf]
      %v668 = vld [vmem:[%s363 + $0xc] sm:$0xf]
      %v669 = vld [vmem:[%s363 + $0x10] sm:$0x3]
      %s670 = scalar_lea.vmem %s3, 24
      %v671 = vld [vmem:[%s670] sm:$0xf]
      %v676 = vunpack.c.l.b16 %v666
      %v677 = vunpack.c.l.b16 %v667
      %v678 = vunpack.c.l.b16 %v668
      %v679 = vunpack.c.l.b16 %v669
      %v680 = vpack.c.b16 %v677, %v676
      %v681 = vpack.c.b16 %v679, %v678
      %vm682 = vcmask 1045504
      %v683 = vrot.slane %v680, 2
      %v684 = vrot.slane %v681, 2
      %v685 = vsel %vm682, %v683, %v684
      %v687 = vsel %vm438, %v685, 0
      %v690 = vsel %vm438, %v684, 0
      %v693 = vsel %vm445, %v671, 0
      %695 = vmatpush.bf16.msra.mxu0 0
      %696 = vmatpush.bf16.msra.mxu0 0
      %697 = vmatpush.bf16.msra.mxu0 0
      %698 = vmatpush.bf16.msra.mxu0 0
      %699 = vmatpush.bf16.msra.mxu0 0
      %700 = vmatpush.bf16.msra.mxu0 0
      %701 = vmatpush.bf16.msra.mxu0 0
      %702 = vmatpush.bf16.msra.mxu0 %v693
      %703 = vmatmul.bf16.gmra.mxu0 %v687
      %v704 = vpop.f32.mrf.mxu0
      %v705 = vadd.f32 0.0, %v704
      %v706 = vpop.f32.mrf.mxu0
      %v707 = vadd.f32 0.0, %v706
      %708 = vmatmul.bf16.gmra.mxu0 %v690
      %v709 = vpop.f32.mrf.mxu0
      %v710 = vadd.f32 0.0, %v709
      %v711 = vpop.f32.mrf.mxu0
      %712 = vdwg.mxu0
      %v713 = vadd.f32 %v663, %v705
      %v714 = vadd.f32 %v664, %v707
      %v715 = vadd.f32 %v665, %v710
      %v716 = vld [vmem:[%s363 + $0x10] sm:$0x7]
      %s717 = scalar_lea.vmem %s3, 28
      %v718 = vld [vmem:[%s717] sm:$0xf]
      %v720 = vunpack.c.l.b16 %v716
      %v721 = vpack.c.b16 %v720, %v678
      %vm722 = vsmask.f32 5376
      %v724 = vshrl.u32 %v680, 16
      %v726 = vrot.slane %v724, 2
      %v727 = vshll.u32 %v680, 16
      %v729 = vrot.slane %v727, 3
      %v730 = vor.u32 %v726, %v729
      %v732 = vshrl.u32 %v721, 16
      %v734 = vrot.slane %v732, 2
      %v735 = vshll.u32 %v721, 16
      %v737 = vrot.slane %v735, 3
      %v738 = vor.u32 %v734, %v737
      %v739 = vsel %vm722, %v730, %v738
      %v741 = vsel %vm438, %v739, 0
      %v744 = vsel %vm438, %v738, 0
      %v747 = vsel %vm445, %v718, 0
      %749 = vmatpush.bf16.msra.mxu0 0
      %750 = vmatpush.bf16.msra.mxu0 0
      %751 = vmatpush.bf16.msra.mxu0 0
      %752 = vmatpush.bf16.msra.mxu0 0
      %753 = vmatpush.bf16.msra.mxu0 0
      %754 = vmatpush.bf16.msra.mxu0 0
      %755 = vmatpush.bf16.msra.mxu0 0
      %756 = vmatpush.bf16.msra.mxu0 %v747
      %757 = vmatmul.bf16.gmra.mxu0 %v741
      %v758 = vpop.f32.mrf.mxu0
      %v759 = vadd.f32 0.0, %v758
      %v760 = vpop.f32.mrf.mxu0
      %v761 = vadd.f32 0.0, %v760
      %762 = vmatmul.bf16.gmra.mxu0 %v744
      %v763 = vpop.f32.mrf.mxu0
      %v764 = vadd.f32 0.0, %v763
      %v765 = vpop.f32.mrf.mxu0
      %766 = vdwg.mxu0
      %v767 = vadd.f32 %v713, %v759
      %v768 = vadd.f32 %v714, %v761
      %v769 = vadd.f32 %v715, %v764
      %v770 = vld [vmem:[%s363 + $0x4] sm:$0x8]
      %s771 = scalar_lea.vmem %s3, 32
      %v772 = vld [vmem:[%s771] sm:$0xf]
      %v774 = vunpack.c.l.b16 %v770
      %v775 = vpack.c.b16 %v677, %v774
      %v776 = vrot.slane %v775, 3
      %v777 = vrot.slane %v721, 3
      %v778 = vsel %vm544, %v776, %v777
      %v780 = vsel %vm438, %v778, 0
      %v783 = vsel %vm438, %v777, 0
      %v786 = vsel %vm445, %v772, 0
      %788 = vmatpush.bf16.msra.mxu0 0
      %789 = vmatpush.bf16.msra.mxu0 0
      %790 = vmatpush.bf16.msra.mxu0 0
      %791 = vmatpush.bf16.msra.mxu0 0
      %792 = vmatpush.bf16.msra.mxu0 0
      %793 = vmatpush.bf16.msra.mxu0 0
      %794 = vmatpush.bf16.msra.mxu0 0
      %795 = vmatpush.bf16.msra.mxu0 %v786
      %796 = vmatmul.bf16.gmra.mxu0 %v780
      %v797 = vpop.f32.mrf.mxu0
      %v798 = vadd.f32 0.0, %v797
      %v799 = vpop.f32.mrf.mxu0
      %v800 = vadd.f32 0.0, %v799
      %801 = vmatmul.bf16.gmra.mxu0 %v783
      %v802 = vpop.f32.mrf.mxu0
      %v803 = vadd.f32 0.0, %v802
      %v804 = vpop.f32.mrf.mxu0
      %805 = vdwg.mxu0
      %v806 = vadd.f32 %v767, %v798
      %v807 = vadd.f32 %v768, %v800
      %v808 = vadd.f32 %v769, %v803
      %v809 = vld [vmem:[%s373] sm:$0xf]
      %v810 = vld [vmem:[%s373 + $0x4] sm:$0xf]
      %v811 = vld [vmem:[%s373 + $0x8] sm:$0xf]
      %s812 = scalar_lea.vmem %s3, 36
      %v813 = vld [vmem:[%s812] sm:$0xf]
      %v817 = vunpack.c.l.b16 %v809
      %v818 = vunpack.c.l.b16 %v810
      %v819 = vunpack.c.l.b16 %v811
      %v820 = vpack.c.b16 %v818, %v817
      %v821 = vpack.c.b16 %v819, %v819
      %v823 = vsel %vm438, %v820, 0
      %v826 = vsel %vm438, %v821, 0
      %v829 = vsel %vm445, %v813, 0
      %831 = vmatpush.bf16.msra.mxu0 0
      %832 = vmatpush.bf16.msra.mxu0 0
      %833 = vmatpush.bf16.msra.mxu0 0
      %834 = vmatpush.bf16.msra.mxu0 0
      %835 = vmatpush.bf16.msra.mxu0 0
      %836 = vmatpush.bf16.msra.mxu0 0
      %837 = vmatpush.bf16.msra.mxu0 0
      %838 = vmatpush.bf16.msra.mxu0 %v829
      %839 = vmatmul.bf16.gmra.mxu0 %v823
      %v840 = vpop.f32.mrf.mxu0
      %v841 = vadd.f32 0.0, %v840
      %v842 = vpop.f32.mrf.mxu0
      %v843 = vadd.f32 0.0, %v842
      %844 = vmatmul.bf16.gmra.mxu0 %v826
      %v845 = vpop.f32.mrf.mxu0
      %v846 = vadd.f32 0.0, %v845
      %v847 = vpop.f32.mrf.mxu0
      %848 = vdwg.mxu0
      %v849 = vadd.f32 %v806, %v841
      %v850 = vadd.f32 %v807, %v843
      %v851 = vadd.f32 %v808, %v846
      %v852 = vld [vmem:[%s373] sm:$0xf]
      %v853 = vld [vmem:[%s373 + $0x4] sm:$0xf]
      %v854 = vld [vmem:[%s373 + $0x8] sm:$0xf]
      %v855 = vld [vmem:[%s373 + $0xc] sm:$0x1]
      %s856 = scalar_lea.vmem %s3, 40
      %v857 = vld [vmem:[%s856] sm:$0xf]
      %v862 = vunpack.c.l.b16 %v852
      %v863 = vunpack.c.l.b16 %v853
      %v864 = vunpack.c.l.b16 %v854
      %v865 = vunpack.c.l.b16 %v855
      %v866 = vpack.c.b16 %v863, %v862
      %v867 = vpack.c.b16 %v865, %v864
      %v869 = vshrl.u32 %v866, 16
      %v871 = vshll.u32 %v866, 16
      %v873 = vrot.slane %v871, 1
      %v874 = vor.u32 %v869, %v873
      %v876 = vshll.u32 %v867, 16
      %v878 = vrot.slane %v876, 1
      %v879 = vsel %vm422, %v874, %v878
      %v880 = vshrl.u32 %v867, 16
      %v882 = vor.u32 %v880, %v878
      %v884 = vsel %vm438, %v879, 0
      %v887 = vsel %vm438, %v882, 0
      %v890 = vsel %vm445, %v857, 0
      %892 = vmatpush.bf16.msra.mxu0 0
      %893 = vmatpush.bf16.msra.mxu0 0
      %894 = vmatpush.bf16.msra.mxu0 0
      %895 = vmatpush.bf16.msra.mxu0 0
      %896 = vmatpush.bf16.msra.mxu0 0
      %897 = vmatpush.bf16.msra.mxu0 0
      %898 = vmatpush.bf16.msra.mxu0 0
      %899 = vmatpush.bf16.msra.mxu0 %v890
      %900 = vmatmul.bf16.gmra.mxu0 %v884
      %v901 = vpop.f32.mrf.mxu0
      %v902 = vadd.f32 0.0, %v901
      %v903 = vpop.f32.mrf.mxu0
      %v904 = vadd.f32 0.0, %v903
      %905 = vmatmul.bf16.gmra.mxu0 %v887
      %v906 = vpop.f32.mrf.mxu0
      %v907 = vadd.f32 0.0, %v906
      %v908 = vpop.f32.mrf.mxu0
      %909 = vdwg.mxu0
      %v910 = vadd.f32 %v849, %v902
      %v911 = vadd.f32 %v850, %v904
      %v912 = vadd.f32 %v851, %v907
      %v913 = vld [vmem:[%s373] sm:$0xe]
      %s914 = scalar_lea.vmem %s3, 44
      %v915 = vld [vmem:[%s914] sm:$0xf]
      %v917 = vunpack.c.l.b16 %v913
      %v918 = vpack.c.b16 %v863, %v917
      %v919 = vrot.slane %v918, 1
      %v920 = vrot.slane %v867, 1
      %v921 = vsel %vm500, %v919, %v920
      %v923 = vsel %vm438, %v921, 0
      %v926 = vsel %vm438, %v920, 0
      %v929 = vsel %vm445, %v915, 0
      %931 = vmatpush.bf16.msra.mxu0 0
      %932 = vmatpush.bf16.msra.mxu0 0
      %933 = vmatpush.bf16.msra.mxu0 0
      %934 = vmatpush.bf16.msra.mxu0 0
      %935 = vmatpush.bf16.msra.mxu0 0
      %936 = vmatpush.bf16.msra.mxu0 0
      %937 = vmatpush.bf16.msra.mxu0 0
      %938 = vmatpush.bf16.msra.mxu0 %v929
      %939 = vmatmul.bf16.gmra.mxu0 %v923
      %v940 = vpop.f32.mrf.mxu0
      %v941 = vadd.f32 0.0, %v940
      %v942 = vpop.f32.mrf.mxu0
      %v943 = vadd.f32 0.0, %v942
      %944 = vmatmul.bf16.gmra.mxu0 %v926
      %v945 = vpop.f32.mrf.mxu0
      %v946 = vadd.f32 0.0, %v945
      %v947 = vpop.f32.mrf.mxu0
      %948 = vdwg.mxu0
      %v949 = vadd.f32 %v910, %v941
      %v950 = vadd.f32 %v911, %v943
      %v951 = vadd.f32 %v912, %v946
      %v952 = vld [vmem:[%s373] sm:$0x8]
      %v953 = vld [vmem:[%s373 + $0xc] sm:$0x7]
      %s954 = scalar_lea.vmem %s3, 48
      %v955 = vld [vmem:[%s954] sm:$0xf]
      %v958 = vunpack.c.l.b16 %v952
      %v959 = vunpack.c.l.b16 %v953
      %v960 = vpack.c.b16 %v863, %v958
      %v961 = vpack.c.b16 %v959, %v864
      %v962 = vrot.slane %v960, 3
      %v963 = vrot.slane %v961, 3
      %v964 = vsel %vm544, %v962, %v963
      %v966 = vsel %vm438, %v964, 0
      %v969 = vsel %vm438, %v963, 0
      %v972 = vsel %vm445, %v955, 0
      %974 = vmatpush.bf16.msra.mxu0 0
      %975 = vmatpush.bf16.msra.mxu0 0
      %976 = vmatpush.bf16.msra.mxu0 0
      %977 = vmatpush.bf16.msra.mxu0 0
      %978 = vmatpush.bf16.msra.mxu0 0
      %979 = vmatpush.bf16.msra.mxu0 0
      %980 = vmatpush.bf16.msra.mxu0 0
      %981 = vmatpush.bf16.msra.mxu0 %v972
      %982 = vmatmul.bf16.gmra.mxu0 %v966
      %v983 = vpop.f32.mrf.mxu0
      %v984 = vadd.f32 0.0, %v983
      %v985 = vpop.f32.mrf.mxu0
      %v986 = vadd.f32 0.0, %v985
      %987 = vmatmul.bf16.gmra.mxu0 %v969
      %v988 = vpop.f32.mrf.mxu0
      %v989 = vadd.f32 0.0, %v988
      %v990 = vpop.f32.mrf.mxu0
      %991 = vdwg.mxu0
      %v992 = vadd.f32 %v949, %v984
      %v993 = vadd.f32 %v950, %v986
      %v994 = vadd.f32 %v951, %v989
      %v995 = vld [vmem:[%s373 + $0xc] sm:$0xf]
      %s996 = scalar_lea.vmem %s3, 52
      %v997 = vld [vmem:[%s996] sm:$0xf]
      %v999 = vunpack.c.l.b16 %v995
      %v1000 = vpack.c.b16 %v999, %v864
      %v1002 = vshrl.u32 %v960, 16
      %v1004 = vrot.slane %v1002, 3
      %v1005 = vshll.u32 %v960, 16
      %v1007 = vrot.slane %v1005, 4
      %v1008 = vor.u32 %v1004, %v1007
      %v1010 = vshrl.u32 %v1000, 16
      %v1012 = vrot.slane %v1010, 3
      %v1013 = vshll.u32 %v1000, 16
      %v1015 = vrot.slane %v1013, 4
      %v1016 = vor.u32 %v1012, %v1015
      %v1017 = vsel %vm584, %v1008, %v1016
      %v1019 = vsel %vm438, %v1017, 0
      %v1022 = vsel %vm438, %v1016, 0
      %v1025 = vsel %vm445, %v997, 0
      %1027 = vmatpush.bf16.msra.mxu0 0
      %1028 = vmatpush.bf16.msra.mxu0 0
      %1029 = vmatpush.bf16.msra.mxu0 0
      %1030 = vmatpush.bf16.msra.mxu0 0
      %1031 = vmatpush.bf16.msra.mxu0 0
      %1032 = vmatpush.bf16.msra.mxu0 0
      %1033 = vmatpush.bf16.msra.mxu0 0
      %1034 = vmatpush.bf16.msra.mxu0 %v1025
      %1035 = vmatmul.bf16.gmra.mxu0 %v1019
      %v1036 = vpop.f32.mrf.mxu0
      %v1037 = vadd.f32 0.0, %v1036
      %v1038 = vpop.f32.mrf.mxu0
      %v1039 = vadd.f32 0.0, %v1038
      %1040 = vmatmul.bf16.gmra.mxu0 %v1022
      %v1041 = vpop.f32.mrf.mxu0
      %v1042 = vadd.f32 0.0, %v1041
      %v1043 = vpop.f32.mrf.mxu0
      %1044 = vdwg.mxu0
      %v1045 = vadd.f32 %v992, %v1037
      %v1046 = vadd.f32 %v993, %v1039
      %v1047 = vadd.f32 %v994, %v1042
      %s1048 = scalar_lea.vmem %s3, 56
      %v1049 = vld [vmem:[%s1048] sm:$0xf]
      %v1050 = vpack.c.b16 %v864, %v863
      %v1051 = vpack.c.b16 %v999, %v999
      %v1053 = vsel %vm438, %v1050, 0
      %v1056 = vsel %vm438, %v1051, 0
      %v1059 = vsel %vm445, %v1049, 0
      %1061 = vmatpush.bf16.msra.mxu0 0
      %1062 = vmatpush.bf16.msra.mxu0 0
      %1063 = vmatpush.bf16.msra.mxu0 0
      %1064 = vmatpush.bf16.msra.mxu0 0
      %1065 = vmatpush.bf16.msra.mxu0 0
      %1066 = vmatpush.bf16.msra.mxu0 0
      %1067 = vmatpush.bf16.msra.mxu0 0
      %1068 = vmatpush.bf16.msra.mxu0 %v1059
      %1069 = vmatmul.bf16.gmra.mxu0 %v1053
      %v1070 = vpop.f32.mrf.mxu0
      %v1071 = vadd.f32 0.0, %v1070
      %v1072 = vpop.f32.mrf.mxu0
      %v1073 = vadd.f32 0.0, %v1072
      %1074 = vmatmul.bf16.gmra.mxu0 %v1056
      %v1075 = vpop.f32.mrf.mxu0
      %v1076 = vadd.f32 0.0, %v1075
      %v1077 = vpop.f32.mrf.mxu0
      %1078 = vdwg.mxu0
      %v1079 = vadd.f32 %v1045, %v1071
      %v1080 = vadd.f32 %v1046, %v1073
      %v1081 = vadd.f32 %v1047, %v1076
      %v1082 = vld [vmem:[%s373 + $0x4] sm:$0xc]
      %v1083 = vld [vmem:[%s373 + $0x8] sm:$0xf]
      %v1084 = vld [vmem:[%s373 + $0xc] sm:$0xf]
      %v1085 = vld [vmem:[%s373 + $0x10] sm:$0x3]
      %s1086 = scalar_lea.vmem %s3, 60
      %v1087 = vld [vmem:[%s1086] sm:$0xf]
      %v1092 = vunpack.c.l.b16 %v1082
      %v1093 = vunpack.c.l.b16 %v1083
      %v1094 = vunpack.c.l.b16 %v1084
      %v1095 = vunpack.c.l.b16 %v1085
      %v1096 = vpack.c.b16 %v1093, %v1092
      %v1097 = vpack.c.b16 %v1095, %v1094
      %v1098 = vrot.slane %v1096, 2
      %v1099 = vrot.slane %v1097, 2
      %v1100 = vsel %vm682, %v1098, %v1099
      %v1102 = vsel %vm438, %v1100, 0
      %v1105 = vsel %vm438, %v1099, 0
      %v1108 = vsel %vm445, %v1087, 0
      %1110 = vmatpush.bf16.msra.mxu0 0
      %1111 = vmatpush.bf16.msra.mxu0 0
      %1112 = vmatpush.bf16.msra.mxu0 0
      %1113 = vmatpush.bf16.msra.mxu0 0
      %1114 = vmatpush.bf16.msra.mxu0 0
      %1115 = vmatpush.bf16.msra.mxu0 0
      %1116 = vmatpush.bf16.msra.mxu0 0
      %1117 = vmatpush.bf16.msra.mxu0 %v1108
      %1118 = vmatmul.bf16.gmra.mxu0 %v1102
      %v1119 = vpop.f32.mrf.mxu0
      %v1120 = vadd.f32 0.0, %v1119
      %v1121 = vpop.f32.mrf.mxu0
      %v1122 = vadd.f32 0.0, %v1121
      %1123 = vmatmul.bf16.gmra.mxu0 %v1105
      %v1124 = vpop.f32.mrf.mxu0
      %v1125 = vadd.f32 0.0, %v1124
      %v1126 = vpop.f32.mrf.mxu0
      %1127 = vdwg.mxu0
      %v1128 = vadd.f32 %v1079, %v1120
      %v1129 = vadd.f32 %v1080, %v1122
      %v1130 = vadd.f32 %v1081, %v1125
      %v1131 = vld [vmem:[%s373 + $0x10] sm:$0x7]
      %s1132 = scalar_lea.vmem %s3, 64
      %v1133 = vld [vmem:[%s1132] sm:$0xf]
      %v1135 = vunpack.c.l.b16 %v1131
      %v1136 = vpack.c.b16 %v1135, %v1094
      %v1138 = vshrl.u32 %v1096, 16
      %v1140 = vrot.slane %v1138, 2
      %v1141 = vshll.u32 %v1096, 16
      %v1143 = vrot.slane %v1141, 3
      %v1144 = vor.u32 %v1140, %v1143
      %v1146 = vshrl.u32 %v1136, 16
      %v1148 = vrot.slane %v1146, 2
      %v1149 = vshll.u32 %v1136, 16
      %v1151 = vrot.slane %v1149, 3
      %v1152 = vor.u32 %v1148, %v1151
      %v1153 = vsel %vm722, %v1144, %v1152
      %v1155 = vsel %vm438, %v1153, 0
      %v1158 = vsel %vm438, %v1152, 0
      %v1161 = vsel %vm445, %v1133, 0
      %1163 = vmatpush.bf16.msra.mxu0 0
      %1164 = vmatpush.bf16.msra.mxu0 0
      %1165 = vmatpush.bf16.msra.mxu0 0
      %1166 = vmatpush.bf16.msra.mxu0 0
      %1167 = vmatpush.bf16.msra.mxu0 0
      %1168 = vmatpush.bf16.msra.mxu0 0
      %1169 = vmatpush.bf16.msra.mxu0 0
      %1170 = vmatpush.bf16.msra.mxu0 %v1161
      %1171 = vmatmul.bf16.gmra.mxu0 %v1155
      %v1172 = vpop.f32.mrf.mxu0
      %v1173 = vadd.f32 0.0, %v1172
      %v1174 = vpop.f32.mrf.mxu0
      %v1175 = vadd.f32 0.0, %v1174
      %1176 = vmatmul.bf16.gmra.mxu0 %v1158
      %v1177 = vpop.f32.mrf.mxu0
      %v1178 = vadd.f32 0.0, %v1177
      %v1179 = vpop.f32.mrf.mxu0
      %1180 = vdwg.mxu0
      %v1181 = vadd.f32 %v1128, %v1173
      %v1182 = vadd.f32 %v1129, %v1175
      %v1183 = vadd.f32 %v1130, %v1178
      %v1184 = vld [vmem:[%s373 + $0x4] sm:$0x8]
      %s1185 = scalar_lea.vmem %s3, 68
      %v1186 = vld [vmem:[%s1185] sm:$0xf]
      %v1188 = vunpack.c.l.b16 %v1184
      %v1189 = vpack.c.b16 %v1093, %v1188
      %v1190 = vrot.slane %v1189, 3
      %v1191 = vrot.slane %v1136, 3
      %v1192 = vsel %vm544, %v1190, %v1191
      %v1194 = vsel %vm438, %v1192, 0
      %v1197 = vsel %vm438, %v1191, 0
      %v1200 = vsel %vm445, %v1186, 0
      %1202 = vmatpush.bf16.msra.mxu0 0
      %1203 = vmatpush.bf16.msra.mxu0 0
      %1204 = vmatpush.bf16.msra.mxu0 0
      %1205 = vmatpush.bf16.msra.mxu0 0
      %1206 = vmatpush.bf16.msra.mxu0 0
      %1207 = vmatpush.bf16.msra.mxu0 0
      %1208 = vmatpush.bf16.msra.mxu0 0
      %1209 = vmatpush.bf16.msra.mxu0 %v1200
      %1210 = vmatmul.bf16.gmra.mxu0 %v1194
      %v1211 = vpop.f32.mrf.mxu0
      %v1212 = vadd.f32 0.0, %v1211
      %v1213 = vpop.f32.mrf.mxu0
      %v1214 = vadd.f32 0.0, %v1213
      %1215 = vmatmul.bf16.gmra.mxu0 %v1197
      %v1216 = vpop.f32.mrf.mxu0
      %v1217 = vadd.f32 0.0, %v1216
      %v1218 = vpop.f32.mrf.mxu0
      %1219 = vdwg.mxu0
      %v1220 = vadd.f32 %v1181, %v1212
      %v1221 = vadd.f32 %v1182, %v1214
      %v1222 = vadd.f32 %v1183, %v1217
      %v1223 = vld [vmem:[%s384] sm:$0xf]
      %v1224 = vld [vmem:[%s384 + $0x4] sm:$0xf]
      %v1225 = vld [vmem:[%s384 + $0x8] sm:$0xf]
      %s1226 = scalar_lea.vmem %s3, 72
      %v1227 = vld [vmem:[%s1226] sm:$0xf]
      %v1231 = vunpack.c.l.b16 %v1223
      %v1232 = vunpack.c.l.b16 %v1224
      %v1233 = vunpack.c.l.b16 %v1225
      %v1234 = vpack.c.b16 %v1232, %v1231
      %v1235 = vpack.c.b16 %v1233, %v1233
      %v1237 = vsel %vm438, %v1234, 0
      %v1240 = vsel %vm438, %v1235, 0
      %v1243 = vsel %vm445, %v1227, 0
      %1245 = vmatpush.bf16.msra.mxu0 0
      %1246 = vmatpush.bf16.msra.mxu0 0
      %1247 = vmatpush.bf16.msra.mxu0 0
      %1248 = vmatpush.bf16.msra.mxu0 0
      %1249 = vmatpush.bf16.msra.mxu0 0
      %1250 = vmatpush.bf16.msra.mxu0 0
      %1251 = vmatpush.bf16.msra.mxu0 0
      %1252 = vmatpush.bf16.msra.mxu0 %v1243
      %1253 = vmatmul.bf16.gmra.mxu0 %v1237
      %v1254 = vpop.f32.mrf.mxu0
      %v1255 = vadd.f32 0.0, %v1254
      %v1256 = vpop.f32.mrf.mxu0
      %v1257 = vadd.f32 0.0, %v1256
      %1258 = vmatmul.bf16.gmra.mxu0 %v1240
      %v1259 = vpop.f32.mrf.mxu0
      %v1260 = vadd.f32 0.0, %v1259
      %v1261 = vpop.f32.mrf.mxu0
      %1262 = vdwg.mxu0
      %v1263 = vadd.f32 %v1220, %v1255
      %v1264 = vadd.f32 %v1221, %v1257
      %v1265 = vadd.f32 %v1222, %v1260
      %v1266 = vld [vmem:[%s384] sm:$0xf]
      %v1267 = vld [vmem:[%s384 + $0x4] sm:$0xf]
      %v1268 = vld [vmem:[%s384 + $0x8] sm:$0xf]
      %v1269 = vld [vmem:[%s384 + $0xc] sm:$0x1]
      %s1270 = scalar_lea.vmem %s3, 76
      %v1271 = vld [vmem:[%s1270] sm:$0xf]
      %v1276 = vunpack.c.l.b16 %v1266
      %v1277 = vunpack.c.l.b16 %v1267
      %v1278 = vunpack.c.l.b16 %v1268
      %v1279 = vunpack.c.l.b16 %v1269
      %v1280 = vpack.c.b16 %v1277, %v1276
      %v1281 = vpack.c.b16 %v1279, %v1278
      %v1283 = vshrl.u32 %v1280, 16
      %v1285 = vshll.u32 %v1280, 16
      %v1287 = vrot.slane %v1285, 1
      %v1288 = vor.u32 %v1283, %v1287
      %v1290 = vshll.u32 %v1281, 16
      %v1292 = vrot.slane %v1290, 1
      %v1293 = vsel %vm422, %v1288, %v1292
      %v1294 = vshrl.u32 %v1281, 16
      %v1296 = vor.u32 %v1294, %v1292
      %v1298 = vsel %vm438, %v1293, 0
      %v1301 = vsel %vm438, %v1296, 0
      %v1304 = vsel %vm445, %v1271, 0
      %1306 = vmatpush.bf16.msra.mxu0 0
      %1307 = vmatpush.bf16.msra.mxu0 0
      %1308 = vmatpush.bf16.msra.mxu0 0
      %1309 = vmatpush.bf16.msra.mxu0 0
      %1310 = vmatpush.bf16.msra.mxu0 0
      %1311 = vmatpush.bf16.msra.mxu0 0
      %1312 = vmatpush.bf16.msra.mxu0 0
      %1313 = vmatpush.bf16.msra.mxu0 %v1304
      %1314 = vmatmul.bf16.gmra.mxu0 %v1298
      %v1315 = vpop.f32.mrf.mxu0
      %v1316 = vadd.f32 0.0, %v1315
      %v1317 = vpop.f32.mrf.mxu0
      %v1318 = vadd.f32 0.0, %v1317
      %1319 = vmatmul.bf16.gmra.mxu0 %v1301
      %v1320 = vpop.f32.mrf.mxu0
      %v1321 = vadd.f32 0.0, %v1320
      %v1322 = vpop.f32.mrf.mxu0
      %1323 = vdwg.mxu0
      %v1324 = vadd.f32 %v1263, %v1316
      %v1325 = vadd.f32 %v1264, %v1318
      %v1326 = vadd.f32 %v1265, %v1321
      %v1327 = vld [vmem:[%s384] sm:$0xe]
      %s1328 = scalar_lea.vmem %s3, 80
      %v1329 = vld [vmem:[%s1328] sm:$0xf]
      %v1331 = vunpack.c.l.b16 %v1327
      %v1332 = vpack.c.b16 %v1277, %v1331
      %v1333 = vrot.slane %v1332, 1
      %v1334 = vrot.slane %v1281, 1
      %v1335 = vsel %vm500, %v1333, %v1334
      %v1337 = vsel %vm438, %v1335, 0
      %v1340 = vsel %vm438, %v1334, 0
      %v1343 = vsel %vm445, %v1329, 0
      %1345 = vmatpush.bf16.msra.mxu0 0
      %1346 = vmatpush.bf16.msra.mxu0 0
      %1347 = vmatpush.bf16.msra.mxu0 0
      %1348 = vmatpush.bf16.msra.mxu0 0
      %1349 = vmatpush.bf16.msra.mxu0 0
      %1350 = vmatpush.bf16.msra.mxu0 0
      %1351 = vmatpush.bf16.msra.mxu0 0
      %1352 = vmatpush.bf16.msra.mxu0 %v1343
      %1353 = vmatmul.bf16.gmra.mxu0 %v1337
      %v1354 = vpop.f32.mrf.mxu0
      %v1355 = vadd.f32 0.0, %v1354
      %v1356 = vpop.f32.mrf.mxu0
      %v1357 = vadd.f32 0.0, %v1356
      %1358 = vmatmul.bf16.gmra.mxu0 %v1340
      %v1359 = vpop.f32.mrf.mxu0
      %v1360 = vadd.f32 0.0, %v1359
      %v1361 = vpop.f32.mrf.mxu0
      %1362 = vdwg.mxu0
      %v1363 = vadd.f32 %v1324, %v1355
      %v1364 = vadd.f32 %v1325, %v1357
      %v1365 = vadd.f32 %v1326, %v1360
      %v1366 = vld [vmem:[%s384] sm:$0x8]
      %v1367 = vld [vmem:[%s384 + $0xc] sm:$0x7]
      %s1368 = scalar_lea.vmem %s3, 84
      %v1369 = vld [vmem:[%s1368] sm:$0xf]
      %v1372 = vunpack.c.l.b16 %v1366
      %v1373 = vunpack.c.l.b16 %v1367
      %v1374 = vpack.c.b16 %v1277, %v1372
      %v1375 = vpack.c.b16 %v1373, %v1278
      %v1376 = vrot.slane %v1374, 3
      %v1377 = vrot.slane %v1375, 3
      %v1378 = vsel %vm544, %v1376, %v1377
      %v1380 = vsel %vm438, %v1378, 0
      %v1383 = vsel %vm438, %v1377, 0
      %v1386 = vsel %vm445, %v1369, 0
      %1388 = vmatpush.bf16.msra.mxu0 0
      %1389 = vmatpush.bf16.msra.mxu0 0
      %1390 = vmatpush.bf16.msra.mxu0 0
      %1391 = vmatpush.bf16.msra.mxu0 0
      %1392 = vmatpush.bf16.msra.mxu0 0
      %1393 = vmatpush.bf16.msra.mxu0 0
      %1394 = vmatpush.bf16.msra.mxu0 0
      %1395 = vmatpush.bf16.msra.mxu0 %v1386
      %1396 = vmatmul.bf16.gmra.mxu0 %v1380
      %v1397 = vpop.f32.mrf.mxu0
      %v1398 = vadd.f32 0.0, %v1397
      %v1399 = vpop.f32.mrf.mxu0
      %v1400 = vadd.f32 0.0, %v1399
      %1401 = vmatmul.bf16.gmra.mxu0 %v1383
      %v1402 = vpop.f32.mrf.mxu0
      %v1403 = vadd.f32 0.0, %v1402
      %v1404 = vpop.f32.mrf.mxu0
      %1405 = vdwg.mxu0
      %v1406 = vadd.f32 %v1363, %v1398
      %v1407 = vadd.f32 %v1364, %v1400
      %v1408 = vadd.f32 %v1365, %v1403
      %v1409 = vld [vmem:[%s384 + $0xc] sm:$0xf]
      %s1410 = scalar_lea.vmem %s3, 88
      %v1411 = vld [vmem:[%s1410] sm:$0xf]
      %v1413 = vunpack.c.l.b16 %v1409
      %v1414 = vpack.c.b16 %v1413, %v1278
      %v1416 = vshrl.u32 %v1374, 16
      %v1418 = vrot.slane %v1416, 3
      %v1419 = vshll.u32 %v1374, 16
      %v1421 = vrot.slane %v1419, 4
      %v1422 = vor.u32 %v1418, %v1421
      %v1424 = vshrl.u32 %v1414, 16
      %v1426 = vrot.slane %v1424, 3
      %v1427 = vshll.u32 %v1414, 16
      %v1429 = vrot.slane %v1427, 4
      %v1430 = vor.u32 %v1426, %v1429
      %v1431 = vsel %vm584, %v1422, %v1430
      %v1433 = vsel %vm438, %v1431, 0
      %v1436 = vsel %vm438, %v1430, 0
      %v1439 = vsel %vm445, %v1411, 0
      %1441 = vmatpush.bf16.msra.mxu0 0
      %1442 = vmatpush.bf16.msra.mxu0 0
      %1443 = vmatpush.bf16.msra.mxu0 0
      %1444 = vmatpush.bf16.msra.mxu0 0
      %1445 = vmatpush.bf16.msra.mxu0 0
      %1446 = vmatpush.bf16.msra.mxu0 0
      %1447 = vmatpush.bf16.msra.mxu0 0
      %1448 = vmatpush.bf16.msra.mxu0 %v1439
      %1449 = vmatmul.bf16.gmra.mxu0 %v1433
      %v1450 = vpop.f32.mrf.mxu0
      %v1451 = vadd.f32 0.0, %v1450
      %v1452 = vpop.f32.mrf.mxu0
      %v1453 = vadd.f32 0.0, %v1452
      %1454 = vmatmul.bf16.gmra.mxu0 %v1436
      %v1455 = vpop.f32.mrf.mxu0
      %v1456 = vadd.f32 0.0, %v1455
      %v1457 = vpop.f32.mrf.mxu0
      %1458 = vdwg.mxu0
      %v1459 = vadd.f32 %v1406, %v1451
      %v1460 = vadd.f32 %v1407, %v1453
      %v1461 = vadd.f32 %v1408, %v1456
      %s1462 = scalar_lea.vmem %s3, 92
      %v1463 = vld [vmem:[%s1462] sm:$0xf]
      %v1464 = vpack.c.b16 %v1278, %v1277
      %v1465 = vpack.c.b16 %v1413, %v1413
      %v1467 = vsel %vm438, %v1464, 0
      %v1470 = vsel %vm438, %v1465, 0
      %v1473 = vsel %vm445, %v1463, 0
      %1475 = vmatpush.bf16.msra.mxu0 0
      %1476 = vmatpush.bf16.msra.mxu0 0
      %1477 = vmatpush.bf16.msra.mxu0 0
      %1478 = vmatpush.bf16.msra.mxu0 0
      %1479 = vmatpush.bf16.msra.mxu0 0
      %1480 = vmatpush.bf16.msra.mxu0 0
      %1481 = vmatpush.bf16.msra.mxu0 0
      %1482 = vmatpush.bf16.msra.mxu0 %v1473
      %1483 = vmatmul.bf16.gmra.mxu0 %v1467
      %v1484 = vpop.f32.mrf.mxu0
      %v1485 = vadd.f32 0.0, %v1484
      %v1486 = vpop.f32.mrf.mxu0
      %v1487 = vadd.f32 0.0, %v1486
      %1488 = vmatmul.bf16.gmra.mxu0 %v1470
      %v1489 = vpop.f32.mrf.mxu0
      %v1490 = vadd.f32 0.0, %v1489
      %v1491 = vpop.f32.mrf.mxu0
      %1492 = vdwg.mxu0
      %v1493 = vadd.f32 %v1459, %v1485
      %v1494 = vadd.f32 %v1460, %v1487
      %v1495 = vadd.f32 %v1461, %v1490
      %v1496 = vld [vmem:[%s384 + $0x4] sm:$0xc]
      %v1497 = vld [vmem:[%s384 + $0x8] sm:$0xf]
      %v1498 = vld [vmem:[%s384 + $0xc] sm:$0xf]
      %v1499 = vld [vmem:[%s384 + $0x10] sm:$0x3]
      %s1500 = scalar_lea.vmem %s3, 96
      %v1501 = vld [vmem:[%s1500] sm:$0xf]
      %v1506 = vunpack.c.l.b16 %v1496
      %v1507 = vunpack.c.l.b16 %v1497
      %v1508 = vunpack.c.l.b16 %v1498
      %v1509 = vunpack.c.l.b16 %v1499
      %v1510 = vpack.c.b16 %v1507, %v1506
      %v1511 = vpack.c.b16 %v1509, %v1508
      %v1512 = vrot.slane %v1510, 2
      %v1513 = vrot.slane %v1511, 2
      %v1514 = vsel %vm682, %v1512, %v1513
      %v1516 = vsel %vm438, %v1514, 0
      %v1519 = vsel %vm438, %v1513, 0
      %v1522 = vsel %vm445, %v1501, 0
      %1524 = vmatpush.bf16.msra.mxu0 0
      %1525 = vmatpush.bf16.msra.mxu0 0
      %1526 = vmatpush.bf16.msra.mxu0 0
      %1527 = vmatpush.bf16.msra.mxu0 0
      %1528 = vmatpush.bf16.msra.mxu0 0
      %1529 = vmatpush.bf16.msra.mxu0 0
      %1530 = vmatpush.bf16.msra.mxu0 0
      %1531 = vmatpush.bf16.msra.mxu0 %v1522
      %1532 = vmatmul.bf16.gmra.mxu0 %v1516
      %v1533 = vpop.f32.mrf.mxu0
      %v1534 = vadd.f32 0.0, %v1533
      %v1535 = vpop.f32.mrf.mxu0
      %v1536 = vadd.f32 0.0, %v1535
      %1537 = vmatmul.bf16.gmra.mxu0 %v1519
      %v1538 = vpop.f32.mrf.mxu0
      %v1539 = vadd.f32 0.0, %v1538
      %v1540 = vpop.f32.mrf.mxu0
      %1541 = vdwg.mxu0
      %v1542 = vadd.f32 %v1493, %v1534
      %v1543 = vadd.f32 %v1494, %v1536
      %v1544 = vadd.f32 %v1495, %v1539
      %v1545 = vld [vmem:[%s384 + $0x10] sm:$0x7]
      %s1546 = scalar_lea.vmem %s3, 100
      %v1547 = vld [vmem:[%s1546] sm:$0xf]
      %v1549 = vunpack.c.l.b16 %v1545
      %v1550 = vpack.c.b16 %v1549, %v1508
      %v1552 = vshrl.u32 %v1510, 16
      %v1554 = vrot.slane %v1552, 2
      %v1555 = vshll.u32 %v1510, 16
      %v1557 = vrot.slane %v1555, 3
      %v1558 = vor.u32 %v1554, %v1557
      %v1560 = vshrl.u32 %v1550, 16
      %v1562 = vrot.slane %v1560, 2
      %v1563 = vshll.u32 %v1550, 16
      %v1565 = vrot.slane %v1563, 3
      %v1566 = vor.u32 %v1562, %v1565
      %v1567 = vsel %vm722, %v1558, %v1566
      %v1569 = vsel %vm438, %v1567, 0
      %v1572 = vsel %vm438, %v1566, 0
      %v1575 = vsel %vm445, %v1547, 0
      %1577 = vmatpush.bf16.msra.mxu0 0
      %1578 = vmatpush.bf16.msra.mxu0 0
      %1579 = vmatpush.bf16.msra.mxu0 0
      %1580 = vmatpush.bf16.msra.mxu0 0
      %1581 = vmatpush.bf16.msra.mxu0 0
      %1582 = vmatpush.bf16.msra.mxu0 0
      %1583 = vmatpush.bf16.msra.mxu0 0
      %1584 = vmatpush.bf16.msra.mxu0 %v1575
      %1585 = vmatmul.bf16.gmra.mxu0 %v1569
      %v1586 = vpop.f32.mrf.mxu0
      %v1587 = vadd.f32 0.0, %v1586
      %v1588 = vpop.f32.mrf.mxu0
      %v1589 = vadd.f32 0.0, %v1588
      %1590 = vmatmul.bf16.gmra.mxu0 %v1572
      %v1591 = vpop.f32.mrf.mxu0
      %v1592 = vadd.f32 0.0, %v1591
      %v1593 = vpop.f32.mrf.mxu0
      %1594 = vdwg.mxu0
      %v1595 = vadd.f32 %v1542, %v1587
      %v1596 = vadd.f32 %v1543, %v1589
      %v1597 = vadd.f32 %v1544, %v1592
      %v1598 = vld [vmem:[%s384 + $0x4] sm:$0x8]
      %s1599 = scalar_lea.vmem %s3, 104
      %v1600 = vld [vmem:[%s1599] sm:$0xf]
      %v1602 = vunpack.c.l.b16 %v1598
      %v1603 = vpack.c.b16 %v1507, %v1602
      %v1604 = vrot.slane %v1603, 3
      %v1605 = vrot.slane %v1550, 3
      %v1606 = vsel %vm544, %v1604, %v1605
      %v1608 = vsel %vm438, %v1606, 0
      %v1611 = vsel %vm438, %v1605, 0
      %v1614 = vsel %vm445, %v1600, 0
      %1616 = vmatpush.bf16.msra.mxu0 0
      %1617 = vmatpush.bf16.msra.mxu0 0
      %1618 = vmatpush.bf16.msra.mxu0 0
      %1619 = vmatpush.bf16.msra.mxu0 0
      %1620 = vmatpush.bf16.msra.mxu0 0
      %1621 = vmatpush.bf16.msra.mxu0 0
      %1622 = vmatpush.bf16.msra.mxu0 0
      %1623 = vmatpush.bf16.msra.mxu0 %v1614
      %1624 = vmatmul.bf16.gmra.mxu0 %v1608
      %v1625 = vpop.f32.mrf.mxu0
      %v1626 = vadd.f32 0.0, %v1625
      %v1627 = vpop.f32.mrf.mxu0
      %v1628 = vadd.f32 0.0, %v1627
      %1629 = vmatmul.bf16.gmra.mxu0 %v1611
      %v1630 = vpop.f32.mrf.mxu0
      %v1631 = vadd.f32 0.0, %v1630
      %v1632 = vpop.f32.mrf.mxu0
      %1633 = vdwg.mxu0
      %v1634 = vadd.f32 %v1595, %v1626
      %v1635 = vadd.f32 %v1596, %v1628
      %v1636 = vadd.f32 %v1597, %v1631
      %v1637 = vld [vmem:[%s4] sm:$0x1]
      %v1639 = vperm.slane %v1637, 0
      %v1641 = vadd.f32 %v1634, %v1639
      %v1642 = vadd.f32 %v1635, %v1639
      %v1643 = vadd.f32 %v1636, %v1639
      %v1644 = vmax.f32 %v1641, 0.0
      %v1645 = vmax.f32 %v1642, 0.0
      %v1646 = vmax.f32 %v1643, 0.0
      %v1647 = vld [vmem:[%s394] sm:$0xf]
      %v1648 = vld [vmem:[%s394 + $0x4] sm:$0xf]
      %v1649 = vld [vmem:[%s394 + $0x8] sm:$0xf]
      %v1650 = vunpack.c.l.bf16 %v1647
      %v1651 = vunpack.c.l.bf16 %v1648
      %v1652 = vunpack.c.l.bf16 %v1649
      %v1653 = vadd.f32 %v1644, %v1650
      %v1654 = vadd.f32 %v1645, %v1651
      %v1655 = vadd.f32 %v1646, %v1652
      %v1656 = vlaneseq
      %v1657 = vshrl.u32 %v1656, 7
      %v1658 = vadd.s32 %v1657, 8
      %v1659 = vadd.s32 %v1657, 16
      %vm1660 = vcmp.lt.s32.totalorder %v1657, 0
      %v1661 = vsub.s32 0, %v1657
      %v1662 = vsel %vm1660, %v1661, %v1657
      %v1663 = vand.u32 %v1662, 65535
      %v1664 = vshrl.u32 %v1662, 16
      %v1666 = vmul.u32 %v1663, 43691
      %v1667 = vmul.u32 %v1663, 43690
      %v1668 = vmul.u32 %v1664, 43691
      %v1669 = vmul.u32 %v1664, 43690
      %v1670 = vshll.u32 %v1667, 16
      %v1671 = vshrl.u32 %v1667, 16
      %v1672 = vshll.u32 %v1668, 16
      %v1673 = vshrl.u32 %v1668, 16
      %vm1674 = vc.u32 %v1666, %v1670
      %v1675 = vsel %vm1674, 1, 0
      %v1676 = vadd.s32 %v1666, %v1670
      %v1677 = vadd.s32 %v1669, %v1675
      %vm1678 = vc.u32 %v1676, %v1672
      %v1679 = vsel %vm1678, 1, 0
      %v1680 = vadd.s32 %v1676, %v1672
      %v1681 = vadd.s32 %v1677, %v1679
      %v1682 = vadd.s32 %v1681, %v1671
      %v1683 = vadd.s32 %v1682, %v1673
      %v1684 = vshrl.u32 %v1683, 2
      %v1685 = vmul.u32 %v1684, 6
      %v1686 = vsub.s32 %v1662, %v1685
      %v1687 = vsub.s32 0, %v1686
      %v1688 = vsel %vm1660, %v1687, %v1686
      %vm1689 = vcmp.lt.s32.totalorder %v1658, 0
      %v1690 = vsub.s32 0, %v1658
      %v1691 = vsel %vm1689, %v1690, %v1658
      %v1692 = vand.u32 %v1691, 65535
      %v1693 = vshrl.u32 %v1691, 16
      %v1695 = vmul.u32 %v1692, 43691
      %v1696 = vmul.u32 %v1692, 43690
      %v1697 = vmul.u32 %v1693, 43691
      %v1698 = vmul.u32 %v1693, 43690
      %v1699 = vshll.u32 %v1696, 16
      %v1700 = vshrl.u32 %v1696, 16
      %v1701 = vshll.u32 %v1697, 16
      %v1702 = vshrl.u32 %v1697, 16
      %vm1703 = vc.u32 %v1695, %v1699
      %v1704 = vsel %vm1703, 1, 0
      %v1705 = vadd.s32 %v1695, %v1699
      %v1706 = vadd.s32 %v1698, %v1704
      %vm1707 = vc.u32 %v1705, %v1701
      %v1708 = vsel %vm1707, 1, 0
      %v1709 = vadd.s32 %v1705, %v1701
      %v1710 = vadd.s32 %v1706, %v1708
      %v1711 = vadd.s32 %v1710, %v1700
      %v1712 = vadd.s32 %v1711, %v1702
      %v1713 = vshrl.u32 %v1712, 2
      %v1714 = vmul.u32 %v1713, 6
      %v1715 = vsub.s32 %v1691, %v1714
      %v1716 = vsub.s32 0, %v1715
      %v1717 = vsel %vm1689, %v1716, %v1715
      %vm1718 = vcmp.lt.s32.totalorder %v1659, 0
      %v1719 = vsub.s32 0, %v1659
      %v1720 = vsel %vm1718, %v1719, %v1659
      %v1721 = vand.u32 %v1720, 65535
      %v1722 = vshrl.u32 %v1720, 16
      %v1724 = vmul.u32 %v1721, 43691
      %v1725 = vmul.u32 %v1721, 43690
      %v1726 = vmul.u32 %v1722, 43691
      %v1727 = vmul.u32 %v1722, 43690
      %v1728 = vshll.u32 %v1725, 16
      %v1729 = vshrl.u32 %v1725, 16
      %v1730 = vshll.u32 %v1726, 16
      %v1731 = vshrl.u32 %v1726, 16
      %vm1732 = vc.u32 %v1724, %v1728
      %v1733 = vsel %vm1732, 1, 0
      %v1734 = vadd.s32 %v1724, %v1728
      %v1735 = vadd.s32 %v1727, %v1733
      %vm1736 = vc.u32 %v1734, %v1730
      %v1737 = vsel %vm1736, 1, 0
      %v1738 = vadd.s32 %v1734, %v1730
      %v1739 = vadd.s32 %v1735, %v1737
      %v1740 = vadd.s32 %v1739, %v1729
      %v1741 = vadd.s32 %v1740, %v1731
      %v1742 = vshrl.u32 %v1741, 2
      %v1743 = vmul.u32 %v1742, 6
      %v1744 = vsub.s32 %v1720, %v1743
      %v1745 = vsub.s32 0, %v1744
      %v1746 = vsel %vm1718, %v1745, %v1744
      %vm1747 = vcmp.ne.s32.totalorder %v1688, 0
      %vm1748 = vcmp.ne.s32.totalorder %v1717, 0
      %vm1749 = vcmp.ne.s32.totalorder %v1746, 0
      %vm1750 = vcmp.lt.s32.totalorder %v1688, 0
      %vm1751 = vcmp.lt.s32.totalorder %v1717, 0
      %vm1752 = vcmp.lt.s32.totalorder %v1746, 0
      %vm1753 = vmand %vm1750, %vm1747
      %vm1754 = vmand %vm1751, %vm1748
      %vm1755 = vmand %vm1752, %vm1749
      %v1756 = vadd.s32 %v1688, 6
      %v1757 = vadd.s32 %v1717, 6
      %v1758 = vadd.s32 %v1746, 6
      %v1759 = vsel %vm1753, %v1756, %v1688
      %v1760 = vsel %vm1754, %v1757, %v1717
      %v1761 = vsel %vm1755, %v1758, %v1746
      %vm1762 = vcmp.ge.s32.totalorder %v1759, 1
      %vm1763 = vcmp.ge.s32.totalorder %v1760, 1
      %vm1764 = vcmp.ge.s32.totalorder %v1761, 1
      %vm1765 = vcmp.le.s32.totalorder %v1759, 4
      %vm1766 = vcmp.le.s32.totalorder %v1760, 4
      %vm1767 = vcmp.le.s32.totalorder %v1761, 4
      %vm1768 = vmand %vm1762, %vm1765
      %vm1769 = vmand %vm1763, %vm1766
      %vm1770 = vmand %vm1764, %vm1767
      %v1771 = vsel %vm1768, 1, 0
      %v1772 = vsel %vm1769, 1, 0
      %v1773 = vsel %vm1770, 1, 0
      %vm1774 = vcmp.eq.s32.totalorder %v1771, 1
      %vm1775 = vcmp.eq.s32.totalorder %v1772, 1
      %vm1776 = vcmp.eq.s32.totalorder %v1773, 1
      %v1777 = vsel %vm1774, %v1653, 0.0
      %v1778 = vsel %vm1775, %v1654, 0.0
      %v1779 = vsel %vm1776, %v1655, 0.0
      %v1780 = vpack.c.bf16 %v1777, %v1777
      %v1781 = vpack.c.bf16 %v1778, %v1778
      %v1782 = vpack.c.bf16 %v1779, %v1779
      %vm1783 = vcmask 60416
      %1784 = vst.msk [vmem:[%s403] sm:$0xf] %vm1783, %v1780
      %1785 = vst.msk [vmem:[%s403 + $0x4] sm:$0xf] %vm1783, %v1781
      %1786 = vst.msk [vmem:[%s403 + $0x8] sm:$0xf] %vm1783, %v1782
      %p1787 = scmp.lt.s32.totalorder %s21, 1
      %s1788 = scalar_select %p1787, %s21, 1
      %p1789 = scmp.lt.s32.totalorder %s22, 3
      %s1790 = scalar_select %p1789, %s22, 3
      %s1791 = smul.addr %s1790, 3
      %s1792 = smul.addr %s1788, 12
      %s1793 = sadd.s32 %s1791, %s1792
      %s1794 = smul.addr %s1793, 4
      %s1795 = scalar_lea.vmem %s6, %s1794
      // Predicated region
      $region45: #{downblock_forward.5} parent=43 // pred_check
        %p1796 = pneg %p207
      $region46: #{downblock_forward.5} parent=43 // pred_check_branch
        %1798 = sbr.rel (%p1796) target = $region48
      $region47: #{downblock_forward.5} parent=43 // pred_region
        _
      $region48: #{downblock_forward.5} parent=43 // pred_fallthru
        _
    $region44: #{downblock_forward.5} parent=5 // pred_fallthru
      _
    %p1799 = scmp.le.s32.totalorder 2, %s12
    // Predicated region
    $region49: #{downblock_forward.5} parent=5 // pred_check
      %p1800 = pneg %p1799
    $region50: #{downblock_forward.5} parent=5 // pred_check_branch
      %1802 = sbr.rel (%p1800) target = $region52
    $region51: #{downblock_forward.5} parent=5 // pred_region
      %s1803 = ssub.s32 %s12, 2
      // Predicated region
      $region53: #{downblock_forward.5} parent=51 // pred_check
        %p1804 = pneg %p213
      $region54: #{downblock_forward.5} parent=51 // pred_check_branch
        %1806 = sbr.rel (%p1804) target = $region56
      $region55: #{downblock_forward.5} parent=51 // pred_region
        %p1807 = scmp.lt.s32.totalorder %s23, 1
        %s1808 = scalar_select %p1807, %s23, 1
        %p1809 = scmp.lt.s32.totalorder %s24, 3
        %s1810 = scalar_select %p1809, %s24, 3
        %s1811 = smul.addr %s1810, 3
        %s1812 = smul.addr %s1808, 12
        %s1813 = sadd.s32 %s1811, %s1812
        %s1814 = smul.addr %s1813, 4
        %s1815 = scalar_lea.vmem %s6, %s1814
      $region56: #{downblock_forward.5} parent=51 // pred_fallthru
        _
    $region52: #{downblock_forward.5} parent=5 // pred_fallthru
      _
  $region6: #{downblock_forward.5} parent=0 // loop_footer
    %s16 = sadd.s32 1, %s12
  $region7: #{downblock_forward.5} parent=0 // loop_footer_branch
    %11 = sbr.rel target = $region3
  $region8: #{downblock_forward.5} parent=0 // loop_exit
    _

</llo_original>
